<compile_context>
chip_gen: v7x
topology: tpu7x:2x2x1
jax: 0.10.0
libtpu: 0.0.40
codegen_flags: <defaults>
</compile_context>

<pallas_src>
import functools
import math

import jax
import jax.numpy as jnp
from jax import lax
from jax.experimental import pallas as pl
from jax.experimental.pallas import tpu as pltpu

_NEG_INF = -1e30                        # finite "-inf": avoids inf-inf -> NaN in online softmax
_VMEM_LIMIT = 40 * 1024 * 1024          # leaves >=24 MiB headroom on v7x's 64 MiB/TC
_RESIDENT_W_BYTES = 12 * 1024 * 1024    # max double-buffered weight kept fully VMEM-resident


# --------------------------------------------------------------------------- #
# Parameter packing (done ONCE at load time, not per forward call)            #
# --------------------------------------------------------------------------- #
def pack_params(params, n_head, compute_dtype=jnp.bfloat16):
    """params = (wq, bq, wk, bk, wv, bv, wp, bp); w* are PyTorch (out, in) = (C, C)."""
    wq, bq, wk, bk, wv, bv, wp, bp = params
    C = wq.shape[0]
    hd = C // n_head
    scale = 1.0 / math.sqrt(hd)
    # stacked QKV weight (3, C, C); attention scale folded into the query projection
    w_qkv = jnp.stack([wq.T * scale, wk.T, wv.T], axis=0).astype(compute_dtype)
    b_qkv = jnp.stack([bq * scale, bk, bv], axis=0)[:, None, :].astype(jnp.float32)  # (3, 1, C)
    w_p = wp.T.astype(compute_dtype)                # (C, C), dense K=C output projection
    b_p = bp[None, :].astype(jnp.float32)           # (1, C)
    return w_qkv, b_qkv, w_p, b_p


def _pick_tile(n, target):
    """Largest 256-/128-aligned divisor of n that is <= target; n itself otherwise."""
    if n <= target:
        return n
    for quantum in (256, 128):
        best = 0
        for t in range(quantum, target + 1, quantum):
            if n % t == 0:
                best = t
        if best:
            return best
    return n


def _pick_col_tile(C, n_mats, target):
    """Full-resident weight if small; otherwise a 128/256-aligned column tile."""
    if 2 * n_mats * C * C * 2 <= _RESIDENT_W_BYTES:      # double-buffered bf16 weight
        return C
    return _pick_tile(C, target)


# --------------------------------------------------------------------------- #
# Kernel 1: fused QKV projection (one lane-dense store per tensor)            #
# --------------------------------------------------------------------------- #
def _qkv_kernel(x_ref, w_ref, b_ref, q_ref, k_ref, v_ref):
    # x_ref (tm, C) bf16 | w_ref (3, C, tn) bf16 | b_ref (3, 1, tn) f32
    # q_ref / k_ref / v_ref: (tm, tn) bf16 -- single dense store each, no per-head loop
    x = x_ref[...]
    q_ref[...] = (jnp.dot(x, w_ref[0], preferred_element_type=jnp.float32)
                  + b_ref[0]).astype(q_ref.dtype)
    k_ref[...] = (jnp.dot(x, w_ref[1], preferred_element_type=jnp.float32)
                  + b_ref[1]).astype(k_ref.dtype)
    v_ref[...] = (jnp.dot(x, w_ref[2], preferred_element_type=jnp.float32)
                  + b_ref[2]).astype(v_ref.dtype)


# --------------------------------------------------------------------------- #
# Kernel 2: flash attention, triangular (causal) grid, all heads per tile     #
# --------------------------------------------------------------------------- #
def _flash_kernel(qi_ref, ki_ref, q_ref, k_ref, v_ref, o_ref,
                  m_sc, l_sc, acc_sc, *, n_head, head_dim):
    # qi_ref / ki_ref: SMEM (n_tri,) int32 lookup tables (scalar prefetch)
    # q_ref (tq, C) bf16 | k_ref / v_ref (tk, C) bf16 | o_ref (tq, C) bf16
    # scratch: m_sc / l_sc (H, tq, 1) f32, acc_sc (H, tq, hd) f32
    t = pl.program_id(1)
    qi = qi_ref[t]
    ki = ki_ref[t]

    @pl.when(ki == 0)
    def _init():
        m_sc[...] = jnp.full(m_sc.shape, _NEG_INF, m_sc.dtype)
        l_sc[...] = jnp.zeros(l_sc.shape, l_sc.dtype)
        acc_sc[...] = jnp.zeros(acc_sc.shape, acc_sc.dtype)

    def _step(masked):
        q = q_ref[...]                                       # scale folded into q already
        k = k_ref[...]
        v = v_ref[...]
        if masked:      # diagonal tile only; tq == tk so local indices suffice
            row = lax.broadcasted_iota(jnp.int32, (q.shape[0], k.shape[0]), 0)
            col = lax.broadcasted_iota(jnp.int32, (q.shape[0], k.shape[0]), 1)
            keep = col <= row
        for h in range(n_head):                              # static lane slices of the C slab
            lo = h * head_dim
            hi = lo + head_dim
            # contract head_dim of q and k directly (no transposed copy of k)
            s = lax.dot_general(q[:, lo:hi], k[:, lo:hi], (((1,), (1,)), ((), ())),
                                preferred_element_type=jnp.float32)      # (tq, tk) f32
            if masked:
                s = jnp.where(keep, s, _NEG_INF)
            m_prev = m_sc[h]
            m_new = jnp.maximum(m_prev, jnp.max(s, axis=-1, keepdims=True))
            alpha = jnp.exp(m_prev - m_new)
            # NOTE: on v6e/v7x, p = jnp.exp((s - m_new).astype(jnp.bfloat16)) ~doubles EUP
            # throughput; kept f32 here for accuracy headroom across all generations.
            p = jnp.exp(s - m_new)
            l_sc[h] = alpha * l_sc[h] + jnp.sum(p, axis=-1, keepdims=True)
            acc_sc[h] = alpha * acc_sc[h] + jnp.dot(
                p.astype(v.dtype), v[:, lo:hi], preferred_element_type=jnp.float32)
            m_sc[h] = m_new

    # triangular grid: only ki <= qi steps exist, so every step does real work
    @pl.when(ki < qi)
    def _off_diag():
        _step(masked=False)

    @pl.when(ki == qi)                                       # diagonal == last step of this qi
    def _diag_and_finalize():
        _step(masked=True)
        parts = []
        for h in range(n_head):
            inv_l = pl.reciprocal(l_sc[h], approx=True)      # EUP slot, frees VPU
            parts.append(acc_sc[h] * inv_l)
        # one lane-dense (tq, C) store; HBM writeback happens once per q tile
        o_ref[...] = jnp.concatenate(parts, axis=-1).astype(o_ref.dtype)


# --------------------------------------------------------------------------- #
# Kernel 3: output projection -- single dense K = C matmul                    #
# --------------------------------------------------------------------------- #
def _proj_kernel(y_ref, w_ref, b_ref, o_ref):
    # y_ref (tm, C) bf16 | w_ref (C, tn) bf16 | b_ref (1, tn) f32 | o_ref (tm, tn)
    acc = jnp.dot(y_ref[...], w_ref[...], preferred_element_type=jnp.float32)
    o_ref[...] = (acc + b_ref[...]).astype(o_ref.dtype)


# --------------------------------------------------------------------------- #
# Forward wrapper                                                             #
# --------------------------------------------------------------------------- #
def causal_self_attention(x, packed_params, n_head, *,
                          attn_tile=512, row_tile=256, col_tile=512):
    """x: (B, T, C) float32; packed_params from pack_params()."""
    w_qkv, b_qkv, w_p, b_p = packed_params
    B, T, C = x.shape
    H = n_head
    assert C % H == 0
    hd = C // H
    cdt = w_qkv.dtype                                        # bf16 compute dtype

    tm = _pick_tile(T, row_tile)                             # projection row tile
    tq = _pick_tile(T, attn_tile)                            # flash q tile (v5e: raise to 1024)
    tk = tq
    assert tq == tk, "diagonal-only causal mask requires tq == tk"
    assert T % tm == 0 and T % tq == 0

    # weight-column tiles: resident when small, tiled for large C (v7x 64 MiB VMEM)
    tn1 = _pick_col_tile(C, 3, col_tile)
    tn3 = _pick_col_tile(C, 1, col_tile)
    nj1 = C // tn1
    nj3 = C // tn3

    xb = x.astype(cdt)   # bf16 activations: halves x DMA traffic, removes in-kernel cast

    # ---- 1) fused QKV projection (lane-dense (B, T, C) outputs) ---------------
    q, k, v = pl.pallas_call(
        _qkv_kernel,
        out_shape=[jax.ShapeDtypeStruct((B, T, C), cdt)] * 3,
        grid=(nj1, B, T // tm),                              # weight column axis outermost
        in_specs=[
            pl.BlockSpec((None, tm, C), lambda j, b, i: (b, i, 0)),
            pl.BlockSpec((3, C, tn1), lambda j, b, i: (0, 0, j)),
            pl.BlockSpec((3, 1, tn1), lambda j, b, i: (0, 0, j)),
        ],
        out_specs=[pl.BlockSpec((None, tm, tn1), lambda j, b, i: (b, i, j))] * 3,
        compiler_params=pltpu.CompilerParams(
            dimension_semantics=("arbitrary", "parallel", "parallel"),
            vmem_limit_bytes=_VMEM_LIMIT),
    )(xb, w_qkv, b_qkv)

    # ---- 2) flash attention, triangular causal grid ---------------------------
    nq = T // tq
    n_tri = nq * (nq + 1) // 2
    qi_list, ki_list = [], []
    for qi in range(nq):
        for ki in range(qi + 1):
            qi_list.append(qi)
            ki_list.append(ki)
    qi_tbl = jnp.asarray(qi_list, jnp.int32)
    ki_tbl = jnp.asarray(ki_list, jnp.int32)

    y = pl.pallas_call(
        functools.partial(_flash_kernel, n_head=H, head_dim=hd),
        out_shape=jax.ShapeDtypeStruct((B, T, C), cdt),
        grid_spec=pltpu.PrefetchScalarGridSpec(
            num_scalar_prefetch=2,
            grid=(B, n_tri),
            in_specs=[
                # q block index is constant across the ki sweep -> DMA dedups (stays resident)
                pl.BlockSpec((None, tq, C), lambda b, t, qt, kt: (b, qt[t], 0)),
                pl.BlockSpec((None, tk, C), lambda b, t, qt, kt: (b, kt[t], 0)),
                pl.BlockSpec((None, tk, C), lambda b, t, qt, kt: (b, kt[t], 0)),
            ],
            out_specs=pl.BlockSpec((None, tq, C), lambda b, t, qt, kt: (b, qt[t], 0)),
            scratch_shapes=[
                pltpu.VMEM((H, tq, 1), jnp.float32),     # running max  m (per head)
                pltpu.VMEM((H, tq, 1), jnp.float32),     # running sum  l (per head)
                pltpu.VMEM((H, tq, hd), jnp.float32),    # output accumulator (per head)
            ],
        ),
        compiler_params=pltpu.CompilerParams(
            dimension_semantics=("parallel", "arbitrary"),
            vmem_limit_bytes=_VMEM_LIMIT),
    )(qi_tbl, ki_tbl, q, k, v)

    # TODO(synk): attn_drop / resid_drop are identity (eval mode); no RNG dropout here.

    # ---- 3) output projection: one dense (tm, C) @ (C, tn) matmul -------------
    out = pl.pallas_call(
        _proj_kernel,
        out_shape=jax.ShapeDtypeStruct((B, T, C), x.dtype),
        grid=(nj3, B, T // tm),
        in_specs=[
            pl.BlockSpec((None, tm, C), lambda j, b, i: (b, i, 0)),
            pl.BlockSpec((C, tn3), lambda j, b, i: (0, j)),
            pl.BlockSpec((1, tn3), lambda j, b, i: (0, j)),
        ],
        out_specs=pl.BlockSpec((None, tm, tn3), lambda j, b, i: (b, i, j)),
        compiler_params=pltpu.CompilerParams(
            dimension_semantics=("arbitrary", "parallel", "parallel"),
            vmem_limit_bytes=_VMEM_LIMIT),
    )(y, w_p, b_p)
    return out


# --------------------------------------------------------------------------- #
# Pure-JAX reference (mirrors the PyTorch forward, eval mode, f32)            #
# --------------------------------------------------------------------------- #
def reference(x, params, n_head):
    B, T, C = x.shape
    wq, bq, wk, bk, wv, bv, wp, bp = params
    hd = C // n_head

    def lin(x, w, b):
        return x @ w.T + b

    def split_heads(t):
        return t.reshape(B, T, n_head, hd).transpose(0, 2, 1, 3)

    q = split_heads(lin(x, wq, bq))
    k = split_heads(lin(x, wk, bk))
    v = split_heads(lin(x, wv, bv))
    att = jnp.einsum('bhtd,bhsd->bhts', q, k) * (1.0 / math.sqrt(hd))
    mask = jnp.tril(jnp.ones((T, T), bool))[None, None]
    att = jnp.where(mask, att, -jnp.inf)
    att = jax.nn.softmax(att, axis=-1)
    y = jnp.einsum('bhts,bhsd->bhtd', att, v)
    y = y.transpose(0, 2, 1, 3).reshape(B, T, C)
    return lin(y, wp, bp)


if __name__ == "__main__":
    B, T, C, n_head = 2, 8, 32, 4
    key = jax.random.PRNGKey(0)
    keys = jax.random.split(key, 9)

    x = jax.random.normal(keys[0], (B, T, C), jnp.float32)

    def w_init(k):
        return jax.random.normal(k, (C, C), jnp.float32) * 0.02   # PyTorch (out, in)

    def b_init(k):
        return jax.random.normal(k, (C,), jnp.float32) * 0.02

    params = (w_init(keys[1]), b_init(keys[5]),   # query
              w_init(keys[2]), b_init(keys[6]),   # key
              w_init(keys[3]), b_init(keys[7]),   # value
              w_init(keys[4]), b_init(keys[8]))   # proj

    packed = pack_params(params, n_head)          # one-time weight packing (load time)
    fwd = jax.jit(functools.partial(causal_self_attention, n_head=n_head))

    out = jax.block_until_ready(fwd(x, packed))

    ref = reference(x, params, n_head)
    assert out.shape == (B, T, C)
    max_err = float(jnp.max(jnp.abs(out - ref)))
    # bf16 MXU operands / f32 accumulation: compare to the f32 reference at bf16 tolerance
    assert jnp.allclose(out, ref, atol=2e-2, rtol=2e-2), \
        f"mismatch vs pure-JAX reference (max |err| = {max_err})"
    print("KERNEL_OK")
</pallas_src>

<mosaic_0001>
module attributes {stable_mosaic.version = 11 : i64} {
  func.func @_qkv_kernel(%arg0: i32, %arg1: i32, %arg2: i32, %arg3: memref<1x8x32xbf16, #tpu.memory_space<vmem>>, %arg4: memref<3x32x32xbf16, #tpu.memory_space<vmem>>, %arg5: memref<3x1x32xf32, #tpu.memory_space<vmem>>, %arg6: memref<1x8x32xbf16, #tpu.memory_space<vmem>>, %arg7: memref<1x8x32xbf16, #tpu.memory_space<vmem>>, %arg8: memref<1x8x32xbf16, #tpu.memory_space<vmem>>) attributes {dimension_semantics = [#tpu.dimension_semantics<arbitrary>, #tpu.dimension_semantics<parallel>, #tpu.dimension_semantics<parallel>], iteration_bounds = array<i64: 1, 2, 1>, scalar_prefetch = 0 : i64, scratch_operands = 0 : i64, tpu.core_type = #tpu.core_type<tc>, window_params = [{transform_indices = @transform_0, window_bounds = array<i64: 1, 8, 32>}, {transform_indices = @transform_1, window_bounds = array<i64: 3, 32, 32>}, {transform_indices = @transform_2, window_bounds = array<i64: 3, 1, 32>}, {transform_indices = @transform_3, window_bounds = array<i64: 1, 8, 32>}, {transform_indices = @transform_4, window_bounds = array<i64: 1, 8, 32>}, {transform_indices = @transform_5, window_bounds = array<i64: 1, 8, 32>}]} {
    %c0 = arith.constant 0 : index
    %c0_0 = arith.constant 0 : index
    %c0_1 = arith.constant 0 : index
    %0 = vector.load %arg3[%c0, %c0_0, %c0_1] : memref<1x8x32xbf16, #tpu.memory_space<vmem>>, vector<1x8x32xbf16>
    %1 = vector.shape_cast %0 : vector<1x8x32xbf16> to vector<8x32xbf16>
    %c0_2 = arith.constant 0 : index
    %c0_3 = arith.constant 0 : index
    %c0_4 = arith.constant 0 : index
    %2 = vector.load %arg4[%c0_2, %c0_3, %c0_4] : memref<3x32x32xbf16, #tpu.memory_space<vmem>>, vector<1x32x32xbf16>
    %3 = vector.shape_cast %2 : vector<1x32x32xbf16> to vector<32x32xbf16>
    %cst = arith.constant dense<0.000000e+00> : vector<8x32xf32>
    %4 = tpu.matmul %1, %3, %cst {dimension_numbers = #tpu.dot_dimension_numbers<[1], [0], [0], [1], [0, 0, 1, 1], [], []>} : vector<8x32xbf16>, vector<32x32xbf16>, vector<8x32xf32> -> vector<8x32xf32>
    %c0_5 = arith.constant 0 : index
    %c0_6 = arith.constant 0 : index
    %c0_7 = arith.constant 0 : index
    %5 = vector.load %arg5[%c0_5, %c0_6, %c0_7] : memref<3x1x32xf32, #tpu.memory_space<vmem>>, vector<1x1x32xf32>
    %6 = vector.shape_cast %5 : vector<1x1x32xf32> to vector<1x32xf32>
    %7 = vector.broadcast %6 : vector<1x32xf32> to vector<8x32xf32>
    %8 = arith.addf %4, %7 : vector<8x32xf32>
    %9 = arith.truncf %8 : vector<8x32xf32> to vector<8x32xbf16>
    %c0_8 = arith.constant 0 : index
    %c0_9 = arith.constant 0 : index
    %c0_10 = arith.constant 0 : index
    %10 = vector.load %arg6[%c0_8, %c0_9, %c0_10] : memref<1x8x32xbf16, #tpu.memory_space<vmem>>, vector<1x8x32xbf16>
    %11 = vector.shape_cast %10 : vector<1x8x32xbf16> to vector<8x32xbf16>
    %12 = vector.shape_cast %9 : vector<8x32xbf16> to vector<1x8x32xbf16>
    tpu.vector_store %arg6[%c0_8, %c0_9, %c0_10], %12 {strides = array<i32>} : memref<1x8x32xbf16, #tpu.memory_space<vmem>>, vector<1x8x32xbf16>,
    %c1 = arith.constant 1 : index
    %c0_11 = arith.constant 0 : index
    %c0_12 = arith.constant 0 : index
    %13 = vector.load %arg4[%c1, %c0_11, %c0_12] : memref<3x32x32xbf16, #tpu.memory_space<vmem>>, vector<1x32x32xbf16>
    %14 = vector.shape_cast %13 : vector<1x32x32xbf16> to vector<32x32xbf16>
    %cst_13 = arith.constant dense<0.000000e+00> : vector<8x32xf32>
    %15 = tpu.matmul %1, %14, %cst_13 {dimension_numbers = #tpu.dot_dimension_numbers<[1], [0], [0], [1], [0, 0, 1, 1], [], []>} : vector<8x32xbf16>, vector<32x32xbf16>, vector<8x32xf32> -> vector<8x32xf32>
    %c1_14 = arith.constant 1 : index
    %c0_15 = arith.constant 0 : index
    %c0_16 = arith.constant 0 : index
    %16 = vector.load %arg5[%c1_14, %c0_15, %c0_16] : memref<3x1x32xf32, #tpu.memory_space<vmem>>, vector<1x1x32xf32>
    %17 = vector.shape_cast %16 : vector<1x1x32xf32> to vector<1x32xf32>
    %18 = vector.broadcast %17 : vector<1x32xf32> to vector<8x32xf32>
    %19 = arith.addf %15, %18 : vector<8x32xf32>
    %20 = arith.truncf %19 : vector<8x32xf32> to vector<8x32xbf16>
    %c0_17 = arith.constant 0 : index
    %c0_18 = arith.constant 0 : index
    %c0_19 = arith.constant 0 : index
    %21 = vector.load %arg7[%c0_17, %c0_18, %c0_19] : memref<1x8x32xbf16, #tpu.memory_space<vmem>>, vector<1x8x32xbf16>
    %22 = vector.shape_cast %21 : vector<1x8x32xbf16> to vector<8x32xbf16>
    %23 = vector.shape_cast %20 : vector<8x32xbf16> to vector<1x8x32xbf16>
    tpu.vector_store %arg7[%c0_17, %c0_18, %c0_19], %23 {strides = array<i32>} : memref<1x8x32xbf16, #tpu.memory_space<vmem>>, vector<1x8x32xbf16>,
    %c2 = arith.constant 2 : index
    %c0_20 = arith.constant 0 : index
    %c0_21 = arith.constant 0 : index
    %24 = vector.load %arg4[%c2, %c0_20, %c0_21] : memref<3x32x32xbf16, #tpu.memory_space<vmem>>, vector<1x32x32xbf16>
    %25 = vector.shape_cast %24 : vector<1x32x32xbf16> to vector<32x32xbf16>
    %cst_22 = arith.constant dense<0.000000e+00> : vector<8x32xf32>
    %26 = tpu.matmul %1, %25, %cst_22 {dimension_numbers = #tpu.dot_dimension_numbers<[1], [0], [0], [1], [0, 0, 1, 1], [], []>} : vector<8x32xbf16>, vector<32x32xbf16>, vector<8x32xf32> -> vector<8x32xf32>
    %c2_23 = arith.constant 2 : index
    %c0_24 = arith.constant 0 : index
    %c0_25 = arith.constant 0 : index
    %27 = vector.load %arg5[%c2_23, %c0_24, %c0_25] : memref<3x1x32xf32, #tpu.memory_space<vmem>>, vector<1x1x32xf32>
    %28 = vector.shape_cast %27 : vector<1x1x32xf32> to vector<1x32xf32>
    %29 = vector.broadcast %28 : vector<1x32xf32> to vector<8x32xf32>
    %30 = arith.addf %26, %29 : vector<8x32xf32>
    %31 = arith.truncf %30 : vector<8x32xf32> to vector<8x32xbf16>
    %c0_26 = arith.constant 0 : index
    %c0_27 = arith.constant 0 : index
    %c0_28 = arith.constant 0 : index
    %32 = vector.load %arg8[%c0_26, %c0_27, %c0_28] : memref<1x8x32xbf16, #tpu.memory_space<vmem>>, vector<1x8x32xbf16>
    %33 = vector.shape_cast %32 : vector<1x8x32xbf16> to vector<8x32xbf16>
    %34 = vector.shape_cast %31 : vector<8x32xbf16> to vector<1x8x32xbf16>
    tpu.vector_store %arg8[%c0_26, %c0_27, %c0_28], %34 {strides = array<i32>} : memref<1x8x32xbf16, #tpu.memory_space<vmem>>, vector<1x8x32xbf16>,
    return
  }
  func.func @transform_0(%arg0: i32, %arg1: i32, %arg2: i32) -> (i32, i32, i32) {
    %c0_i32 = arith.constant 0 : i32
    %c0_i32_0 = arith.constant 0 : i32
    return %arg1, %arg2, %c0_i32 : i32, i32, i32
  }
  func.func @transform_1(%arg0: i32, %arg1: i32, %arg2: i32) -> (i32, i32, i32) {
    %c0_i32 = arith.constant 0 : i32
    %c0_i32_0 = arith.constant 0 : i32
    %c0_i32_1 = arith.constant 0 : i32
    return %c0_i32, %c0_i32_0, %arg0 : i32, i32, i32
  }
  func.func @transform_2(%arg0: i32, %arg1: i32, %arg2: i32) -> (i32, i32, i32) {
    %c0_i32 = arith.constant 0 : i32
    %c0_i32_0 = arith.constant 0 : i32
    %c0_i32_1 = arith.constant 0 : i32
    return %c0_i32, %c0_i32_0, %arg0 : i32, i32, i32
  }
  func.func @transform_3(%arg0: i32, %arg1: i32, %arg2: i32) -> (i32, i32, i32) {
    %c0_i32 = arith.constant 0 : i32
    return %arg1, %arg2, %arg0 : i32, i32, i32
  }
  func.func @transform_4(%arg0: i32, %arg1: i32, %arg2: i32) -> (i32, i32, i32) {
    %c0_i32 = arith.constant 0 : i32
    return %arg1, %arg2, %arg0 : i32, i32, i32
  }
  func.func @transform_5(%arg0: i32, %arg1: i32, %arg2: i32) -> (i32, i32, i32) {
    %c0_i32 = arith.constant 0 : i32
    return %arg1, %arg2, %arg0 : i32, i32, i32
  }
}

module attributes {stable_mosaic.version = 11 : i64} {
  func.func @_proj_kernel(%arg0: i32, %arg1: i32, %arg2: i32, %arg3: memref<1x8x32xbf16, #tpu.memory_space<vmem>>, %arg4: memref<32x32xbf16, #tpu.memory_space<vmem>>, %arg5: memref<1x32xf32, #tpu.memory_space<vmem>>, %arg6: memref<1x8x32xf32, #tpu.memory_space<vmem>>) attributes {dimension_semantics = [#tpu.dimension_semantics<arbitrary>, #tpu.dimension_semantics<parallel>, #tpu.dimension_semantics<parallel>], iteration_bounds = array<i64: 1, 2, 1>, scalar_prefetch = 0 : i64, scratch_operands = 0 : i64, tpu.core_type = #tpu.core_type<tc>, window_params = [{transform_indices = @transform_0, window_bounds = array<i64: 1, 8, 32>}, {transform_indices = @transform_1, window_bounds = array<i64: 32, 32>}, {transform_indices = @transform_2, window_bounds = array<i64: 1, 32>}, {transform_indices = @transform_3, window_bounds = array<i64: 1, 8, 32>}]} {
    %c0 = arith.constant 0 : index
    %c0_0 = arith.constant 0 : index
    %c0_1 = arith.constant 0 : index
    %0 = vector.load %arg3[%c0, %c0_0, %c0_1] : memref<1x8x32xbf16, #tpu.memory_space<vmem>>, vector<1x8x32xbf16>
    %1 = vector.shape_cast %0 : vector<1x8x32xbf16> to vector<8x32xbf16>
    %c0_2 = arith.constant 0 : index
    %c0_3 = arith.constant 0 : index
    %2 = vector.load %arg4[%c0_2, %c0_3] : memref<32x32xbf16, #tpu.memory_space<vmem>>, vector<32x32xbf16>
    %cst = arith.constant dense<0.000000e+00> : vector<8x32xf32>
    %3 = tpu.matmul %1, %2, %cst {dimension_numbers = #tpu.dot_dimension_numbers<[1], [0], [0], [1], [0, 0, 1, 1], [], []>} : vector<8x32xbf16>, vector<32x32xbf16>, vector<8x32xf32> -> vector<8x32xf32>
    %c0_4 = arith.constant 0 : index
    %c0_5 = arith.constant 0 : index
    %4 = vector.load %arg5[%c0_4, %c0_5] : memref<1x32xf32, #tpu.memory_space<vmem>>, vector<1x32xf32>
    %5 = vector.broadcast %4 : vector<1x32xf32> to vector<8x32xf32>
    %6 = arith.addf %3, %5 : vector<8x32xf32>
    %c0_6 = arith.constant 0 : index
    %c0_7 = arith.constant 0 : index
    %c0_8 = arith.constant 0 : index
    %7 = vector.load %arg6[%c0_6, %c0_7, %c0_8] : memref<1x8x32xf32, #tpu.memory_space<vmem>>, vector<1x8x32xf32>
    %8 = vector.shape_cast %7 : vector<1x8x32xf32> to vector<8x32xf32>
    %9 = vector.shape_cast %6 : vector<8x32xf32> to vector<1x8x32xf32>
    tpu.vector_store %arg6[%c0_6, %c0_7, %c0_8], %9 {strides = array<i32>} : memref<1x8x32xf32, #tpu.memory_space<vmem>>, vector<1x8x32xf32>,
    return
  }
  func.func @transform_0(%arg0: i32, %arg1: i32, %arg2: i32) -> (i32, i32, i32) {
    %c0_i32 = arith.constant 0 : i32
    %c0_i32_0 = arith.constant 0 : i32
    return %arg1, %arg2, %c0_i32 : i32, i32, i32
  }
  func.func @transform_1(%arg0: i32, %arg1: i32, %arg2: i32) -> (i32, i32) {
    %c0_i32 = arith.constant 0 : i32
    %c0_i32_0 = arith.constant 0 : i32
    return %c0_i32, %arg0 : i32, i32
  }
  func.func @transform_2(%arg0: i32, %arg1: i32, %arg2: i32) -> (i32, i32) {
    %c0_i32 = arith.constant 0 : i32
    %c0_i32_0 = arith.constant 0 : i32
    return %c0_i32, %arg0 : i32, i32
  }
  func.func @transform_3(%arg0: i32, %arg1: i32, %arg2: i32) -> (i32, i32, i32) {
    %c0_i32 = arith.constant 0 : i32
    return %arg1, %arg2, %arg0 : i32, i32, i32
  }
}

module attributes {stable_mosaic.version = 11 : i64} {
  func.func @_flash_kernel(%arg0: i32, %arg1: i32, %arg2: memref<1xi32, #tpu.memory_space<smem>>, %arg3: memref<1xi32, #tpu.memory_space<smem>>, %arg4: memref<1x8x32xbf16, #tpu.memory_space<vmem>>, %arg5: memref<1x8x32xbf16, #tpu.memory_space<vmem>>, %arg6: memref<1x8x32xbf16, #tpu.memory_space<vmem>>, %arg7: memref<1x8x32xbf16, #tpu.memory_space<vmem>>, %arg8: memref<4x8x1xf32, #tpu.memory_space<vmem>>, %arg9: memref<4x8x1xf32, #tpu.memory_space<vmem>>, %arg10: memref<4x8x8xf32, #tpu.memory_space<vmem>>) attributes {dimension_semantics = [#tpu.dimension_semantics<parallel>, #tpu.dimension_semantics<arbitrary>], iteration_bounds = array<i64: 2, 1>, scalar_prefetch = 2 : i64, scratch_operands = 3 : i64, tpu.core_type = #tpu.core_type<tc>, window_params = [{transform_indices = @transform_0, window_bounds = array<i64: 1, 8, 32>}, {transform_indices = @transform_1, window_bounds = array<i64: 1, 8, 32>}, {transform_indices = @transform_2, window_bounds = array<i64: 1, 8, 32>}, {transform_indices = @transform_3, window_bounds = array<i64: 1, 8, 32>}]} {
    %0 = arith.index_cast %arg1 : i32 to index
    %1 = memref.load %arg2[%0] : memref<1xi32, #tpu.memory_space<smem>>
    %2 = arith.index_cast %arg1 : i32 to index
    %3 = memref.load %arg3[%2] : memref<1xi32, #tpu.memory_space<smem>>
    %c0_i32 = arith.constant 0 : i32
    %4 = arith.cmpi eq, %3, %c0_i32 : i32
    %5 = arith.extui %4 : i1 to i32
    %c0_i32_0 = arith.constant 0 : i32
    %6 = arith.cmpi ne, %5, %c0_i32_0 : i32
    scf.if %6 {
      %cst = arith.constant -1.000000e+30 : f32
      %13 = vector.broadcast %cst : f32 to vector<4x8x1xf32>
      %c0 = arith.constant 0 : index
      %c0_3 = arith.constant 0 : index
      %c0_4 = arith.constant 0 : index
      %14 = vector.load %arg8[%c0, %c0_3, %c0_4] : memref<4x8x1xf32, #tpu.memory_space<vmem>>, vector<4x8x1xf32>
      tpu.vector_store %arg8[%c0, %c0_3, %c0_4], %13 {strides = array<i32>} : memref<4x8x1xf32, #tpu.memory_space<vmem>>, vector<4x8x1xf32>,
      %cst_5 = arith.constant 0.000000e+00 : f32
      %15 = vector.broadcast %cst_5 : f32 to vector<4x8x1xf32>
      %c0_6 = arith.constant 0 : index
      %c0_7 = arith.constant 0 : index
      %c0_8 = arith.constant 0 : index
      %16 = vector.load %arg9[%c0_6, %c0_7, %c0_8] : memref<4x8x1xf32, #tpu.memory_space<vmem>>, vector<4x8x1xf32>
      tpu.vector_store %arg9[%c0_6, %c0_7, %c0_8], %15 {strides = array<i32>} : memref<4x8x1xf32, #tpu.memory_space<vmem>>, vector<4x8x1xf32>,
      %cst_9 = arith.constant 0.000000e+00 : f32
      %17 = vector.broadcast %cst_9 : f32 to vector<4x8x8xf32>
      %c0_10 = arith.constant 0 : index
      %c0_11 = arith.constant 0 : index
      %c0_12 = arith.constant 0 : index
      %18 = vector.load %arg10[%c0_10, %c0_11, %c0_12] : memref<4x8x8xf32, #tpu.memory_space<vmem>>, vector<4x8x8xf32>
      tpu.vector_store %arg10[%c0_10, %c0_11, %c0_12], %17 {strides = array<i32>} : memref<4x8x8xf32, #tpu.memory_space<vmem>>, vector<4x8x8xf32>,
    } else {
    }
    %7 = arith.cmpi slt, %3, %1 : i32
    %8 = arith.extui %7 : i1 to i32
    %c0_i32_1 = arith.constant 0 : i32
    %9 = arith.cmpi ne, %8, %c0_i32_1 : i32
    scf.if %9 {
      %c0 = arith.constant 0 : index
      %c0_3 = arith.constant 0 : index
      %c0_4 = arith.constant 0 : index
      %13 = vector.load %arg4[%c0, %c0_3, %c0_4] : memref<1x8x32xbf16, #tpu.memory_space<vmem>>, vector<1x8x32xbf16>
      %14 = vector.shape_cast %13 : vector<1x8x32xbf16> to vector<8x32xbf16>
      %c0_5 = arith.constant 0 : index
      %c0_6 = arith.constant 0 : index
      %c0_7 = arith.constant 0 : index
      %15 = vector.load %arg5[%c0_5, %c0_6, %c0_7] : memref<1x8x32xbf16, #tpu.memory_space<vmem>>, vector<1x8x32xbf16>
      %16 = vector.shape_cast %15 : vector<1x8x32xbf16> to vector<8x32xbf16>
      %c0_8 = arith.constant 0 : index
      %c0_9 = arith.constant 0 : index
      %c0_10 = arith.constant 0 : index
      %17 = vector.load %arg6[%c0_8, %c0_9, %c0_10] : memref<1x8x32xbf16, #tpu.memory_space<vmem>>, vector<1x8x32xbf16>
      %18 = vector.shape_cast %17 : vector<1x8x32xbf16> to vector<8x32xbf16>
      %19 = vector.extract_strided_slice %14 {offsets = [0, 0], sizes = [8, 8], strides = [1, 1]} : vector<8x32xbf16> to vector<8x8xbf16>
      %20 = vector.extract_strided_slice %16 {offsets = [0, 0], sizes = [8, 8], strides = [1, 1]} : vector<8x32xbf16> to vector<8x8xbf16>
      %cst = arith.constant dense<0.000000e+00> : vector<8x8xf32>
      %21 = tpu.matmul %19, %20, %cst {dimension_numbers = #tpu.dot_dimension_numbers<[1], [1], [0], [0], [0, 0, 1, 0], [], []>} : vector<8x8xbf16>, vector<8x8xbf16>, vector<8x8xf32> -> vector<8x8xf32>
      %c0_11 = arith.constant 0 : index
      %c0_12 = arith.constant 0 : index
      %c0_13 = arith.constant 0 : index
      %22 = vector.load %arg8[%c0_11, %c0_12, %c0_13] : memref<4x8x1xf32, #tpu.memory_space<vmem>>, vector<1x8x1xf32>
      %23 = vector.shape_cast %22 : vector<1x8x1xf32> to vector<8x1xf32>
      %cst_14 = arith.constant dense<0xFF800000> : vector<8xf32>
      %24 = vector.multi_reduction <maximumf>, %21, %cst_14 [1] : vector<8x8xf32> to vector<8xf32>
      %25 = vector.shape_cast %24 : vector<8xf32> to vector<8x1xf32>
      %26 = arith.maximumf %23, %25 : vector<8x1xf32>
      %27 = arith.subf %23, %26 : vector<8x1xf32>
      %28 = math.exp %27 : vector<8x1xf32>
      %29 = vector.broadcast %26 : vector<8x1xf32> to vector<8x8xf32>
      %30 = arith.subf %21, %29 : vector<8x8xf32>
      %31 = math.exp %30 : vector<8x8xf32>
      %c0_15 = arith.constant 0 : index
      %c0_16 = arith.constant 0 : index
      %c0_17 = arith.constant 0 : index
      %32 = vector.load %arg9[%c0_15, %c0_16, %c0_17] : memref<4x8x1xf32, #tpu.memory_space<vmem>>, vector<1x8x1xf32>
      %33 = vector.shape_cast %32 : vector<1x8x1xf32> to vector<8x1xf32>
      %34 = arith.mulf %28, %33 : vector<8x1xf32>
      %cst_18 = arith.constant dense<0.000000e+00> : vector<8xf32>
      %35 = vector.multi_reduction <add>, %31, %cst_18 [1] : vector<8x8xf32> to vector<8xf32>
      %36 = vector.shape_cast %35 : vector<8xf32> to vector<8x1xf32>
      %37 = arith.addf %34, %36 : vector<8x1xf32>
      %c0_19 = arith.constant 0 : index
      %c0_20 = arith.constant 0 : index
      %c0_21 = arith.constant 0 : index
      %38 = vector.load %arg9[%c0_19, %c0_20, %c0_21] : memref<4x8x1xf32, #tpu.memory_space<vmem>>, vector<1x8x1xf32>
      %39 = vector.shape_cast %38 : vector<1x8x1xf32> to vector<8x1xf32>
      %40 = vector.shape_cast %37 : vector<8x1xf32> to vector<1x8x1xf32>
      tpu.vector_store %arg9[%c0_19, %c0_20, %c0_21], %40 {strides = array<i32>} : memref<4x8x1xf32, #tpu.memory_space<vmem>>, vector<1x8x1xf32>,
      %c0_22 = arith.constant 0 : index
      %c0_23 = arith.constant 0 : index
      %c0_24 = arith.constant 0 : index
      %41 = vector.load %arg10[%c0_22, %c0_23, %c0_24] : memref<4x8x8xf32, #tpu.memory_space<vmem>>, vector<1x8x8xf32>
      %42 = vector.shape_cast %41 : vector<1x8x8xf32> to vector<8x8xf32>
      %43 = vector.broadcast %28 : vector<8x1xf32> to vector<8x8xf32>
      %44 = arith.mulf %43, %42 : vector<8x8xf32>
      %45 = arith.truncf %31 : vector<8x8xf32> to vector<8x8xbf16>
      %46 = vector.extract_strided_slice %18 {offsets = [0, 0], sizes = [8, 8], strides = [1, 1]} : vector<8x32xbf16> to vector<8x8xbf16>
      %cst_25 = arith.constant dense<0.000000e+00> : vector<8x8xf32>
      %47 = tpu.matmul %45, %46, %cst_25 {dimension_numbers = #tpu.dot_dimension_numbers<[1], [0], [0], [1], [0, 0, 1, 1], [], []>} : vector<8x8xbf16>, vector<8x8xbf16>, vector<8x8xf32> -> vector<8x8xf32>
      %48 = arith.addf %44, %47 : vector<8x8xf32>
      %c0_26 = arith.constant 0 : index
      %c0_27 = arith.constant 0 : index
      %c0_28 = arith.constant 0 : index
      %49 = vector.load %arg10[%c0_26, %c0_27, %c0_28] : memref<4x8x8xf32, #tpu.memory_space<vmem>>, vector<1x8x8xf32>
      %50 = vector.shape_cast %49 : vector<1x8x8xf32> to vector<8x8xf32>
      %51 = vector.shape_cast %48 : vector<8x8xf32> to vector<1x8x8xf32>
      tpu.vector_store %arg10[%c0_26, %c0_27, %c0_28], %51 {strides = array<i32>} : memref<4x8x8xf32, #tpu.memory_space<vmem>>, vector<1x8x8xf32>,
      %c0_29 = arith.constant 0 : index
      %c0_30 = arith.constant 0 : index
      %c0_31 = arith.constant 0 : index
      %52 = vector.load %arg8[%c0_29, %c0_30, %c0_31] : memref<4x8x1xf32, #tpu.memory_space<vmem>>, vector<1x8x1xf32>
      %53 = vector.shape_cast %52 : vector<1x8x1xf32> to vector<8x1xf32>
      %54 = vector.shape_cast %26 : vector<8x1xf32> to vector<1x8x1xf32>
      tpu.vector_store %arg8[%c0_29, %c0_30, %c0_31], %54 {strides = array<i32>} : memref<4x8x1xf32, #tpu.memory_space<vmem>>, vector<1x8x1xf32>,
      %55 = vector.extract_strided_slice %14 {offsets = [0, 8], sizes = [8, 8], strides = [1, 1]} : vector<8x32xbf16> to vector<8x8xbf16>
      %56 = vector.extract_strided_slice %16 {offsets = [0, 8], sizes = [8, 8], strides = [1, 1]} : vector<8x32xbf16> to vector<8x8xbf16>
      %cst_32 = arith.constant dense<0.000000e+00> : vector<8x8xf32>
      %57 = tpu.matmul %55, %56, %cst_32 {dimension_numbers = #tpu.dot_dimension_numbers<[1], [1], [0], [0], [0, 0, 1, 0], [], []>} : vector<8x8xbf16>, vector<8x8xbf16>, vector<8x8xf32> -> vector<8x8xf32>
      %c1 = arith.constant 1 : index
      %c0_33 = arith.constant 0 : index
      %c0_34 = arith.constant 0 : index
      %58 = vector.load %arg8[%c1, %c0_33, %c0_34] : memref<4x8x1xf32, #tpu.memory_space<vmem>>, vector<1x8x1xf32>
      %59 = vector.shape_cast %58 : vector<1x8x1xf32> to vector<8x1xf32>
      %cst_35 = arith.constant dense<0xFF800000> : vector<8xf32>
      %60 = vector.multi_reduction <maximumf>, %57, %cst_35 [1] : vector<8x8xf32> to vector<8xf32>
      %61 = vector.shape_cast %60 : vector<8xf32> to vector<8x1xf32>
      %62 = arith.maximumf %59, %61 : vector<8x1xf32>
      %63 = arith.subf %59, %62 : vector<8x1xf32>
      %64 = math.exp %63 : vector<8x1xf32>
      %65 = vector.broadcast %62 : vector<8x1xf32> to vector<8x8xf32>
      %66 = arith.subf %57, %65 : vector<8x8xf32>
      %67 = math.exp %66 : vector<8x8xf32>
      %c1_36 = arith.constant 1 : index
      %c0_37 = arith.constant 0 : index
      %c0_38 = arith.constant 0 : index
      %68 = vector.load %arg9[%c1_36, %c0_37, %c0_38] : memref<4x8x1xf32, #tpu.memory_space<vmem>>, vector<1x8x1xf32>
      %69 = vector.shape_cast %68 : vector<1x8x1xf32> to vector<8x1xf32>
      %70 = arith.mulf %64, %69 : vector<8x1xf32>
      %cst_39 = arith.constant dense<0.000000e+00> : vector<8xf32>
      %71 = vector.multi_reduction <add>, %67, %cst_39 [1] : vector<8x8xf32> to vector<8xf32>
      %72 = vector.shape_cast %71 : vector<8xf32> to vector<8x1xf32>
      %73 = arith.addf %70, %72 : vector<8x1xf32>
      %c1_40 = arith.constant 1 : index
      %c0_41 = arith.constant 0 : index
      %c0_42 = arith.constant 0 : index
      %74 = vector.load %arg9[%c1_40, %c0_41, %c0_42] : memref<4x8x1xf32, #tpu.memory_space<vmem>>, vector<1x8x1xf32>
      %75 = vector.shape_cast %74 : vector<1x8x1xf32> to vector<8x1xf32>
      %76 = vector.shape_cast %73 : vector<8x1xf32> to vector<1x8x1xf32>
      tpu.vector_store %arg9[%c1_40, %c0_41, %c0_42], %76 {strides = array<i32>} : memref<4x8x1xf32, #tpu.memory_space<vmem>>, vector<1x8x1xf32>,
      %c1_43 = arith.constant 1 : index
      %c0_44 = arith.constant 0 : index
      %c0_45 = arith.constant 0 : index
      %77 = vector.load %arg10[%c1_43, %c0_44, %c0_45] : memref<4x8x8xf32, #tpu.memory_space<vmem>>, vector<1x8x8xf32>
      %78 = vector.shape_cast %77 : vector<1x8x8xf32> to vector<8x8xf32>
      %79 = vector.broadcast %64 : vector<8x1xf32> to vector<8x8xf32>
      %80 = arith.mulf %79, %78 : vector<8x8xf32>
      %81 = arith.truncf %67 : vector<8x8xf32> to vector<8x8xbf16>
      %82 = vector.extract_strided_slice %18 {offsets = [0, 8], sizes = [8, 8], strides = [1, 1]} : vector<8x32xbf16> to vector<8x8xbf16>
      %cst_46 = arith.constant dense<0.000000e+00> : vector<8x8xf32>
      %83 = tpu.matmul %81, %82, %cst_46 {dimension_numbers = #tpu.dot_dimension_numbers<[1], [0], [0], [1], [0, 0, 1, 1], [], []>} : vector<8x8xbf16>, vector<8x8xbf16>, vector<8x8xf32> -> vector<8x8xf32>
      %84 = arith.addf %80, %83 : vector<8x8xf32>
      %c1_47 = arith.constant 1 : index
      %c0_48 = arith.constant 0 : index
      %c0_49 = arith.constant 0 : index
      %85 = vector.load %arg10[%c1_47, %c0_48, %c0_49] : memref<4x8x8xf32, #tpu.memory_space<vmem>>, vector<1x8x8xf32>
      %86 = vector.shape_cast %85 : vector<1x8x8xf32> to vector<8x8xf32>
      %87 = vector.shape_cast %84 : vector<8x8xf32> to vector<1x8x8xf32>
      tpu.vector_store %arg10[%c1_47, %c0_48, %c0_49], %87 {strides = array<i32>} : memref<4x8x8xf32, #tpu.memory_space<vmem>>, vector<1x8x8xf32>,
      %c1_50 = arith.constant 1 : index
      %c0_51 = arith.constant 0 : index
      %c0_52 = arith.constant 0 : index
      %88 = vector.load %arg8[%c1_50, %c0_51, %c0_52] : memref<4x8x1xf32, #tpu.memory_space<vmem>>, vector<1x8x1xf32>
      %89 = vector.shape_cast %88 : vector<1x8x1xf32> to vector<8x1xf32>
      %90 = vector.shape_cast %62 : vector<8x1xf32> to vector<1x8x1xf32>
      tpu.vector_store %arg8[%c1_50, %c0_51, %c0_52], %90 {strides = array<i32>} : memref<4x8x1xf32, #tpu.memory_space<vmem>>, vector<1x8x1xf32>,
      %91 = vector.extract_strided_slice %14 {offsets = [0, 16], sizes = [8, 8], strides = [1, 1]} : vector<8x32xbf16> to vector<8x8xbf16>
      %92 = vector.extract_strided_slice %16 {offsets = [0, 16], sizes = [8, 8], strides = [1, 1]} : vector<8x32xbf16> to vector<8x8xbf16>
      %cst_53 = arith.constant dense<0.000000e+00> : vector<8x8xf32>
      %93 = tpu.matmul %91, %92, %cst_53 {dimension_numbers = #tpu.dot_dimension_numbers<[1], [1], [0], [0], [0, 0, 1, 0], [], []>} : vector<8x8xbf16>, vector<8x8xbf16>, vector<8x8xf32> -> vector<8x8xf32>
      %c2 = arith.constant 2 : index
      %c0_54 = arith.constant 0 : index
      %c0_55 = arith.constant 0 : index
      %94 = vector.load %arg8[%c2, %c0_54, %c0_55] : memref<4x8x1xf32, #tpu.memory_space<vmem>>, vector<1x8x1xf32>
      %95 = vector.shape_cast %94 : vector<1x8x1xf32> to vector<8x1xf32>
      %cst_56 = arith.constant dense<0xFF800000> : vector<8xf32>
      %96 = vector.multi_reduction <maximumf>, %93, %cst_56 [1] : vector<8x8xf32> to vector<8xf32>
      %97 = vector.shape_cast %96 : vector<8xf32> to vector<8x1xf32>
      %98 = arith.maximumf %95, %97 : vector<8x1xf32>
      %99 = arith.subf %95, %98 : vector<8x1xf32>
      %100 = math.exp %99 : vector<8x1xf32>
      %101 = vector.broadcast %98 : vector<8x1xf32> to vector<8x8xf32>
      %102 = arith.subf %93, %101 : vector<8x8xf32>
      %103 = math.exp %102 : vector<8x8xf32>
      %c2_57 = arith.constant 2 : index
      %c0_58 = arith.constant 0 : index
      %c0_59 = arith.constant 0 : index
      %104 = vector.load %arg9[%c2_57, %c0_58, %c0_59] : memref<4x8x1xf32, #tpu.memory_space<vmem>>, vector<1x8x1xf32>
      %105 = vector.shape_cast %104 : vector<1x8x1xf32> to vector<8x1xf32>
      %106 = arith.mulf %100, %105 : vector<8x1xf32>
      %cst_60 = arith.constant dense<0.000000e+00> : vector<8xf32>
      %107 = vector.multi_reduction <add>, %103, %cst_60 [1] : vector<8x8xf32> to vector<8xf32>
      %108 = vector.shape_cast %107 : vector<8xf32> to vector<8x1xf32>
      %109 = arith.addf %106, %108 : vector<8x1xf32>
      %c2_61 = arith.constant 2 : index
      %c0_62 = arith.constant 0 : index
      %c0_63 = arith.constant 0 : index
      %110 = vector.load %arg9[%c2_61, %c0_62, %c0_63] : memref<4x8x1xf32, #tpu.memory_space<vmem>>, vector<1x8x1xf32>
      %111 = vector.shape_cast %110 : vector<1x8x1xf32> to vector<8x1xf32>
      %112 = vector.shape_cast %109 : vector<8x1xf32> to vector<1x8x1xf32>
      tpu.vector_store %arg9[%c2_61, %c0_62, %c0_63], %112 {strides = array<i32>} : memref<4x8x1xf32, #tpu.memory_space<vmem>>, vector<1x8x1xf32>,
      %c2_64 = arith.constant 2 : index
      %c0_65 = arith.constant 0 : index
      %c0_66 = arith.constant 0 : index
      %113 = vector.load %arg10[%c2_64, %c0_65, %c0_66] : memref<4x8x8xf32, #tpu.memory_space<vmem>>, vector<1x8x8xf32>
      %114 = vector.shape_cast %113 : vector<1x8x8xf32> to vector<8x8xf32>
      %115 = vector.broadcast %100 : vector<8x1xf32> to vector<8x8xf32>
      %116 = arith.mulf %115, %114 : vector<8x8xf32>
      %117 = arith.truncf %103 : vector<8x8xf32> to vector<8x8xbf16>
      %118 = vector.extract_strided_slice %18 {offsets = [0, 16], sizes = [8, 8], strides = [1, 1]} : vector<8x32xbf16> to vector<8x8xbf16>
      %cst_67 = arith.constant dense<0.000000e+00> : vector<8x8xf32>
      %119 = tpu.matmul %117, %118, %cst_67 {dimension_numbers = #tpu.dot_dimension_numbers<[1], [0], [0], [1], [0, 0, 1, 1], [], []>} : vector<8x8xbf16>, vector<8x8xbf16>, vector<8x8xf32> -> vector<8x8xf32>
      %120 = arith.addf %116, %119 : vector<8x8xf32>
      %c2_68 = arith.constant 2 : index
      %c0_69 = arith.constant 0 : index
      %c0_70 = arith.constant 0 : index
      %121 = vector.load %arg10[%c2_68, %c0_69, %c0_70] : memref<4x8x8xf32, #tpu.memory_space<vmem>>, vector<1x8x8xf32>
      %122 = vector.shape_cast %121 : vector<1x8x8xf32> to vector<8x8xf32>
      %123 = vector.shape_cast %120 : vector<8x8xf32> to vector<1x8x8xf32>
      tpu.vector_store %arg10[%c2_68, %c0_69, %c0_70], %123 {strides = array<i32>} : memref<4x8x8xf32, #tpu.memory_space<vmem>>, vector<1x8x8xf32>,
      %c2_71 = arith.constant 2 : index
      %c0_72 = arith.constant 0 : index
      %c0_73 = arith.constant 0 : index
      %124 = vector.load %arg8[%c2_71, %c0_72, %c0_73] : memref<4x8x1xf32, #tpu.memory_space<vmem>>, vector<1x8x1xf32>
      %125 = vector.shape_cast %124 : vector<1x8x1xf32> to vector<8x1xf32>
      %126 = vector.shape_cast %98 : vector<8x1xf32> to vector<1x8x1xf32>
      tpu.vector_store %arg8[%c2_71, %c0_72, %c0_73], %126 {strides = array<i32>} : memref<4x8x1xf32, #tpu.memory_space<vmem>>, vector<1x8x1xf32>,
      %127 = vector.extract_strided_slice %14 {offsets = [0, 24], sizes = [8, 8], strides = [1, 1]} : vector<8x32xbf16> to vector<8x8xbf16>
      %128 = vector.extract_strided_slice %16 {offsets = [0, 24], sizes = [8, 8], strides = [1, 1]} : vector<8x32xbf16> to vector<8x8xbf16>
      %cst_74 = arith.constant dense<0.000000e+00> : vector<8x8xf32>
      %129 = tpu.matmul %127, %128, %cst_74 {dimension_numbers = #tpu.dot_dimension_numbers<[1], [1], [0], [0], [0, 0, 1, 0], [], []>} : vector<8x8xbf16>, vector<8x8xbf16>, vector<8x8xf32> -> vector<8x8xf32>
      %c3 = arith.constant 3 : index
      %c0_75 = arith.constant 0 : index
      %c0_76 = arith.constant 0 : index
      %130 = vector.load %arg8[%c3, %c0_75, %c0_76] : memref<4x8x1xf32, #tpu.memory_space<vmem>>, vector<1x8x1xf32>
      %131 = vector.shape_cast %130 : vector<1x8x1xf32> to vector<8x1xf32>
      %cst_77 = arith.constant dense<0xFF800000> : vector<8xf32>
      %132 = vector.multi_reduction <maximumf>, %129, %cst_77 [1] : vector<8x8xf32> to vector<8xf32>
      %133 = vector.shape_cast %132 : vector<8xf32> to vector<8x1xf32>
      %134 = arith.maximumf %131, %133 : vector<8x1xf32>
      %135 = arith.subf %131, %134 : vector<8x1xf32>
      %136 = math.exp %135 : vector<8x1xf32>
      %137 = vector.broadcast %134 : vector<8x1xf32> to vector<8x8xf32>
      %138 = arith.subf %129, %137 : vector<8x8xf32>
      %139 = math.exp %138 : vector<8x8xf32>
      %c3_78 = arith.constant 3 : index
      %c0_79 = arith.constant 0 : index
      %c0_80 = arith.constant 0 : index
      %140 = vector.load %arg9[%c3_78, %c0_79, %c0_80] : memref<4x8x1xf32, #tpu.memory_space<vmem>>, vector<1x8x1xf32>
      %141 = vector.shape_cast %140 : vector<1x8x1xf32> to vector<8x1xf32>
      %142 = arith.mulf %136, %141 : vector<8x1xf32>
      %cst_81 = arith.constant dense<0.000000e+00> : vector<8xf32>
      %143 = vector.multi_reduction <add>, %139, %cst_81 [1] : vector<8x8xf32> to vector<8xf32>
      %144 = vector.shape_cast %143 : vector<8xf32> to vector<8x1xf32>
      %145 = arith.addf %142, %144 : vector<8x1xf32>
      %c3_82 = arith.constant 3 : index
      %c0_83 = arith.constant 0 : index
      %c0_84 = arith.constant 0 : index
      %146 = vector.load %arg9[%c3_82, %c0_83, %c0_84] : memref<4x8x1xf32, #tpu.memory_space<vmem>>, vector<1x8x1xf32>
      %147 = vector.shape_cast %146 : vector<1x8x1xf32> to vector<8x1xf32>
      %148 = vector.shape_cast %145 : vector<8x1xf32> to vector<1x8x1xf32>
      tpu.vector_store %arg9[%c3_82, %c0_83, %c0_84], %148 {strides = array<i32>} : memref<4x8x1xf32, #tpu.memory_space<vmem>>, vector<1x8x1xf32>,
      %c3_85 = arith.constant 3 : index
      %c0_86 = arith.constant 0 : index
      %c0_87 = arith.constant 0 : index
      %149 = vector.load %arg10[%c3_85, %c0_86, %c0_87] : memref<4x8x8xf32, #tpu.memory_space<vmem>>, vector<1x8x8xf32>
      %150 = vector.shape_cast %149 : vector<1x8x8xf32> to vector<8x8xf32>
      %151 = vector.broadcast %136 : vector<8x1xf32> to vector<8x8xf32>
      %152 = arith.mulf %151, %150 : vector<8x8xf32>
      %153 = arith.truncf %139 : vector<8x8xf32> to vector<8x8xbf16>
      %154 = vector.extract_strided_slice %18 {offsets = [0, 24], sizes = [8, 8], strides = [1, 1]} : vector<8x32xbf16> to vector<8x8xbf16>
      %cst_88 = arith.constant dense<0.000000e+00> : vector<8x8xf32>
      %155 = tpu.matmul %153, %154, %cst_88 {dimension_numbers = #tpu.dot_dimension_numbers<[1], [0], [0], [1], [0, 0, 1, 1], [], []>} : vector<8x8xbf16>, vector<8x8xbf16>, vector<8x8xf32> -> vector<8x8xf32>
      %156 = arith.addf %152, %155 : vector<8x8xf32>
      %c3_89 = arith.constant 3 : index
      %c0_90 = arith.constant 0 : index
      %c0_91 = arith.constant 0 : index
      %157 = vector.load %arg10[%c3_89, %c0_90, %c0_91] : memref<4x8x8xf32, #tpu.memory_space<vmem>>, vector<1x8x8xf32>
      %158 = vector.shape_cast %157 : vector<1x8x8xf32> to vector<8x8xf32>
      %159 = vector.shape_cast %156 : vector<8x8xf32> to vector<1x8x8xf32>
      tpu.vector_store %arg10[%c3_89, %c0_90, %c0_91], %159 {strides = array<i32>} : memref<4x8x8xf32, #tpu.memory_space<vmem>>, vector<1x8x8xf32>,
      %c3_92 = arith.constant 3 : index
      %c0_93 = arith.constant 0 : index
      %c0_94 = arith.constant 0 : index
      %160 = vector.load %arg8[%c3_92, %c0_93, %c0_94] : memref<4x8x1xf32, #tpu.memory_space<vmem>>, vector<1x8x1xf32>
      %161 = vector.shape_cast %160 : vector<1x8x1xf32> to vector<8x1xf32>
      %162 = vector.shape_cast %134 : vector<8x1xf32> to vector<1x8x1xf32>
      tpu.vector_store %arg8[%c3_92, %c0_93, %c0_94], %162 {strides = array<i32>} : memref<4x8x1xf32, #tpu.memory_space<vmem>>, vector<1x8x1xf32>,
    } else {
    }
    %10 = arith.cmpi eq, %3, %1 : i32
    %11 = arith.extui %10 : i1 to i32
    %c0_i32_2 = arith.constant 0 : i32
    %12 = arith.cmpi ne, %11, %c0_i32_2 : i32
    scf.if %12 {
      %c0 = arith.constant 0 : index
      %c0_3 = arith.constant 0 : index
      %c0_4 = arith.constant 0 : index
      %13 = vector.load %arg4[%c0, %c0_3, %c0_4] : memref<1x8x32xbf16, #tpu.memory_space<vmem>>, vector<1x8x32xbf16>
      %14 = vector.shape_cast %13 : vector<1x8x32xbf16> to vector<8x32xbf16>
      %c0_5 = arith.constant 0 : index
      %c0_6 = arith.constant 0 : index
      %c0_7 = arith.constant 0 : index
      %15 = vector.load %arg5[%c0_5, %c0_6, %c0_7] : memref<1x8x32xbf16, #tpu.memory_space<vmem>>, vector<1x8x32xbf16>
      %16 = vector.shape_cast %15 : vector<1x8x32xbf16> to vector<8x32xbf16>
      %c0_8 = arith.constant 0 : index
      %c0_9 = arith.constant 0 : index
      %c0_10 = arith.constant 0 : index
      %17 = vector.load %arg6[%c0_8, %c0_9, %c0_10] : memref<1x8x32xbf16, #tpu.memory_space<vmem>>, vector<1x8x32xbf16>
      %18 = vector.shape_cast %17 : vector<1x8x32xbf16> to vector<8x32xbf16>
      %19 = tpu.iota {dimensions = array<i32: 0>} : vector<8x8xi32>
      %20 = tpu.iota {dimensions = array<i32: 1>} : vector<8x8xi32>
      %21 = arith.cmpi sle, %20, %19 : vector<8x8xi32>
      %22 = vector.extract_strided_slice %14 {offsets = [0, 0], sizes = [8, 8], strides = [1, 1]} : vector<8x32xbf16> to vector<8x8xbf16>
      %23 = vector.extract_strided_slice %16 {offsets = [0, 0], sizes = [8, 8], strides = [1, 1]} : vector<8x32xbf16> to vector<8x8xbf16>
      %cst = arith.constant dense<0.000000e+00> : vector<8x8xf32>
      %24 = tpu.matmul %22, %23, %cst {dimension_numbers = #tpu.dot_dimension_numbers<[1], [1], [0], [0], [0, 0, 1, 0], [], []>} : vector<8x8xbf16>, vector<8x8xbf16>, vector<8x8xf32> -> vector<8x8xf32>
      %cst_11 = arith.constant -1.000000e+30 : f32
      %25 = vector.broadcast %cst_11 : f32 to vector<8x8xf32>
      %26 = arith.select %21, %24, %25 : vector<8x8xi1>, vector<8x8xf32>
      %c0_12 = arith.constant 0 : index
      %c0_13 = arith.constant 0 : index
      %c0_14 = arith.constant 0 : index
      %27 = vector.load %arg8[%c0_12, %c0_13, %c0_14] : memref<4x8x1xf32, #tpu.memory_space<vmem>>, vector<1x8x1xf32>
      %28 = vector.shape_cast %27 : vector<1x8x1xf32> to vector<8x1xf32>
      %cst_15 = arith.constant dense<0xFF800000> : vector<8xf32>
      %29 = vector.multi_reduction <maximumf>, %26, %cst_15 [1] : vector<8x8xf32> to vector<8xf32>
      %30 = vector.shape_cast %29 : vector<8xf32> to vector<8x1xf32>
      %31 = arith.maximumf %28, %30 : vector<8x1xf32>
      %32 = arith.subf %28, %31 : vector<8x1xf32>
      %33 = math.exp %32 : vector<8x1xf32>
      %34 = vector.broadcast %31 : vector<8x1xf32> to vector<8x8xf32>
      %35 = arith.subf %26, %34 : vector<8x8xf32>
      %36 = math.exp %35 : vector<8x8xf32>
      %c0_16 = arith.constant 0 : index
      %c0_17 = arith.constant 0 : index
      %c0_18 = arith.constant 0 : index
      %37 = vector.load %arg9[%c0_16, %c0_17, %c0_18] : memref<4x8x1xf32, #tpu.memory_space<vmem>>, vector<1x8x1xf32>
      %38 = vector.shape_cast %37 : vector<1x8x1xf32> to vector<8x1xf32>
      %39 = arith.mulf %33, %38 : vector<8x1xf32>
      %cst_19 = arith.constant dense<0.000000e+00> : vector<8xf32>
      %40 = vector.multi_reduction <add>, %36, %cst_19 [1] : vector<8x8xf32> to vector<8xf32>
      %41 = vector.shape_cast %40 : vector<8xf32> to vector<8x1xf32>
      %42 = arith.addf %39, %41 : vector<8x1xf32>
      %c0_20 = arith.constant 0 : index
      %c0_21 = arith.constant 0 : index
      %c0_22 = arith.constant 0 : index
      %43 = vector.load %arg9[%c0_20, %c0_21, %c0_22] : memref<4x8x1xf32, #tpu.memory_space<vmem>>, vector<1x8x1xf32>
      %44 = vector.shape_cast %43 : vector<1x8x1xf32> to vector<8x1xf32>
      %45 = vector.shape_cast %42 : vector<8x1xf32> to vector<1x8x1xf32>
      tpu.vector_store %arg9[%c0_20, %c0_21, %c0_22], %45 {strides = array<i32>} : memref<4x8x1xf32, #tpu.memory_space<vmem>>, vector<1x8x1xf32>,
      %c0_23 = arith.constant 0 : index
      %c0_24 = arith.constant 0 : index
      %c0_25 = arith.constant 0 : index
      %46 = vector.load %arg10[%c0_23, %c0_24, %c0_25] : memref<4x8x8xf32, #tpu.memory_space<vmem>>, vector<1x8x8xf32>
      %47 = vector.shape_cast %46 : vector<1x8x8xf32> to vector<8x8xf32>
      %48 = vector.broadcast %33 : vector<8x1xf32> to vector<8x8xf32>
      %49 = arith.mulf %48, %47 : vector<8x8xf32>
      %50 = arith.truncf %36 : vector<8x8xf32> to vector<8x8xbf16>
      %51 = vector.extract_strided_slice %18 {offsets = [0, 0], sizes = [8, 8], strides = [1, 1]} : vector<8x32xbf16> to vector<8x8xbf16>
      %cst_26 = arith.constant dense<0.000000e+00> : vector<8x8xf32>
      %52 = tpu.matmul %50, %51, %cst_26 {dimension_numbers = #tpu.dot_dimension_numbers<[1], [0], [0], [1], [0, 0, 1, 1], [], []>} : vector<8x8xbf16>, vector<8x8xbf16>, vector<8x8xf32> -> vector<8x8xf32>
      %53 = arith.addf %49, %52 : vector<8x8xf32>
      %c0_27 = arith.constant 0 : index
      %c0_28 = arith.constant 0 : index
      %c0_29 = arith.constant 0 : index
      %54 = vector.load %arg10[%c0_27, %c0_28, %c0_29] : memref<4x8x8xf32, #tpu.memory_space<vmem>>, vector<1x8x8xf32>
      %55 = vector.shape_cast %54 : vector<1x8x8xf32> to vector<8x8xf32>
      %56 = vector.shape_cast %53 : vector<8x8xf32> to vector<1x8x8xf32>
      tpu.vector_store %arg10[%c0_27, %c0_28, %c0_29], %56 {strides = array<i32>} : memref<4x8x8xf32, #tpu.memory_space<vmem>>, vector<1x8x8xf32>,
      %c0_30 = arith.constant 0 : index
      %c0_31 = arith.constant 0 : index
      %c0_32 = arith.constant 0 : index
      %57 = vector.load %arg8[%c0_30, %c0_31, %c0_32] : memref<4x8x1xf32, #tpu.memory_space<vmem>>, vector<1x8x1xf32>
      %58 = vector.shape_cast %57 : vector<1x8x1xf32> to vector<8x1xf32>
      %59 = vector.shape_cast %31 : vector<8x1xf32> to vector<1x8x1xf32>
      tpu.vector_store %arg8[%c0_30, %c0_31, %c0_32], %59 {strides = array<i32>} : memref<4x8x1xf32, #tpu.memory_space<vmem>>, vector<1x8x1xf32>,
      %60 = vector.extract_strided_slice %14 {offsets = [0, 8], sizes = [8, 8], strides = [1, 1]} : vector<8x32xbf16> to vector<8x8xbf16>
      %61 = vector.extract_strided_slice %16 {offsets = [0, 8], sizes = [8, 8], strides = [1, 1]} : vector<8x32xbf16> to vector<8x8xbf16>
      %cst_33 = arith.constant dense<0.000000e+00> : vector<8x8xf32>
      %62 = tpu.matmul %60, %61, %cst_33 {dimension_numbers = #tpu.dot_dimension_numbers<[1], [1], [0], [0], [0, 0, 1, 0], [], []>} : vector<8x8xbf16>, vector<8x8xbf16>, vector<8x8xf32> -> vector<8x8xf32>
      %cst_34 = arith.constant -1.000000e+30 : f32
      %63 = vector.broadcast %cst_34 : f32 to vector<8x8xf32>
      %64 = arith.select %21, %62, %63 : vector<8x8xi1>, vector<8x8xf32>
      %c1 = arith.constant 1 : index
      %c0_35 = arith.constant 0 : index
      %c0_36 = arith.constant 0 : index
      %65 = vector.load %arg8[%c1, %c0_35, %c0_36] : memref<4x8x1xf32, #tpu.memory_space<vmem>>, vector<1x8x1xf32>
      %66 = vector.shape_cast %65 : vector<1x8x1xf32> to vector<8x1xf32>
      %cst_37 = arith.constant dense<0xFF800000> : vector<8xf32>
      %67 = vector.multi_reduction <maximumf>, %64, %cst_37 [1] : vector<8x8xf32> to vector<8xf32>
      %68 = vector.shape_cast %67 : vector<8xf32> to vector<8x1xf32>
      %69 = arith.maximumf %66, %68 : vector<8x1xf32>
      %70 = arith.subf %66, %69 : vector<8x1xf32>
      %71 = math.exp %70 : vector<8x1xf32>
      %72 = vector.broadcast %69 : vector<8x1xf32> to vector<8x8xf32>
      %73 = arith.subf %64, %72 : vector<8x8xf32>
      %74 = math.exp %73 : vector<8x8xf32>
      %c1_38 = arith.constant 1 : index
      %c0_39 = arith.constant 0 : index
      %c0_40 = arith.constant 0 : index
      %75 = vector.load %arg9[%c1_38, %c0_39, %c0_40] : memref<4x8x1xf32, #tpu.memory_space<vmem>>, vector<1x8x1xf32>
      %76 = vector.shape_cast %75 : vector<1x8x1xf32> to vector<8x1xf32>
      %77 = arith.mulf %71, %76 : vector<8x1xf32>
      %cst_41 = arith.constant dense<0.000000e+00> : vector<8xf32>
      %78 = vector.multi_reduction <add>, %74, %cst_41 [1] : vector<8x8xf32> to vector<8xf32>
      %79 = vector.shape_cast %78 : vector<8xf32> to vector<8x1xf32>
      %80 = arith.addf %77, %79 : vector<8x1xf32>
      %c1_42 = arith.constant 1 : index
      %c0_43 = arith.constant 0 : index
      %c0_44 = arith.constant 0 : index
      %81 = vector.load %arg9[%c1_42, %c0_43, %c0_44] : memref<4x8x1xf32, #tpu.memory_space<vmem>>, vector<1x8x1xf32>
      %82 = vector.shape_cast %81 : vector<1x8x1xf32> to vector<8x1xf32>
      %83 = vector.shape_cast %80 : vector<8x1xf32> to vector<1x8x1xf32>
      tpu.vector_store %arg9[%c1_42, %c0_43, %c0_44], %83 {strides = array<i32>} : memref<4x8x1xf32, #tpu.memory_space<vmem>>, vector<1x8x1xf32>,
      %c1_45 = arith.constant 1 : index
      %c0_46 = arith.constant 0 : index
      %c0_47 = arith.constant 0 : index
      %84 = vector.load %arg10[%c1_45, %c0_46, %c0_47] : memref<4x8x8xf32, #tpu.memory_space<vmem>>, vector<1x8x8xf32>
      %85 = vector.shape_cast %84 : vector<1x8x8xf32> to vector<8x8xf32>
      %86 = vector.broadcast %71 : vector<8x1xf32> to vector<8x8xf32>
      %87 = arith.mulf %86, %85 : vector<8x8xf32>
      %88 = arith.truncf %74 : vector<8x8xf32> to vector<8x8xbf16>
      %89 = vector.extract_strided_slice %18 {offsets = [0, 8], sizes = [8, 8], strides = [1, 1]} : vector<8x32xbf16> to vector<8x8xbf16>
      %cst_48 = arith.constant dense<0.000000e+00> : vector<8x8xf32>
      %90 = tpu.matmul %88, %89, %cst_48 {dimension_numbers = #tpu.dot_dimension_numbers<[1], [0], [0], [1], [0, 0, 1, 1], [], []>} : vector<8x8xbf16>, vector<8x8xbf16>, vector<8x8xf32> -> vector<8x8xf32>
      %91 = arith.addf %87, %90 : vector<8x8xf32>
      %c1_49 = arith.constant 1 : index
      %c0_50 = arith.constant 0 : index
      %c0_51 = arith.constant 0 : index
      %92 = vector.load %arg10[%c1_49, %c0_50, %c0_51] : memref<4x8x8xf32, #tpu.memory_space<vmem>>, vector<1x8x8xf32>
      %93 = vector.shape_cast %92 : vector<1x8x8xf32> to vector<8x8xf32>
      %94 = vector.shape_cast %91 : vector<8x8xf32> to vector<1x8x8xf32>
      tpu.vector_store %arg10[%c1_49, %c0_50, %c0_51], %94 {strides = array<i32>} : memref<4x8x8xf32, #tpu.memory_space<vmem>>, vector<1x8x8xf32>,
      %c1_52 = arith.constant 1 : index
      %c0_53 = arith.constant 0 : index
      %c0_54 = arith.constant 0 : index
      %95 = vector.load %arg8[%c1_52, %c0_53, %c0_54] : memref<4x8x1xf32, #tpu.memory_space<vmem>>, vector<1x8x1xf32>
      %96 = vector.shape_cast %95 : vector<1x8x1xf32> to vector<8x1xf32>
      %97 = vector.shape_cast %69 : vector<8x1xf32> to vector<1x8x1xf32>
      tpu.vector_store %arg8[%c1_52, %c0_53, %c0_54], %97 {strides = array<i32>} : memref<4x8x1xf32, #tpu.memory_space<vmem>>, vector<1x8x1xf32>,
      %98 = vector.extract_strided_slice %14 {offsets = [0, 16], sizes = [8, 8], strides = [1, 1]} : vector<8x32xbf16> to vector<8x8xbf16>
      %99 = vector.extract_strided_slice %16 {offsets = [0, 16], sizes = [8, 8], strides = [1, 1]} : vector<8x32xbf16> to vector<8x8xbf16>
      %cst_55 = arith.constant dense<0.000000e+00> : vector<8x8xf32>
      %100 = tpu.matmul %98, %99, %cst_55 {dimension_numbers = #tpu.dot_dimension_numbers<[1], [1], [0], [0], [0, 0, 1, 0], [], []>} : vector<8x8xbf16>, vector<8x8xbf16>, vector<8x8xf32> -> vector<8x8xf32>
      %cst_56 = arith.constant -1.000000e+30 : f32
      %101 = vector.broadcast %cst_56 : f32 to vector<8x8xf32>
      %102 = arith.select %21, %100, %101 : vector<8x8xi1>, vector<8x8xf32>
      %c2 = arith.constant 2 : index
      %c0_57 = arith.constant 0 : index
      %c0_58 = arith.constant 0 : index
      %103 = vector.load %arg8[%c2, %c0_57, %c0_58] : memref<4x8x1xf32, #tpu.memory_space<vmem>>, vector<1x8x1xf32>
      %104 = vector.shape_cast %103 : vector<1x8x1xf32> to vector<8x1xf32>
      %cst_59 = arith.constant dense<0xFF800000> : vector<8xf32>
      %105 = vector.multi_reduction <maximumf>, %102, %cst_59 [1] : vector<8x8xf32> to vector<8xf32>
      %106 = vector.shape_cast %105 : vector<8xf32> to vector<8x1xf32>
      %107 = arith.maximumf %104, %106 : vector<8x1xf32>
      %108 = arith.subf %104, %107 : vector<8x1xf32>
      %109 = math.exp %108 : vector<8x1xf32>
      %110 = vector.broadcast %107 : vector<8x1xf32> to vector<8x8xf32>
      %111 = arith.subf %102, %110 : vector<8x8xf32>
      %112 = math.exp %111 : vector<8x8xf32>
      %c2_60 = arith.constant 2 : index
      %c0_61 = arith.constant 0 : index
      %c0_62 = arith.constant 0 : index
      %113 = vector.load %arg9[%c2_60, %c0_61, %c0_62] : memref<4x8x1xf32, #tpu.memory_space<vmem>>, vector<1x8x1xf32>
      %114 = vector.shape_cast %113 : vector<1x8x1xf32> to vector<8x1xf32>
      %115 = arith.mulf %109, %114 : vector<8x1xf32>
      %cst_63 = arith.constant dense<0.000000e+00> : vector<8xf32>
      %116 = vector.multi_reduction <add>, %112, %cst_63 [1] : vector<8x8xf32> to vector<8xf32>
      %117 = vector.shape_cast %116 : vector<8xf32> to vector<8x1xf32>
      %118 = arith.addf %115, %117 : vector<8x1xf32>
      %c2_64 = arith.constant 2 : index
      %c0_65 = arith.constant 0 : index
      %c0_66 = arith.constant 0 : index
      %119 = vector.load %arg9[%c2_64, %c0_65, %c0_66] : memref<4x8x1xf32, #tpu.memory_space<vmem>>, vector<1x8x1xf32>
      %120 = vector.shape_cast %119 : vector<1x8x1xf32> to vector<8x1xf32>
      %121 = vector.shape_cast %118 : vector<8x1xf32> to vector<1x8x1xf32>
      tpu.vector_store %arg9[%c2_64, %c0_65, %c0_66], %121 {strides = array<i32>} : memref<4x8x1xf32, #tpu.memory_space<vmem>>, vector<1x8x1xf32>,
      %c2_67 = arith.constant 2 : index
      %c0_68 = arith.constant 0 : index
      %c0_69 = arith.constant 0 : index
      %122 = vector.load %arg10[%c2_67, %c0_68, %c0_69] : memref<4x8x8xf32, #tpu.memory_space<vmem>>, vector<1x8x8xf32>
      %123 = vector.shape_cast %122 : vector<1x8x8xf32> to vector<8x8xf32>
      %124 = vector.broadcast %109 : vector<8x1xf32> to vector<8x8xf32>
      %125 = arith.mulf %124, %123 : vector<8x8xf32>
      %126 = arith.truncf %112 : vector<8x8xf32> to vector<8x8xbf16>
      %127 = vector.extract_strided_slice %18 {offsets = [0, 16], sizes = [8, 8], strides = [1, 1]} : vector<8x32xbf16> to vector<8x8xbf16>
      %cst_70 = arith.constant dense<0.000000e+00> : vector<8x8xf32>
      %128 = tpu.matmul %126, %127, %cst_70 {dimension_numbers = #tpu.dot_dimension_numbers<[1], [0], [0], [1], [0, 0, 1, 1], [], []>} : vector<8x8xbf16>, vector<8x8xbf16>, vector<8x8xf32> -> vector<8x8xf32>
      %129 = arith.addf %125, %128 : vector<8x8xf32>
      %c2_71 = arith.constant 2 : index
      %c0_72 = arith.constant 0 : index
      %c0_73 = arith.constant 0 : index
      %130 = vector.load %arg10[%c2_71, %c0_72, %c0_73] : memref<4x8x8xf32, #tpu.memory_space<vmem>>, vector<1x8x8xf32>
      %131 = vector.shape_cast %130 : vector<1x8x8xf32> to vector<8x8xf32>
      %132 = vector.shape_cast %129 : vector<8x8xf32> to vector<1x8x8xf32>
      tpu.vector_store %arg10[%c2_71, %c0_72, %c0_73], %132 {strides = array<i32>} : memref<4x8x8xf32, #tpu.memory_space<vmem>>, vector<1x8x8xf32>,
      %c2_74 = arith.constant 2 : index
      %c0_75 = arith.constant 0 : index
      %c0_76 = arith.constant 0 : index
      %133 = vector.load %arg8[%c2_74, %c0_75, %c0_76] : memref<4x8x1xf32, #tpu.memory_space<vmem>>, vector<1x8x1xf32>
      %134 = vector.shape_cast %133 : vector<1x8x1xf32> to vector<8x1xf32>
      %135 = vector.shape_cast %107 : vector<8x1xf32> to vector<1x8x1xf32>
      tpu.vector_store %arg8[%c2_74, %c0_75, %c0_76], %135 {strides = array<i32>} : memref<4x8x1xf32, #tpu.memory_space<vmem>>, vector<1x8x1xf32>,
      %136 = vector.extract_strided_slice %14 {offsets = [0, 24], sizes = [8, 8], strides = [1, 1]} : vector<8x32xbf16> to vector<8x8xbf16>
      %137 = vector.extract_strided_slice %16 {offsets = [0, 24], sizes = [8, 8], strides = [1, 1]} : vector<8x32xbf16> to vector<8x8xbf16>
      %cst_77 = arith.constant dense<0.000000e+00> : vector<8x8xf32>
      %138 = tpu.matmul %136, %137, %cst_77 {dimension_numbers = #tpu.dot_dimension_numbers<[1], [1], [0], [0], [0, 0, 1, 0], [], []>} : vector<8x8xbf16>, vector<8x8xbf16>, vector<8x8xf32> -> vector<8x8xf32>
      %cst_78 = arith.constant -1.000000e+30 : f32
      %139 = vector.broadcast %cst_78 : f32 to vector<8x8xf32>
      %140 = arith.select %21, %138, %139 : vector<8x8xi1>, vector<8x8xf32>
      %c3 = arith.constant 3 : index
      %c0_79 = arith.constant 0 : index
      %c0_80 = arith.constant 0 : index
      %141 = vector.load %arg8[%c3, %c0_79, %c0_80] : memref<4x8x1xf32, #tpu.memory_space<vmem>>, vector<1x8x1xf32>
      %142 = vector.shape_cast %141 : vector<1x8x1xf32> to vector<8x1xf32>
      %cst_81 = arith.constant dense<0xFF800000> : vector<8xf32>
      %143 = vector.multi_reduction <maximumf>, %140, %cst_81 [1] : vector<8x8xf32> to vector<8xf32>
      %144 = vector.shape_cast %143 : vector<8xf32> to vector<8x1xf32>
      %145 = arith.maximumf %142, %144 : vector<8x1xf32>
      %146 = arith.subf %142, %145 : vector<8x1xf32>
      %147 = math.exp %146 : vector<8x1xf32>
      %148 = vector.broadcast %145 : vector<8x1xf32> to vector<8x8xf32>
      %149 = arith.subf %140, %148 : vector<8x8xf32>
      %150 = math.exp %149 : vector<8x8xf32>
      %c3_82 = arith.constant 3 : index
      %c0_83 = arith.constant 0 : index
      %c0_84 = arith.constant 0 : index
      %151 = vector.load %arg9[%c3_82, %c0_83, %c0_84] : memref<4x8x1xf32, #tpu.memory_space<vmem>>, vector<1x8x1xf32>
      %152 = vector.shape_cast %151 : vector<1x8x1xf32> to vector<8x1xf32>
      %153 = arith.mulf %147, %152 : vector<8x1xf32>
      %cst_85 = arith.constant dense<0.000000e+00> : vector<8xf32>
      %154 = vector.multi_reduction <add>, %150, %cst_85 [1] : vector<8x8xf32> to vector<8xf32>
      %155 = vector.shape_cast %154 : vector<8xf32> to vector<8x1xf32>
      %156 = arith.addf %153, %155 : vector<8x1xf32>
      %c3_86 = arith.constant 3 : index
      %c0_87 = arith.constant 0 : index
      %c0_88 = arith.constant 0 : index
      %157 = vector.load %arg9[%c3_86, %c0_87, %c0_88] : memref<4x8x1xf32, #tpu.memory_space<vmem>>, vector<1x8x1xf32>
      %158 = vector.shape_cast %157 : vector<1x8x1xf32> to vector<8x1xf32>
      %159 = vector.shape_cast %156 : vector<8x1xf32> to vector<1x8x1xf32>
      tpu.vector_store %arg9[%c3_86, %c0_87, %c0_88], %159 {strides = array<i32>} : memref<4x8x1xf32, #tpu.memory_space<vmem>>, vector<1x8x1xf32>,
      %c3_89 = arith.constant 3 : index
      %c0_90 = arith.constant 0 : index
      %c0_91 = arith.constant 0 : index
      %160 = vector.load %arg10[%c3_89, %c0_90, %c0_91] : memref<4x8x8xf32, #tpu.memory_space<vmem>>, vector<1x8x8xf32>
      %161 = vector.shape_cast %160 : vector<1x8x8xf32> to vector<8x8xf32>
      %162 = vector.broadcast %147 : vector<8x1xf32> to vector<8x8xf32>
      %163 = arith.mulf %162, %161 : vector<8x8xf32>
      %164 = arith.truncf %150 : vector<8x8xf32> to vector<8x8xbf16>
      %165 = vector.extract_strided_slice %18 {offsets = [0, 24], sizes = [8, 8], strides = [1, 1]} : vector<8x32xbf16> to vector<8x8xbf16>
      %cst_92 = arith.constant dense<0.000000e+00> : vector<8x8xf32>
      %166 = tpu.matmul %164, %165, %cst_92 {dimension_numbers = #tpu.dot_dimension_numbers<[1], [0], [0], [1], [0, 0, 1, 1], [], []>} : vector<8x8xbf16>, vector<8x8xbf16>, vector<8x8xf32> -> vector<8x8xf32>
      %167 = arith.addf %163, %166 : vector<8x8xf32>
      %c3_93 = arith.constant 3 : index
      %c0_94 = arith.constant 0 : index
      %c0_95 = arith.constant 0 : index
      %168 = vector.load %arg10[%c3_93, %c0_94, %c0_95] : memref<4x8x8xf32, #tpu.memory_space<vmem>>, vector<1x8x8xf32>
      %169 = vector.shape_cast %168 : vector<1x8x8xf32> to vector<8x8xf32>
      %170 = vector.shape_cast %167 : vector<8x8xf32> to vector<1x8x8xf32>
      tpu.vector_store %arg10[%c3_93, %c0_94, %c0_95], %170 {strides = array<i32>} : memref<4x8x8xf32, #tpu.memory_space<vmem>>, vector<1x8x8xf32>,
      %c3_96 = arith.constant 3 : index
      %c0_97 = arith.constant 0 : index
      %c0_98 = arith.constant 0 : index
      %171 = vector.load %arg8[%c3_96, %c0_97, %c0_98] : memref<4x8x1xf32, #tpu.memory_space<vmem>>, vector<1x8x1xf32>
      %172 = vector.shape_cast %171 : vector<1x8x1xf32> to vector<8x1xf32>
      %173 = vector.shape_cast %145 : vector<8x1xf32> to vector<1x8x1xf32>
      tpu.vector_store %arg8[%c3_96, %c0_97, %c0_98], %173 {strides = array<i32>} : memref<4x8x1xf32, #tpu.memory_space<vmem>>, vector<1x8x1xf32>,
      %c0_99 = arith.constant 0 : index
      %c0_100 = arith.constant 0 : index
      %c0_101 = arith.constant 0 : index
      %174 = vector.load %arg9[%c0_99, %c0_100, %c0_101] : memref<4x8x1xf32, #tpu.memory_space<vmem>>, vector<1x8x1xf32>
      %175 = vector.shape_cast %174 : vector<1x8x1xf32> to vector<8x1xf32>
      %176 = tpu.reciprocal %175 {approx = true} : vector<8x1xf32> -> vector<8x1xf32>
      %c0_102 = arith.constant 0 : index
      %c0_103 = arith.constant 0 : index
      %c0_104 = arith.constant 0 : index
      %177 = vector.load %arg10[%c0_102, %c0_103, %c0_104] : memref<4x8x8xf32, #tpu.memory_space<vmem>>, vector<1x8x8xf32>
      %178 = vector.shape_cast %177 : vector<1x8x8xf32> to vector<8x8xf32>
      %179 = vector.broadcast %176 : vector<8x1xf32> to vector<8x8xf32>
      %180 = arith.mulf %178, %179 : vector<8x8xf32>
      %c1_105 = arith.constant 1 : index
      %c0_106 = arith.constant 0 : index
      %c0_107 = arith.constant 0 : index
      %181 = vector.load %arg9[%c1_105, %c0_106, %c0_107] : memref<4x8x1xf32, #tpu.memory_space<vmem>>, vector<1x8x1xf32>
      %182 = vector.shape_cast %181 : vector<1x8x1xf32> to vector<8x1xf32>
      %183 = tpu.reciprocal %182 {approx = true} : vector<8x1xf32> -> vector<8x1xf32>
      %c1_108 = arith.constant 1 : index
      %c0_109 = arith.constant 0 : index
      %c0_110 = arith.constant 0 : index
      %184 = vector.load %arg10[%c1_108, %c0_109, %c0_110] : memref<4x8x8xf32, #tpu.memory_space<vmem>>, vector<1x8x8xf32>
      %185 = vector.shape_cast %184 : vector<1x8x8xf32> to vector<8x8xf32>
      %186 = vector.broadcast %183 : vector<8x1xf32> to vector<8x8xf32>
      %187 = arith.mulf %185, %186 : vector<8x8xf32>
      %c2_111 = arith.constant 2 : index
      %c0_112 = arith.constant 0 : index
      %c0_113 = arith.constant 0 : index
      %188 = vector.load %arg9[%c2_111, %c0_112, %c0_113] : memref<4x8x1xf32, #tpu.memory_space<vmem>>, vector<1x8x1xf32>
      %189 = vector.shape_cast %188 : vector<1x8x1xf32> to vector<8x1xf32>
      %190 = tpu.reciprocal %189 {approx = true} : vector<8x1xf32> -> vector<8x1xf32>
      %c2_114 = arith.constant 2 : index
      %c0_115 = arith.constant 0 : index
      %c0_116 = arith.constant 0 : index
      %191 = vector.load %arg10[%c2_114, %c0_115, %c0_116] : memref<4x8x8xf32, #tpu.memory_space<vmem>>, vector<1x8x8xf32>
      %192 = vector.shape_cast %191 : vector<1x8x8xf32> to vector<8x8xf32>
      %193 = vector.broadcast %190 : vector<8x1xf32> to vector<8x8xf32>
      %194 = arith.mulf %192, %193 : vector<8x8xf32>
      %c3_117 = arith.constant 3 : index
      %c0_118 = arith.constant 0 : index
      %c0_119 = arith.constant 0 : index
      %195 = vector.load %arg9[%c3_117, %c0_118, %c0_119] : memref<4x8x1xf32, #tpu.memory_space<vmem>>, vector<1x8x1xf32>
      %196 = vector.shape_cast %195 : vector<1x8x1xf32> to vector<8x1xf32>
      %197 = tpu.reciprocal %196 {approx = true} : vector<8x1xf32> -> vector<8x1xf32>
      %c3_120 = arith.constant 3 : index
      %c0_121 = arith.constant 0 : index
      %c0_122 = arith.constant 0 : index
      %198 = vector.load %arg10[%c3_120, %c0_121, %c0_122] : memref<4x8x8xf32, #tpu.memory_space<vmem>>, vector<1x8x8xf32>
      %199 = vector.shape_cast %198 : vector<1x8x8xf32> to vector<8x8xf32>
      %200 = vector.broadcast %197 : vector<8x1xf32> to vector<8x8xf32>
      %201 = arith.mulf %199, %200 : vector<8x8xf32>
      %202 = tpu.concatenate %180, %187, %194, %201 in 1 : vector<8x8xf32>, vector<8x8xf32>, vector<8x8xf32>, vector<8x8xf32> -> vector<8x32xf32>
      %203 = arith.truncf %202 : vector<8x32xf32> to vector<8x32xbf16>
      %c0_123 = arith.constant 0 : index
      %c0_124 = arith.constant 0 : index
      %c0_125 = arith.constant 0 : index
      %204 = vector.load %arg7[%c0_123, %c0_124, %c0_125] : memref<1x8x32xbf16, #tpu.memory_space<vmem>>, vector<1x8x32xbf16>
      %205 = vector.shape_cast %204 : vector<1x8x32xbf16> to vector<8x32xbf16>
      %206 = vector.shape_cast %203 : vector<8x32xbf16> to vector<1x8x32xbf16>
      tpu.vector_store %arg7[%c0_123, %c0_124, %c0_125], %206 {strides = array<i32>} : memref<1x8x32xbf16, #tpu.memory_space<vmem>>, vector<1x8x32xbf16>,
    } else {
    }
    return
  }
  func.func @transform_0(%arg0: i32, %arg1: i32, %arg2: memref<1xi32, #tpu.memory_space<smem>>, %arg3: memref<1xi32, #tpu.memory_space<smem>>) -> (i32, i32, i32) {
    %0 = arith.index_cast %arg1 : i32 to index
    %1 = memref.load %arg2[%0] : memref<1xi32, #tpu.memory_space<smem>>
    %c0_i32 = arith.constant 0 : i32
    %c0_i32_0 = arith.constant 0 : i32
    return %arg0, %1, %c0_i32 : i32, i32, i32
  }
  func.func @transform_1(%arg0: i32, %arg1: i32, %arg2: memref<1xi32, #tpu.memory_space<smem>>, %arg3: memref<1xi32, #tpu.memory_space<smem>>) -> (i32, i32, i32) {
    %0 = arith.index_cast %arg1 : i32 to index
    %1 = memref.load %arg3[%0] : memref<1xi32, #tpu.memory_space<smem>>
    %c0_i32 = arith.constant 0 : i32
    %c0_i32_0 = arith.constant 0 : i32
    return %arg0, %1, %c0_i32 : i32, i32, i32
  }
  func.func @transform_2(%arg0: i32, %arg1: i32, %arg2: memref<1xi32, #tpu.memory_space<smem>>, %arg3: memref<1xi32, #tpu.memory_space<smem>>) -> (i32, i32, i32) {
    %0 = arith.index_cast %arg1 : i32 to index
    %1 = memref.load %arg3[%0] : memref<1xi32, #tpu.memory_space<smem>>
    %c0_i32 = arith.constant 0 : i32
    %c0_i32_0 = arith.constant 0 : i32
    return %arg0, %1, %c0_i32 : i32, i32, i32
  }
  func.func @transform_3(%arg0: i32, %arg1: i32, %arg2: memref<1xi32, #tpu.memory_space<smem>>, %arg3: memref<1xi32, #tpu.memory_space<smem>>) -> (i32, i32, i32) {
    %0 = arith.index_cast %arg1 : i32 to index
    %1 = memref.load %arg2[%0] : memref<1xi32, #tpu.memory_space<smem>>
    %c0_i32 = arith.constant 0 : i32
    %c0_i32_0 = arith.constant 0 : i32
    return %arg0, %1, %c0_i32 : i32, i32, i32
  }
}

</mosaic_0001>

<llo_original>
// kernel: causal_self_attention.5
$region0: #{causal_self_attention.5}
  #allocation0 [shape = 'u32[]', space=smem, size = 0x4, offset = 0x4, fixed_abs, tag = 'smem constant byte address 0x4 - core index']
  #allocation1 [shape = 'u32[144,128]{1,0:T(1,128)}', space=vmem, size = 0x12000, scoped, tag = 'internal scratch']
  %s0 = inlined_call_operand.vmem [shape: bf16[2,8,32], index: 0, kind: input, shape index: {}]
  %s1 = inlined_call_operand.vmem [shape: bf16[32,32], index: 1, kind: input, shape index: {}]
  %s2 = inlined_call_operand.vmem [shape: f32[1,32], index: 2, kind: input, shape index: {}]
  %s3 = inlined_call_operand.hbm [shape: f32[2,8,32], index: 3, kind: output, shape index: {}]
  %s4 = sld [smem:[#allocation0]]
  $region45: #{causal_self_attention.5} parent=0
    _
  %s6 = ssub.s32 1, %s4
  %s7 = scalar_select 0, %s6, %s4
  $region1: #{causal_self_attention.5} parent=0
    #allocation2 [shape = 'u8[8192]{0}', space=vmem, size = 0x2000, scoped, tag = 'output window, operand 0']
    #allocation3 [shape = 's32[2]{0}', space=sflag, size = 0x8, scoped, tag = 'scoped memory for causal_self_attention.5']
    %8 = vsyncpa [#allocation3], 0
    %s9 = scalar_lea.sflag [#allocation3], 1
    %10 = vsyncpa %s9, 0
    loop: start=0, step=1, limit=4
    $region2: #{causal_self_attention.5} parent=1 // loop_pre_header
      _
    $region3: #{causal_self_attention.5} parent=1 // loop_header
      %s12 = sphi 0, %s16
      %p13 = scmp.ge.s32.totalorder %s12, 4
      %s19 = sphi 0, %s38
      %s20 = sphi 0, %s34
      %s21 = sphi 0, %s30
      %s22 = sphi 0, %s19
      %s23 = sphi 0, %s20
      %s24 = sphi 0, %s21
      %s25 = sphi 0, %s22
      %s26 = sphi 0, %s23
      %s27 = sphi 0, %s24
      %s43 = sphi 0, %s45
      %s46 = sphi 0, %s43
      %s47 = sphi 0, %s46
      %s63 = sphi 0, %s47
      %s69 = sphi 0, %s71
      %s72 = sphi 0, %s69
      %s73 = sphi 0, %s72
      %s89 = sphi 0, %s73
      %s95 = sphi 0, %s97
      %s98 = sphi 0, %s95
      %s99 = sphi 0, %s98
      %s115 = sphi 0, %s99
      %s125 = sphi 0, %s127
      %s128 = sphi 0, %s125
      %s129 = sphi 0, %s128
      %s145 = sphi 0, %s129
    $region4: #{causal_self_attention.5} parent=1 // loop_header_branch
      %15 = sbr.rel (%p13) target = $region8
    $region5: #{causal_self_attention.5} parent=1 // loop_body
      %s17 = ssub.s32 %s12, 1
      %s18 = ssub.s32 %s12, 2
      %s28 = sadd.s32 1, %s21
      %p29 = scmp.ge.s32.totalorder %s28, 1
      %s30 = scalar_select %p29, 0, %s28
      %s31 = sadd.s32 1, %s20
      %s32 = scalar_select %p29, %s31, %s20
      %p33 = scmp.ge.s32.totalorder %s32, 2
      %s34 = scalar_select %p33, 0, %s32
      %s35 = sadd.s32 1, %s19
      %s36 = scalar_select %p33, %s35, %s19
      %p37 = scmp.ge.s32.totalorder %s36, 1
      %s38 = scalar_select %p37, 0, %s36
      %s39 = ssub.s32 %s20, %s34
      %s40 = ssub.s32 %s21, %s30
      %s41 = sor.u32 %s39, %s40
      %p42 = scmp.eq.s32.totalorder %s41, 0
      %s44 = sadd.s32 %s43, 1
      %s45 = scalar_select %p42, %s43, %s44
      %p48 = pneg %p42
      %p49 = scmp.eq.s32.totalorder %s12, 1
      %p50 = por %p48, %p49
      %p51 = scmp.ne.s32.totalorder %s43, %s46
      %p52 = scmp.eq.s32.totalorder %s12, 0
      %p53 = por %p51, %p52
      %p54 = scmp.ne.s32.totalorder %s43, %s46
      %p55 = scmp.eq.s32.totalorder %s17, 1
      %p56 = por %p54, %p55
      %p57 = scmp.ne.s32.totalorder %s46, %s47
      %p58 = scmp.eq.s32.totalorder %s17, 0
      %p59 = por %p57, %p58
      %p60 = scmp.ne.s32.totalorder %s46, %s47
      %p61 = scmp.eq.s32.totalorder %s18, 1
      %p62 = por %p60, %p61
      %p64 = scmp.ne.s32.totalorder %s47, %s63
      %p65 = scmp.eq.s32.totalorder %s18, 0
      %p66 = por %p64, %p65
      %s67 = ssub.s32 %s19, %s38
      %p68 = scmp.eq.s32.totalorder %s67, 0
      %s70 = sadd.s32 %s69, 1
      %s71 = scalar_select %p68, %s69, %s70
      %p74 = pneg %p68
      %p75 = scmp.eq.s32.totalorder %s12, 1
      %p76 = por %p74, %p75
      %p77 = scmp.ne.s32.totalorder %s69, %s72
      %p78 = scmp.eq.s32.totalorder %s12, 0
      %p79 = por %p77, %p78
      %p80 = scmp.ne.s32.totalorder %s69, %s72
      %p81 = scmp.eq.s32.totalorder %s17, 1
      %p82 = por %p80, %p81
      %p83 = scmp.ne.s32.totalorder %s72, %s73
      %p84 = scmp.eq.s32.totalorder %s17, 0
      %p85 = por %p83, %p84
      %p86 = scmp.ne.s32.totalorder %s72, %s73
      %p87 = scmp.eq.s32.totalorder %s18, 1
      %p88 = por %p86, %p87
      %p90 = scmp.ne.s32.totalorder %s73, %s89
      %p91 = scmp.eq.s32.totalorder %s18, 0
      %p92 = por %p90, %p91
      %s93 = ssub.s32 %s19, %s38
      %p94 = scmp.eq.s32.totalorder %s93, 0
      %s96 = sadd.s32 %s95, 1
      %s97 = scalar_select %p94, %s95, %s96
      %p100 = pneg %p94
      %p101 = scmp.eq.s32.totalorder %s12, 1
      %p102 = por %p100, %p101
      %p103 = scmp.ne.s32.totalorder %s95, %s98
      %p104 = scmp.eq.s32.totalorder %s12, 0
      %p105 = por %p103, %p104
      %p106 = scmp.ne.s32.totalorder %s95, %s98
      %p107 = scmp.eq.s32.totalorder %s17, 1
      %p108 = por %p106, %p107
      %p109 = scmp.ne.s32.totalorder %s98, %s99
      %p110 = scmp.eq.s32.totalorder %s17, 0
      %p111 = por %p109, %p110
      %p112 = scmp.ne.s32.totalorder %s98, %s99
      %p113 = scmp.eq.s32.totalorder %s18, 1
      %p114 = por %p112, %p113
      %p116 = scmp.ne.s32.totalorder %s99, %s115
      %p117 = scmp.eq.s32.totalorder %s18, 0
      %p118 = por %p116, %p117
      %s119 = ssub.s32 %s20, %s34
      %s120 = ssub.s32 %s21, %s30
      %s121 = sor.u32 %s119, %s120
      %s122 = ssub.s32 %s19, %s38
      %s123 = sor.u32 %s121, %s122
      %p124 = scmp.eq.s32.totalorder %s123, 0
      %s126 = sadd.s32 %s125, 1
      %s127 = scalar_select %p124, %s125, %s126
      %p130 = pneg %p124
      %p131 = scmp.eq.s32.totalorder %s12, 1
      %p132 = por %p130, %p131
      %p133 = scmp.ne.s32.totalorder %s125, %s128
      %p134 = scmp.eq.s32.totalorder %s12, 0
      %p135 = por %p133, %p134
      %p136 = scmp.ne.s32.totalorder %s125, %s128
      %p137 = scmp.eq.s32.totalorder %s17, 1
      %p138 = por %p136, %p137
      %p139 = scmp.ne.s32.totalorder %s128, %s129
      %p140 = scmp.eq.s32.totalorder %s17, 0
      %p141 = por %p139, %p140
      %p142 = scmp.ne.s32.totalorder %s128, %s129
      %p143 = scmp.eq.s32.totalorder %s18, 1
      %p144 = por %p142, %p143
      %p146 = scmp.ne.s32.totalorder %s129, %s145
      %p147 = scmp.eq.s32.totalorder %s18, 0
      %p148 = por %p146, %p147
      %p149 = scmp.le.s32.totalorder 1, %s12
      %p150 = scmp.lt.s32.totalorder %s12, 3
      %p151 = pnand %p149, %p150
      %p152 = pneg %p151
      // Predicated region
      $region9: #{causal_self_attention.5} parent=5 // pred_check
        _
      $region10: #{causal_self_attention.5} parent=5 // pred_check_branch
        %154 = sbr.rel (%p151) target = $region12
      $region11: #{causal_self_attention.5} parent=5 // pred_region
        %s155 = ssub.s32 %s12, 1
        // Predicated region
        $region13: #{causal_self_attention.5} parent=11 // pred_check
          %p156 = pneg %p85
        $region14: #{causal_self_attention.5} parent=11 // pred_check_branch
          %158 = sbr.rel (%p156) target = $region16
        $region15: #{causal_self_attention.5} parent=11 // pred_region
          %p159 = scmp.lt.s32.totalorder %s22, 0
          %s160 = scalar_select %p159, %s22, 0
          %s161 = smul.addr %s160, 4
          %s162 = scalar_lea.vmem %s1, %s161
        $region16: #{causal_self_attention.5} parent=11 // pred_fallthru
          _
        // Predicated region
        $region17: #{causal_self_attention.5} parent=11 // pred_check
          %p163 = pneg %p111
        $region18: #{causal_self_attention.5} parent=11 // pred_check_branch
          %165 = sbr.rel (%p163) target = $region20
        $region19: #{causal_self_attention.5} parent=11 // pred_region
          %p166 = scmp.lt.s32.totalorder %s22, 0
          %s167 = scalar_select %p166, %s22, 0
          %s168 = scalar_lea.vmem %s2, %s167
        $region20: #{causal_self_attention.5} parent=11 // pred_fallthru
          _
      $region12: #{causal_self_attention.5} parent=5 // pred_fallthru
        _
      %p169 = scmp.lt.s32.totalorder %s12, 2
      // Predicated region
      $region21: #{causal_self_attention.5} parent=5 // pred_check
        %p170 = pneg %p169
      $region22: #{causal_self_attention.5} parent=5 // pred_check_branch
        %172 = sbr.rel (%p170) target = $region24
      $region23: #{causal_self_attention.5} parent=5 // pred_region
        // Predicated region
        $region25: #{causal_self_attention.5} parent=23 // pred_check
          %p173 = pneg %p53
        $region26: #{causal_self_attention.5} parent=23 // pred_check_branch
          %175 = sbr.rel (%p173) target = $region28
        $region27: #{causal_self_attention.5} parent=23 // pred_region
          %p176 = scmp.lt.s32.totalorder %s20, 1
          %s177 = scalar_select %p176, %s20, 1
          %p178 = scmp.lt.s32.totalorder %s21, 0
          %s179 = scalar_select %p178, %s21, 0
          %s180 = sadd.s32 %s179, %s177
          %s181 = smul.addr %s180, 4
          %s182 = scalar_lea.vmem %s0, %s181
        $region28: #{causal_self_attention.5} parent=23 // pred_fallthru
          _
      $region24: #{causal_self_attention.5} parent=5 // pred_fallthru
        _
      %p183 = scmp.le.s32.totalorder 1, %s12
      %p184 = scmp.lt.s32.totalorder %s12, 3
      %p185 = pnand %p183, %p184
      %p186 = pneg %p185
      // Predicated region
      $region29: #{causal_self_attention.5} parent=5 // pred_check
        _
      $region30: #{causal_self_attention.5} parent=5 // pred_check_branch
        %188 = sbr.rel (%p185) target = $region32
      $region31: #{causal_self_attention.5} parent=5 // pred_region
        %s189 = ssub.s32 %s12, 1
        %p190 = scmp.lt.s32.totalorder %s23, 1
        %s191 = scalar_select %p190, %s23, 1
        %p192 = scmp.lt.s32.totalorder %s24, 0
        %s193 = scalar_select %p192, %s24, 0
        %s194 = sadd.s32 %s193, %s191
        %s195 = smul.addr %s194, 4
        %s196 = scalar_lea.vmem %s0, %s195
        %p197 = pneg %p59
        %p198 = pneg %p56
        %p199 = scmp.lt.s32.totalorder %s22, 0
        %s200 = scalar_select %p199, %s22, 0
        %s201 = smul.addr %s200, 4
        %s202 = scalar_lea.vmem %s1, %s201
        %p203 = pneg %p85
        %p204 = pneg %p82
        %p205 = scmp.lt.s32.totalorder %s22, 0
        %s206 = scalar_select %p205, %s22, 0
        %s207 = scalar_lea.vmem %s2, %s206
        %p208 = pneg %p111
        %p209 = pneg %p108
        %p210 = pneg %p141
        %p211 = pneg %p138
        %s212 = sand.u32 %s128, 1
        %s213 = scalar_lea.sflag [#allocation3], %s212
        %s214 = sand.u32 %s128, 1
        %s215 = smul.addr %s214, 8
        %s216 = scalar_lea.vmem [#allocation2], %s215
        %p217 = scmp.lt.s32.totalorder %s23, 1
        %s218 = scalar_select %p217, %s23, 1
        %p219 = scmp.lt.s32.totalorder %s24, 0
        %s220 = scalar_select %p219, %s24, 0
        %s221 = sadd.s32 %s220, %s218
        %s222 = smul.addr %s221, 4
        %s223 = scalar_lea.vmem %s0, %s222
        %p224 = scmp.lt.s32.totalorder %s22, 0
        %s225 = scalar_select %p224, %s22, 0
        %s226 = smul.addr %s225, 4
        %s227 = scalar_lea.vmem %s1, %s226
        %p228 = scmp.lt.s32.totalorder %s22, 0
        %s229 = scalar_select %p228, %s22, 0
        %s230 = scalar_lea.vmem %s2, %s229
        %v232 = vld [vmem:[%s223] sm:$0xf]
        %v233 = vld [vmem:[%s227] sm:$0xf]
        %v234 = vld [vmem:[%s227 + $0x4] sm:$0xf]
        %v235 = vld [vmem:[%s227 + $0x8] sm:$0xf]
        %v236 = vld [vmem:[%s227 + $0xc] sm:$0xf]
        %v237 = vld [vmem:[%s230] sm:$0x1]
        %v239 = vlaneseq
        %v240 = vshrl.u32 %v239, 7
        %v241 = vsub.s32 0, %v240
        %v242 = vrot.slane %v237, %v241
        %v248 = vunpack.c.l.b16 %v233
        %v249 = vunpack.c.l.b16 %v234
        %v250 = vunpack.c.l.b16 %v235
        %v251 = vunpack.c.l.b16 %v236
        %v252 = vpack.c.b16 %v249, %v248
        %v253 = vpack.c.b16 %v251, %v250
        %vm256 = vcmask 261120
        %v258 = vsel %vm256, %v232, 0
        %260 = vmatprep.subr.bf16.mxu0 0
        %261 = vmatpush1.bf16.msra.mxu0 %v252
        %262 = vmatprep.subr.bf16.mxu0 0
        %263 = vmatpush1.bf16.msra.mxu0 %v253
        %264 = vmatprep.subr.bf16.mxu0 0
        %265 = vmatpush1.bf16.msra.mxu0 0
        %266 = vmatprep.subr.bf16.mxu0 0
        %267 = vmatpush1.bf16.msra.mxu0 0
        %268 = vmatprep.subr.bf16.mxu0 0
        %269 = vmatpush1.bf16.msra.mxu0 0
        %270 = vmatprep.subr.bf16.mxu0 0
        %271 = vmatpush1.bf16.msra.mxu0 0
        %272 = vmatprep.subr.bf16.mxu0 0
        %273 = vmatpush1.bf16.msra.mxu0 0
        %274 = vmatprep.subr.bf16.mxu0 0
        %275 = vmatpush1.bf16.msra.mxu0 0
        %276 = vmatprep.subr.bf16.mxu0 0
        %277 = vmatpush1.bf16.msra.mxu0 0
        %278 = vmatprep.subr.bf16.mxu0 0
        %279 = vmatpush1.bf16.msra.mxu0 0
        %280 = vmatprep.subr.bf16.mxu0 0
        %281 = vmatpush1.bf16.msra.mxu0 0
        %282 = vmatprep.subr.bf16.mxu0 0
        %283 = vmatpush1.bf16.msra.mxu0 0
        %284 = vmatprep.subr.bf16.mxu0 0
        %285 = vmatpush1.bf16.msra.mxu0 0
        %286 = vmatprep.subr.bf16.mxu0 0
        %287 = vmatpush1.bf16.msra.mxu0 0
        %288 = vmatprep.subr.bf16.mxu0 0
        %289 = vmatpush1.bf16.msra.mxu0 0
        %290 = vmatprep.subr.bf16.mxu0 0
        %291 = vmatpush1.bf16.msra.mxu0 0
        %292 = vmatprep.mubr.bf16.mxu0 0
        %293 = vmatmul.mubr.bf16.gmra.mrb[0].mxu0 %v258
        %v294 = vpop.f32.mrb[0].mxu0
        %v295 = vadd.f32 %v242, %v294
        %v296 = vpop.f32.mrb[0].mxu0
        %v297 = vpop.f32.mrb[0].mxu0
        %v298 = vpop.f32.mrb[0].mxu0
        %299 = vdwg.mxu0
        %300 = vst.msk [vmem:[%s216] sm:$0xff] %vm256, %v295
        %s301 = sand.u32 %s128, 1
        %s302 = scalar_lea.sflag [#allocation3], %s301
        %s303 = sand.u32 %s128, 1
        %s304 = smul.addr %s303, 8
        %s305 = scalar_lea.vmem [#allocation2], %s304
        // Predicated region
        $region33: #{causal_self_attention.5} parent=31 // pred_check
          %p306 = pneg %p138
        $region34: #{causal_self_attention.5} parent=31 // pred_check_branch
          %308 = sbr.rel (%p306) target = $region36
        $region35: #{causal_self_attention.5} parent=31 // pred_region
          %s310 = ssub.s32 128, 128
          %311 = vsyncadd %s302, %s310
          %s312 = sadd.s32 %s22, %s24
          %s313 = sadd.s32 %s312, %s23
          %s314 = smul.addr %s313, 128
          %s315 = scalar_lea.hbm %s3, %s314
          %s317 = sshll.u32 %s305, 4
          %s318 = int_to_ptr.vmem [resolvable:$true] %s317
          %320 = dma.vmem_to_hbm [thread:$0]  %s318, 128, %s315, %s302
        $region36: #{causal_self_attention.5} parent=31 // pred_fallthru
          _
      $region32: #{causal_self_attention.5} parent=5 // pred_fallthru
        _
      %p321 = scmp.le.s32.totalorder 2, %s12
      // Predicated region
      $region37: #{causal_self_attention.5} parent=5 // pred_check
        %p322 = pneg %p321
      $region38: #{causal_self_attention.5} parent=5 // pred_check_branch
        %324 = sbr.rel (%p322) target = $region40
      $region39: #{causal_self_attention.5} parent=5 // pred_region
        %s325 = ssub.s32 %s12, 2
        // Predicated region
        $region41: #{causal_self_attention.5} parent=39 // pred_check
          %p326 = pneg %p144
        $region42: #{causal_self_attention.5} parent=39 // pred_check_branch
          %328 = sbr.rel (%p326) target = $region44
        $region43: #{causal_self_attention.5} parent=39 // pred_region
          %s329 = sand.u32 %s129, 1
          %s330 = scalar_lea.sflag [#allocation3], %s329
          %s331 = sand.u32 %s129, 1
          %s332 = smul.addr %s331, 8
          %s333 = scalar_lea.vmem [#allocation2], %s332
          %334 = dma.done %s330, 128
        $region44: #{causal_self_attention.5} parent=39 // pred_fallthru
          _
      $region40: #{causal_self_attention.5} parent=5 // pred_fallthru
        _
    $region6: #{causal_self_attention.5} parent=1 // loop_footer
      %s16 = sadd.s32 1, %s12
    $region7: #{causal_self_attention.5} parent=1 // loop_footer_branch
      %11 = sbr.rel target = $region3
    $region8: #{causal_self_attention.5} parent=1 // loop_exit
      _
    %335 = vsyncpa [#allocation3], 1
    %s336 = scalar_lea.sflag [#allocation3], 1
    %337 = vsyncpa %s336, 1

// kernel: causal_self_attention.3
$region0: #{causal_self_attention.3}
  #allocation0 [shape = 'u32[]', space=smem, size = 0x4, offset = 0x4, fixed_abs, tag = 'smem constant byte address 0x4 - core index']
  #allocation1 [shape = 'u32[144,128]{1,0:T(1,128)}', space=vmem, size = 0x12000, scoped, tag = 'internal scratch']
  %s0 = inlined_call_operand.vmem [shape: bf16[2,8,32], index: 0, kind: input, shape index: {}]
  %s1 = inlined_call_operand.hbm [shape: bf16[3,32,32], index: 1, kind: input, shape index: {}]
  %s2 = inlined_call_operand.vmem [shape: f32[3,1,32], index: 2, kind: input, shape index: {}]
  %s3 = inlined_call_operand.vmem [shape: bf16[2,8,32], index: 3, kind: output, shape index: {0}]
  %s4 = inlined_call_operand.vmem [shape: bf16[2,8,32], index: 4, kind: output, shape index: {1}]
  %s5 = inlined_call_operand.vmem [shape: bf16[2,8,32], index: 5, kind: output, shape index: {2}]
  %6 = xla_tuple %s3, %s4, %s5
  %s7 = sld [smem:[#allocation0]]
  $region65: #{causal_self_attention.3} parent=0
    _
  %s9 = ssub.s32 1, %s7
  %s10 = scalar_select 0, %s9, %s7
  $region1: #{causal_self_attention.3} parent=0
    #allocation2 [shape = 'u8[24576]{0}', space=vmem, size = 0x6000, scoped, tag = 'input window, operand 1, single buffered']
    #allocation3 [shape = 's32[2]{0}', space=sflag, size = 0x8, scoped, tag = 'scoped memory for causal_self_attention.3']
    %11 = vsyncpa [#allocation3], 0
    loop: start=0, step=1, limit=4
    $region2: #{causal_self_attention.3} parent=1 // loop_pre_header
      _
    $region3: #{causal_self_attention.3} parent=1 // loop_header
      %s13 = sphi 0, %s17
      %p14 = scmp.ge.s32.totalorder %s13, 4
      %s20 = sphi 0, %s39
      %s21 = sphi 0, %s35
      %s22 = sphi 0, %s31
      %s23 = sphi 0, %s20
      %s24 = sphi 0, %s21
      %s25 = sphi 0, %s22
      %s26 = sphi 0, %s23
      %s27 = sphi 0, %s24
      %s28 = sphi 0, %s25
      %s44 = sphi 0, %s46
      %s47 = sphi 0, %s44
      %s48 = sphi 0, %s47
      %s64 = sphi 0, %s48
      %s70 = sphi 0, %s72
      %s73 = sphi 0, %s70
      %s74 = sphi 0, %s73
      %s90 = sphi 0, %s74
      %s96 = sphi 0, %s98
      %s99 = sphi 0, %s96
      %s100 = sphi 0, %s99
      %s116 = sphi 0, %s100
      %s126 = sphi 0, %s128
      %s129 = sphi 0, %s126
      %s130 = sphi 0, %s129
      %s146 = sphi 0, %s130
      %s156 = sphi 0, %s158
      %s159 = sphi 0, %s156
      %s160 = sphi 0, %s159
      %s176 = sphi 0, %s160
      %s186 = sphi 0, %s188
      %s189 = sphi 0, %s186
      %s190 = sphi 0, %s189
      %s206 = sphi 0, %s190
    $region4: #{causal_self_attention.3} parent=1 // loop_header_branch
      %16 = sbr.rel (%p14) target = $region8
    $region5: #{causal_self_attention.3} parent=1 // loop_body
      %s18 = ssub.s32 %s13, 1
      %s19 = ssub.s32 %s13, 2
      %s29 = sadd.s32 1, %s22
      %p30 = scmp.ge.s32.totalorder %s29, 1
      %s31 = scalar_select %p30, 0, %s29
      %s32 = sadd.s32 1, %s21
      %s33 = scalar_select %p30, %s32, %s21
      %p34 = scmp.ge.s32.totalorder %s33, 2
      %s35 = scalar_select %p34, 0, %s33
      %s36 = sadd.s32 1, %s20
      %s37 = scalar_select %p34, %s36, %s20
      %p38 = scmp.ge.s32.totalorder %s37, 1
      %s39 = scalar_select %p38, 0, %s37
      %s40 = ssub.s32 %s21, %s35
      %s41 = ssub.s32 %s22, %s31
      %s42 = sor.u32 %s40, %s41
      %p43 = scmp.eq.s32.totalorder %s42, 0
      %s45 = sadd.s32 %s44, 1
      %s46 = scalar_select %p43, %s44, %s45
      %p49 = pneg %p43
      %p50 = scmp.eq.s32.totalorder %s13, 1
      %p51 = por %p49, %p50
      %p52 = scmp.ne.s32.totalorder %s44, %s47
      %p53 = scmp.eq.s32.totalorder %s13, 0
      %p54 = por %p52, %p53
      %p55 = scmp.ne.s32.totalorder %s44, %s47
      %p56 = scmp.eq.s32.totalorder %s18, 1
      %p57 = por %p55, %p56
      %p58 = scmp.ne.s32.totalorder %s47, %s48
      %p59 = scmp.eq.s32.totalorder %s18, 0
      %p60 = por %p58, %p59
      %p61 = scmp.ne.s32.totalorder %s47, %s48
      %p62 = scmp.eq.s32.totalorder %s19, 1
      %p63 = por %p61, %p62
      %p65 = scmp.ne.s32.totalorder %s48, %s64
      %p66 = scmp.eq.s32.totalorder %s19, 0
      %p67 = por %p65, %p66
      %s68 = ssub.s32 %s20, %s39
      %p69 = scmp.eq.s32.totalorder %s68, 0
      %s71 = sadd.s32 %s70, 1
      %s72 = scalar_select %p69, %s70, %s71
      %p75 = pneg %p69
      %p76 = scmp.eq.s32.totalorder %s13, 1
      %p77 = por %p75, %p76
      %p78 = scmp.ne.s32.totalorder %s70, %s73
      %p79 = scmp.eq.s32.totalorder %s13, 0
      %p80 = por %p78, %p79
      %p81 = scmp.ne.s32.totalorder %s70, %s73
      %p82 = scmp.eq.s32.totalorder %s18, 1
      %p83 = por %p81, %p82
      %p84 = scmp.ne.s32.totalorder %s73, %s74
      %p85 = scmp.eq.s32.totalorder %s18, 0
      %p86 = por %p84, %p85
      %p87 = scmp.ne.s32.totalorder %s73, %s74
      %p88 = scmp.eq.s32.totalorder %s19, 1
      %p89 = por %p87, %p88
      %p91 = scmp.ne.s32.totalorder %s74, %s90
      %p92 = scmp.eq.s32.totalorder %s19, 0
      %p93 = por %p91, %p92
      %s94 = ssub.s32 %s20, %s39
      %p95 = scmp.eq.s32.totalorder %s94, 0
      %s97 = sadd.s32 %s96, 1
      %s98 = scalar_select %p95, %s96, %s97
      %p101 = pneg %p95
      %p102 = scmp.eq.s32.totalorder %s13, 1
      %p103 = por %p101, %p102
      %p104 = scmp.ne.s32.totalorder %s96, %s99
      %p105 = scmp.eq.s32.totalorder %s13, 0
      %p106 = por %p104, %p105
      %p107 = scmp.ne.s32.totalorder %s96, %s99
      %p108 = scmp.eq.s32.totalorder %s18, 1
      %p109 = por %p107, %p108
      %p110 = scmp.ne.s32.totalorder %s99, %s100
      %p111 = scmp.eq.s32.totalorder %s18, 0
      %p112 = por %p110, %p111
      %p113 = scmp.ne.s32.totalorder %s99, %s100
      %p114 = scmp.eq.s32.totalorder %s19, 1
      %p115 = por %p113, %p114
      %p117 = scmp.ne.s32.totalorder %s100, %s116
      %p118 = scmp.eq.s32.totalorder %s19, 0
      %p119 = por %p117, %p118
      %s120 = ssub.s32 %s21, %s35
      %s121 = ssub.s32 %s22, %s31
      %s122 = sor.u32 %s120, %s121
      %s123 = ssub.s32 %s20, %s39
      %s124 = sor.u32 %s122, %s123
      %p125 = scmp.eq.s32.totalorder %s124, 0
      %s127 = sadd.s32 %s126, 1
      %s128 = scalar_select %p125, %s126, %s127
      %p131 = pneg %p125
      %p132 = scmp.eq.s32.totalorder %s13, 1
      %p133 = por %p131, %p132
      %p134 = scmp.ne.s32.totalorder %s126, %s129
      %p135 = scmp.eq.s32.totalorder %s13, 0
      %p136 = por %p134, %p135
      %p137 = scmp.ne.s32.totalorder %s126, %s129
      %p138 = scmp.eq.s32.totalorder %s18, 1
      %p139 = por %p137, %p138
      %p140 = scmp.ne.s32.totalorder %s129, %s130
      %p141 = scmp.eq.s32.totalorder %s18, 0
      %p142 = por %p140, %p141
      %p143 = scmp.ne.s32.totalorder %s129, %s130
      %p144 = scmp.eq.s32.totalorder %s19, 1
      %p145 = por %p143, %p144
      %p147 = scmp.ne.s32.totalorder %s130, %s146
      %p148 = scmp.eq.s32.totalorder %s19, 0
      %p149 = por %p147, %p148
      %s150 = ssub.s32 %s21, %s35
      %s151 = ssub.s32 %s22, %s31
      %s152 = sor.u32 %s150, %s151
      %s153 = ssub.s32 %s20, %s39
      %s154 = sor.u32 %s152, %s153
      %p155 = scmp.eq.s32.totalorder %s154, 0
      %s157 = sadd.s32 %s156, 1
      %s158 = scalar_select %p155, %s156, %s157
      %p161 = pneg %p155
      %p162 = scmp.eq.s32.totalorder %s13, 1
      %p163 = por %p161, %p162
      %p164 = scmp.ne.s32.totalorder %s156, %s159
      %p165 = scmp.eq.s32.totalorder %s13, 0
      %p166 = por %p164, %p165
      %p167 = scmp.ne.s32.totalorder %s156, %s159
      %p168 = scmp.eq.s32.totalorder %s18, 1
      %p169 = por %p167, %p168
      %p170 = scmp.ne.s32.totalorder %s159, %s160
      %p171 = scmp.eq.s32.totalorder %s18, 0
      %p172 = por %p170, %p171
      %p173 = scmp.ne.s32.totalorder %s159, %s160
      %p174 = scmp.eq.s32.totalorder %s19, 1
      %p175 = por %p173, %p174
      %p177 = scmp.ne.s32.totalorder %s160, %s176
      %p178 = scmp.eq.s32.totalorder %s19, 0
      %p179 = por %p177, %p178
      %s180 = ssub.s32 %s21, %s35
      %s181 = ssub.s32 %s22, %s31
      %s182 = sor.u32 %s180, %s181
      %s183 = ssub.s32 %s20, %s39
      %s184 = sor.u32 %s182, %s183
      %p185 = scmp.eq.s32.totalorder %s184, 0
      %s187 = sadd.s32 %s186, 1
      %s188 = scalar_select %p185, %s186, %s187
      %p191 = pneg %p185
      %p192 = scmp.eq.s32.totalorder %s13, 1
      %p193 = por %p191, %p192
      %p194 = scmp.ne.s32.totalorder %s186, %s189
      %p195 = scmp.eq.s32.totalorder %s13, 0
      %p196 = por %p194, %p195
      %p197 = scmp.ne.s32.totalorder %s186, %s189
      %p198 = scmp.eq.s32.totalorder %s18, 1
      %p199 = por %p197, %p198
      %p200 = scmp.ne.s32.totalorder %s189, %s190
      %p201 = scmp.eq.s32.totalorder %s18, 0
      %p202 = por %p200, %p201
      %p203 = scmp.ne.s32.totalorder %s189, %s190
      %p204 = scmp.eq.s32.totalorder %s19, 1
      %p205 = por %p203, %p204
      %p207 = scmp.ne.s32.totalorder %s190, %s206
      %p208 = scmp.eq.s32.totalorder %s19, 0
      %p209 = por %p207, %p208
      %p210 = scmp.le.s32.totalorder 1, %s13
      %p211 = scmp.lt.s32.totalorder %s13, 3
      %p212 = pnand %p210, %p211
      %p213 = pneg %p212
      // Predicated region
      $region9: #{causal_self_attention.3} parent=5 // pred_check
        _
      $region10: #{causal_self_attention.3} parent=5 // pred_check_branch
        %215 = sbr.rel (%p212) target = $region12
      $region11: #{causal_self_attention.3} parent=5 // pred_region
        %s216 = ssub.s32 %s13, 1
        // Predicated region
        $region13: #{causal_self_attention.3} parent=11 // pred_check
          %p217 = pneg %p86
        $region14: #{causal_self_attention.3} parent=11 // pred_check_branch
          %219 = sbr.rel (%p217) target = $region16
        $region15: #{causal_self_attention.3} parent=11 // pred_region
          %s221 = ssub.s32 768, 768
          %222 = vsyncadd [#allocation3], %s221
          %s223 = smul.addr %s23, 64
          %s224 = scalar_lea.hbm %s1, %s223
          %s225 = sshll.u32 [#allocation2], 4
          %s226 = int_to_ptr.vmem [resolvable:$true] %s225
          %231 = dma.hbm_to_vmem [thread:$0]  %s224, 768, %s226, [#allocation3], 64, 64, 4
        $region16: #{causal_self_attention.3} parent=11 // pred_fallthru
          _
        // Predicated region
        $region17: #{causal_self_attention.3} parent=11 // pred_check
          %p232 = pneg %p112
        $region18: #{causal_self_attention.3} parent=11 // pred_check_branch
          %234 = sbr.rel (%p232) target = $region20
        $region19: #{causal_self_attention.3} parent=11 // pred_region
          %p235 = scmp.lt.s32.totalorder %s23, 0
          %s236 = scalar_select %p235, %s23, 0
          %s237 = scalar_lea.vmem %s2, %s236
        $region20: #{causal_self_attention.3} parent=11 // pred_fallthru
          _
      $region12: #{causal_self_attention.3} parent=5 // pred_fallthru
        _
      %p238 = scmp.lt.s32.totalorder %s13, 2
      // Predicated region
      $region21: #{causal_self_attention.3} parent=5 // pred_check
        %p239 = pneg %p238
      $region22: #{causal_self_attention.3} parent=5 // pred_check_branch
        %241 = sbr.rel (%p239) target = $region24
      $region23: #{causal_self_attention.3} parent=5 // pred_region
        // Predicated region
        $region25: #{causal_self_attention.3} parent=23 // pred_check
          %p242 = pneg %p54
        $region26: #{causal_self_attention.3} parent=23 // pred_check_branch
          %244 = sbr.rel (%p242) target = $region28
        $region27: #{causal_self_attention.3} parent=23 // pred_region
          %p245 = scmp.lt.s32.totalorder %s21, 1
          %s246 = scalar_select %p245, %s21, 1
          %p247 = scmp.lt.s32.totalorder %s22, 0
          %s248 = scalar_select %p247, %s22, 0
          %s249 = sadd.s32 %s248, %s246
          %s250 = smul.addr %s249, 4
          %s251 = scalar_lea.vmem %s0, %s250
        $region28: #{causal_self_attention.3} parent=23 // pred_fallthru
          _
      $region24: #{causal_self_attention.3} parent=5 // pred_fallthru
        _
      %p252 = scmp.le.s32.totalorder 1, %s13
      %p253 = scmp.lt.s32.totalorder %s13, 3
      %p254 = pnand %p252, %p253
      %p255 = pneg %p254
      // Predicated region
      $region29: #{causal_self_attention.3} parent=5 // pred_check
        _
      $region30: #{causal_self_attention.3} parent=5 // pred_check_branch
        %257 = sbr.rel (%p254) target = $region32
      $region31: #{causal_self_attention.3} parent=5 // pred_region
        %s258 = ssub.s32 %s13, 1
        // Predicated region
        $region33: #{causal_self_attention.3} parent=31 // pred_check
          %p259 = pneg %p86
        $region34: #{causal_self_attention.3} parent=31 // pred_check_branch
          %261 = sbr.rel (%p259) target = $region36
        $region35: #{causal_self_attention.3} parent=31 // pred_region
          %262 = dma.done [#allocation3], 768
        $region36: #{causal_self_attention.3} parent=31 // pred_fallthru
          _
        %p263 = scmp.lt.s32.totalorder %s24, 1
        %s264 = scalar_select %p263, %s24, 1
        %p265 = scmp.lt.s32.totalorder %s25, 0
        %s266 = scalar_select %p265, %s25, 0
        %s267 = sadd.s32 %s266, %s264
        %s268 = smul.addr %s267, 4
        %s269 = scalar_lea.vmem %s0, %s268
        %p270 = pneg %p60
        %p271 = pneg %p57
        %p272 = pneg %p86
        %p273 = pneg %p83
        %p274 = scmp.lt.s32.totalorder %s23, 0
        %s275 = scalar_select %p274, %s23, 0
        %s276 = scalar_lea.vmem %s2, %s275
        %p277 = pneg %p112
        %p278 = pneg %p109
        %p279 = pneg %p142
        %p280 = pneg %p139
        %p281 = scmp.lt.s32.totalorder %s24, 1
        %s282 = scalar_select %p281, %s24, 1
        %p283 = scmp.lt.s32.totalorder %s25, 0
        %s284 = scalar_select %p283, %s25, 0
        %p285 = scmp.lt.s32.totalorder %s23, 0
        %s286 = scalar_select %p285, %s23, 0
        %s287 = sadd.s32 %s286, %s284
        %s288 = sadd.s32 %s287, %s282
        %s289 = smul.addr %s288, 4
        %s290 = scalar_lea.vmem %s3, %s289
        %p291 = pneg %p172
        %p292 = pneg %p169
        %p293 = scmp.lt.s32.totalorder %s24, 1
        %s294 = scalar_select %p293, %s24, 1
        %p295 = scmp.lt.s32.totalorder %s25, 0
        %s296 = scalar_select %p295, %s25, 0
        %p297 = scmp.lt.s32.totalorder %s23, 0
        %s298 = scalar_select %p297, %s23, 0
        %s299 = sadd.s32 %s298, %s296
        %s300 = sadd.s32 %s299, %s294
        %s301 = smul.addr %s300, 4
        %s302 = scalar_lea.vmem %s4, %s301
        %p303 = pneg %p202
        %p304 = pneg %p199
        %p305 = scmp.lt.s32.totalorder %s24, 1
        %s306 = scalar_select %p305, %s24, 1
        %p307 = scmp.lt.s32.totalorder %s25, 0
        %s308 = scalar_select %p307, %s25, 0
        %p309 = scmp.lt.s32.totalorder %s23, 0
        %s310 = scalar_select %p309, %s23, 0
        %s311 = sadd.s32 %s310, %s308
        %s312 = sadd.s32 %s311, %s306
        %s313 = smul.addr %s312, 4
        %s314 = scalar_lea.vmem %s5, %s313
        %p315 = scmp.lt.s32.totalorder %s24, 1
        %s316 = scalar_select %p315, %s24, 1
        %p317 = scmp.lt.s32.totalorder %s25, 0
        %s318 = scalar_select %p317, %s25, 0
        %s319 = sadd.s32 %s318, %s316
        %s320 = smul.addr %s319, 4
        %s321 = scalar_lea.vmem %s0, %s320
        %p322 = scmp.lt.s32.totalorder %s23, 0
        %s323 = scalar_select %p322, %s23, 0
        %s324 = scalar_lea.vmem %s2, %s323
        %p325 = scmp.lt.s32.totalorder %s24, 1
        %s326 = scalar_select %p325, %s24, 1
        %p327 = scmp.lt.s32.totalorder %s25, 0
        %s328 = scalar_select %p327, %s25, 0
        %p329 = scmp.lt.s32.totalorder %s23, 0
        %s330 = scalar_select %p329, %s23, 0
        %s331 = sadd.s32 %s330, %s328
        %s332 = sadd.s32 %s331, %s326
        %s333 = smul.addr %s332, 4
        %s334 = scalar_lea.vmem %s3, %s333
        %p335 = scmp.lt.s32.totalorder %s24, 1
        %s336 = scalar_select %p335, %s24, 1
        %p337 = scmp.lt.s32.totalorder %s25, 0
        %s338 = scalar_select %p337, %s25, 0
        %p339 = scmp.lt.s32.totalorder %s23, 0
        %s340 = scalar_select %p339, %s23, 0
        %s341 = sadd.s32 %s340, %s338
        %s342 = sadd.s32 %s341, %s336
        %s343 = smul.addr %s342, 4
        %s344 = scalar_lea.vmem %s4, %s343
        %p345 = scmp.lt.s32.totalorder %s24, 1
        %s346 = scalar_select %p345, %s24, 1
        %p347 = scmp.lt.s32.totalorder %s25, 0
        %s348 = scalar_select %p347, %s25, 0
        %p349 = scmp.lt.s32.totalorder %s23, 0
        %s350 = scalar_select %p349, %s23, 0
        %s351 = sadd.s32 %s350, %s348
        %s352 = sadd.s32 %s351, %s346
        %s353 = smul.addr %s352, 4
        %s354 = scalar_lea.vmem %s5, %s353
        %v356 = vld [vmem:[%s321] sm:$0xf]
        %v357 = vld [vmem:[#allocation2] sm:$0xf]
        %v358 = vld [vmem:[#allocation2 + $0x4] sm:$0xf]
        %v359 = vld [vmem:[#allocation2 + $0x8] sm:$0xf]
        %v360 = vld [vmem:[#allocation2 + $0xc] sm:$0xf]
        %v361 = vld [vmem:[%s324] sm:$0x1]
        %v363 = vlaneseq
        %v364 = vshrl.u32 %v363, 7
        %v365 = vsub.s32 0, %v364
        %v366 = vrot.slane %v361, %v365
        %v372 = vunpack.c.l.b16 %v357
        %v373 = vunpack.c.l.b16 %v358
        %v374 = vunpack.c.l.b16 %v359
        %v375 = vunpack.c.l.b16 %v360
        %v376 = vpack.c.b16 %v373, %v372
        %v377 = vpack.c.b16 %v375, %v374
        %vm380 = vcmask 261120
        %v382 = vsel %vm380, %v356, 0
        %384 = vmatprep.subr.bf16.mxu0 0
        %385 = vmatpush1.bf16.msra.mxu0 %v376
        %386 = vmatprep.subr.bf16.mxu0 0
        %387 = vmatpush1.bf16.msra.mxu0 %v377
        %388 = vmatprep.subr.bf16.mxu0 0
        %389 = vmatpush1.bf16.msra.mxu0 0
        %390 = vmatprep.subr.bf16.mxu0 0
        %391 = vmatpush1.bf16.msra.mxu0 0
        %392 = vmatprep.subr.bf16.mxu0 0
        %393 = vmatpush1.bf16.msra.mxu0 0
        %394 = vmatprep.subr.bf16.mxu0 0
        %395 = vmatpush1.bf16.msra.mxu0 0
        %396 = vmatprep.subr.bf16.mxu0 0
        %397 = vmatpush1.bf16.msra.mxu0 0
        %398 = vmatprep.subr.bf16.mxu0 0
        %399 = vmatpush1.bf16.msra.mxu0 0
        %400 = vmatprep.subr.bf16.mxu0 0
        %401 = vmatpush1.bf16.msra.mxu0 0
        %402 = vmatprep.subr.bf16.mxu0 0
        %403 = vmatpush1.bf16.msra.mxu0 0
        %404 = vmatprep.subr.bf16.mxu0 0
        %405 = vmatpush1.bf16.msra.mxu0 0
        %406 = vmatprep.subr.bf16.mxu0 0
        %407 = vmatpush1.bf16.msra.mxu0 0
        %408 = vmatprep.subr.bf16.mxu0 0
        %409 = vmatpush1.bf16.msra.mxu0 0
        %410 = vmatprep.subr.bf16.mxu0 0
        %411 = vmatpush1.bf16.msra.mxu0 0
        %412 = vmatprep.subr.bf16.mxu0 0
        %413 = vmatpush1.bf16.msra.mxu0 0
        %414 = vmatprep.subr.bf16.mxu0 0
        %415 = vmatpush1.bf16.msra.mxu0 0
        %416 = vmatprep.mubr.bf16.mxu0 0
        %417 = vmatmul.mubr.bf16.gmra.mrb[0].mxu0 %v382
        %v418 = vpop.f32.mrb[0].mxu0
        %v419 = vadd.f32 %v366, %v418
        %v420 = vpop.f32.mrb[0].mxu0
        %v421 = vpop.f32.mrb[0].mxu0
        %v422 = vpop.f32.mrb[0].mxu0
        %423 = vdwg.mxu0
        %v424 = vpack.c.bf16 %v419, %v419
        %vm425 = vcmask 257024
        %426 = vst.msk [vmem:[%s334] sm:$0xf] %vm425, %v424
        %s427 = scalar_lea.vmem [#allocation2], 16
        %v428 = vld [vmem:[%s427] sm:$0xf]
        %v429 = vld [vmem:[%s427 + $0x4] sm:$0xf]
        %v430 = vld [vmem:[%s427 + $0x8] sm:$0xf]
        %v431 = vld [vmem:[%s427 + $0xc] sm:$0xf]
        %s432 = scalar_lea.vmem %s324, 1
        %v433 = vld [vmem:[%s432] sm:$0x1]
        %v435 = vlaneseq
        %v436 = vshrl.u32 %v435, 7
        %v437 = vsub.s32 0, %v436
        %v438 = vrot.slane %v433, %v437
        %v444 = vunpack.c.l.b16 %v428
        %v445 = vunpack.c.l.b16 %v429
        %v446 = vunpack.c.l.b16 %v430
        %v447 = vunpack.c.l.b16 %v431
        %v448 = vpack.c.b16 %v445, %v444
        %v449 = vpack.c.b16 %v447, %v446
        %452 = vmatprep.subr.bf16.mxu0 0
        %453 = vmatpush1.bf16.msra.mxu0 %v448
        %454 = vmatprep.subr.bf16.mxu0 0
        %455 = vmatpush1.bf16.msra.mxu0 %v449
        %456 = vmatprep.subr.bf16.mxu0 0
        %457 = vmatpush1.bf16.msra.mxu0 0
        %458 = vmatprep.subr.bf16.mxu0 0
        %459 = vmatpush1.bf16.msra.mxu0 0
        %460 = vmatprep.subr.bf16.mxu0 0
        %461 = vmatpush1.bf16.msra.mxu0 0
        %462 = vmatprep.subr.bf16.mxu0 0
        %463 = vmatpush1.bf16.msra.mxu0 0
        %464 = vmatprep.subr.bf16.mxu0 0
        %465 = vmatpush1.bf16.msra.mxu0 0
        %466 = vmatprep.subr.bf16.mxu0 0
        %467 = vmatpush1.bf16.msra.mxu0 0
        %468 = vmatprep.subr.bf16.mxu0 0
        %469 = vmatpush1.bf16.msra.mxu0 0
        %470 = vmatprep.subr.bf16.mxu0 0
        %471 = vmatpush1.bf16.msra.mxu0 0
        %472 = vmatprep.subr.bf16.mxu0 0
        %473 = vmatpush1.bf16.msra.mxu0 0
        %474 = vmatprep.subr.bf16.mxu0 0
        %475 = vmatpush1.bf16.msra.mxu0 0
        %476 = vmatprep.subr.bf16.mxu0 0
        %477 = vmatpush1.bf16.msra.mxu0 0
        %478 = vmatprep.subr.bf16.mxu0 0
        %479 = vmatpush1.bf16.msra.mxu0 0
        %480 = vmatprep.subr.bf16.mxu0 0
        %481 = vmatpush1.bf16.msra.mxu0 0
        %482 = vmatprep.subr.bf16.mxu0 0
        %483 = vmatpush1.bf16.msra.mxu0 0
        %484 = vmatprep.mubr.bf16.mxu0 0
        %485 = vmatmul.mubr.bf16.gmra.mrb[0].mxu0 %v382
        %v486 = vpop.f32.mrb[0].mxu0
        %v487 = vadd.f32 %v438, %v486
        %v488 = vpop.f32.mrb[0].mxu0
        %v489 = vpop.f32.mrb[0].mxu0
        %v490 = vpop.f32.mrb[0].mxu0
        %491 = vdwg.mxu0
        %v492 = vpack.c.bf16 %v487, %v487
        %493 = vst.msk [vmem:[%s344] sm:$0xf] %vm425, %v492
        %s494 = scalar_lea.vmem [#allocation2], 32
        %v495 = vld [vmem:[%s494] sm:$0xf]
        %v496 = vld [vmem:[%s494 + $0x4] sm:$0xf]
        %v497 = vld [vmem:[%s494 + $0x8] sm:$0xf]
        %v498 = vld [vmem:[%s494 + $0xc] sm:$0xf]
        %s499 = scalar_lea.vmem %s324, 2
        %v500 = vld [vmem:[%s499] sm:$0x1]
        %v502 = vlaneseq
        %v503 = vshrl.u32 %v502, 7
        %v504 = vsub.s32 0, %v503
        %v505 = vrot.slane %v500, %v504
        %v511 = vunpack.c.l.b16 %v495
        %v512 = vunpack.c.l.b16 %v496
        %v513 = vunpack.c.l.b16 %v497
        %v514 = vunpack.c.l.b16 %v498
        %v515 = vpack.c.b16 %v512, %v511
        %v516 = vpack.c.b16 %v514, %v513
        %519 = vmatprep.subr.bf16.mxu0 0
        %520 = vmatpush1.bf16.msra.mxu0 %v515
        %521 = vmatprep.subr.bf16.mxu0 0
        %522 = vmatpush1.bf16.msra.mxu0 %v516
        %523 = vmatprep.subr.bf16.mxu0 0
        %524 = vmatpush1.bf16.msra.mxu0 0
        %525 = vmatprep.subr.bf16.mxu0 0
        %526 = vmatpush1.bf16.msra.mxu0 0
        %527 = vmatprep.subr.bf16.mxu0 0
        %528 = vmatpush1.bf16.msra.mxu0 0
        %529 = vmatprep.subr.bf16.mxu0 0
        %530 = vmatpush1.bf16.msra.mxu0 0
        %531 = vmatprep.subr.bf16.mxu0 0
        %532 = vmatpush1.bf16.msra.mxu0 0
        %533 = vmatprep.subr.bf16.mxu0 0
        %534 = vmatpush1.bf16.msra.mxu0 0
        %535 = vmatprep.subr.bf16.mxu0 0
        %536 = vmatpush1.bf16.msra.mxu0 0
        %537 = vmatprep.subr.bf16.mxu0 0
        %538 = vmatpush1.bf16.msra.mxu0 0
        %539 = vmatprep.subr.bf16.mxu0 0
        %540 = vmatpush1.bf16.msra.mxu0 0
        %541 = vmatprep.subr.bf16.mxu0 0
        %542 = vmatpush1.bf16.msra.mxu0 0
        %543 = vmatprep.subr.bf16.mxu0 0
        %544 = vmatpush1.bf16.msra.mxu0 0
        %545 = vmatprep.subr.bf16.mxu0 0
        %546 = vmatpush1.bf16.msra.mxu0 0
        %547 = vmatprep.subr.bf16.mxu0 0
        %548 = vmatpush1.bf16.msra.mxu0 0
        %549 = vmatprep.subr.bf16.mxu0 0
        %550 = vmatpush1.bf16.msra.mxu0 0
        %551 = vmatprep.mubr.bf16.mxu0 0
        %552 = vmatmul.mubr.bf16.gmra.mrb[0].mxu0 %v382
        %v553 = vpop.f32.mrb[0].mxu0
        %v554 = vadd.f32 %v505, %v553
        %v555 = vpop.f32.mrb[0].mxu0
        %v556 = vpop.f32.mrb[0].mxu0
        %v557 = vpop.f32.mrb[0].mxu0
        %558 = vdwg.mxu0
        %v559 = vpack.c.bf16 %v554, %v554
        %560 = vst.msk [vmem:[%s354] sm:$0xf] %vm425, %v559
        %p561 = scmp.lt.s32.totalorder %s24, 1
        %s562 = scalar_select %p561, %s24, 1
        %p563 = scmp.lt.s32.totalorder %s25, 0
        %s564 = scalar_select %p563, %s25, 0
        %p565 = scmp.lt.s32.totalorder %s23, 0
        %s566 = scalar_select %p565, %s23, 0
        %s567 = sadd.s32 %s566, %s564
        %s568 = sadd.s32 %s567, %s562
        %s569 = smul.addr %s568, 4
        %s570 = scalar_lea.vmem %s3, %s569
        %p571 = scmp.lt.s32.totalorder %s24, 1
        %s572 = scalar_select %p571, %s24, 1
        %p573 = scmp.lt.s32.totalorder %s25, 0
        %s574 = scalar_select %p573, %s25, 0
        %p575 = scmp.lt.s32.totalorder %s23, 0
        %s576 = scalar_select %p575, %s23, 0
        %s577 = sadd.s32 %s576, %s574
        %s578 = sadd.s32 %s577, %s572
        %s579 = smul.addr %s578, 4
        %s580 = scalar_lea.vmem %s4, %s579
        %p581 = scmp.lt.s32.totalorder %s24, 1
        %s582 = scalar_select %p581, %s24, 1
        %p583 = scmp.lt.s32.totalorder %s25, 0
        %s584 = scalar_select %p583, %s25, 0
        %p585 = scmp.lt.s32.totalorder %s23, 0
        %s586 = scalar_select %p585, %s23, 0
        %s587 = sadd.s32 %s586, %s584
        %s588 = sadd.s32 %s587, %s582
        %s589 = smul.addr %s588, 4
        %s590 = scalar_lea.vmem %s5, %s589
        // Predicated region
        $region37: #{causal_self_attention.3} parent=31 // pred_check
          %p591 = pneg %p139
        $region38: #{causal_self_attention.3} parent=31 // pred_check_branch
          %593 = sbr.rel (%p591) target = $region40
        $region39: #{causal_self_attention.3} parent=31 // pred_region
          _
        $region40: #{causal_self_attention.3} parent=31 // pred_fallthru
          _
        // Predicated region
        $region41: #{causal_self_attention.3} parent=31 // pred_check
          %p594 = pneg %p169
        $region42: #{causal_self_attention.3} parent=31 // pred_check_branch
          %596 = sbr.rel (%p594) target = $region44
        $region43: #{causal_self_attention.3} parent=31 // pred_region
          _
        $region44: #{causal_self_attention.3} parent=31 // pred_fallthru
          _
        // Predicated region
        $region45: #{causal_self_attention.3} parent=31 // pred_check
          %p597 = pneg %p199
        $region46: #{causal_self_attention.3} parent=31 // pred_check_branch
          %599 = sbr.rel (%p597) target = $region48
        $region47: #{causal_self_attention.3} parent=31 // pred_region
          _
        $region48: #{causal_self_attention.3} parent=31 // pred_fallthru
          _
      $region32: #{causal_self_attention.3} parent=5 // pred_fallthru
        _
      %p600 = scmp.le.s32.totalorder 2, %s13
      // Predicated region
      $region49: #{causal_self_attention.3} parent=5 // pred_check
        %p601 = pneg %p600
      $region50: #{causal_self_attention.3} parent=5 // pred_check_branch
        %603 = sbr.rel (%p601) target = $region52
      $region51: #{causal_self_attention.3} parent=5 // pred_region
        %s604 = ssub.s32 %s13, 2
        // Predicated region
        $region53: #{causal_self_attention.3} parent=51 // pred_check
          %p605 = pneg %p145
        $region54: #{causal_self_attention.3} parent=51 // pred_check_branch
          %607 = sbr.rel (%p605) target = $region56
        $region55: #{causal_self_attention.3} parent=51 // pred_region
          %p608 = scmp.lt.s32.totalorder %s27, 1
          %s609 = scalar_select %p608, %s27, 1
          %p610 = scmp.lt.s32.totalorder %s28, 0
          %s611 = scalar_select %p610, %s28, 0
          %p612 = scmp.lt.s32.totalorder %s26, 0
          %s613 = scalar_select %p612, %s26, 0
          %s614 = sadd.s32 %s613, %s611
          %s615 = sadd.s32 %s614, %s609
          %s616 = smul.addr %s615, 4
          %s617 = scalar_lea.vmem %s3, %s616
        $region56: #{causal_self_attention.3} parent=51 // pred_fallthru
          _
        // Predicated region
        $region57: #{causal_self_attention.3} parent=51 // pred_check
          %p618 = pneg %p175
        $region58: #{causal_self_attention.3} parent=51 // pred_check_branch
          %620 = sbr.rel (%p618) target = $region60
        $region59: #{causal_self_attention.3} parent=51 // pred_region
          %p621 = scmp.lt.s32.totalorder %s27, 1
          %s622 = scalar_select %p621, %s27, 1
          %p623 = scmp.lt.s32.totalorder %s28, 0
          %s624 = scalar_select %p623, %s28, 0
          %p625 = scmp.lt.s32.totalorder %s26, 0
          %s626 = scalar_select %p625, %s26, 0
          %s627 = sadd.s32 %s626, %s624
          %s628 = sadd.s32 %s627, %s622
          %s629 = smul.addr %s628, 4
          %s630 = scalar_lea.vmem %s4, %s629
        $region60: #{causal_self_attention.3} parent=51 // pred_fallthru
          _
        // Predicated region
        $region61: #{causal_self_attention.3} parent=51 // pred_check
          %p631 = pneg %p205
        $region62: #{causal_self_attention.3} parent=51 // pred_check_branch
          %633 = sbr.rel (%p631) target = $region64
        $region63: #{causal_self_attention.3} parent=51 // pred_region
          %p634 = scmp.lt.s32.totalorder %s27, 1
          %s635 = scalar_select %p634, %s27, 1
          %p636 = scmp.lt.s32.totalorder %s28, 0
          %s637 = scalar_select %p636, %s28, 0
          %p638 = scmp.lt.s32.totalorder %s26, 0
          %s639 = scalar_select %p638, %s26, 0
          %s640 = sadd.s32 %s639, %s637
          %s641 = sadd.s32 %s640, %s635
          %s642 = smul.addr %s641, 4
          %s643 = scalar_lea.vmem %s5, %s642
        $region64: #{causal_self_attention.3} parent=51 // pred_fallthru
          _
      $region52: #{causal_self_attention.3} parent=5 // pred_fallthru
        _
    $region6: #{causal_self_attention.3} parent=1 // loop_footer
      %s17 = sadd.s32 1, %s13
    $region7: #{causal_self_attention.3} parent=1 // loop_footer_branch
      %12 = sbr.rel target = $region3
    $region8: #{causal_self_attention.3} parent=1 // loop_exit
      _
    %644 = vsyncpa [#allocation3], 1
    %s645 = scalar_lea.sflag [#allocation3], 1
    %646 = vsyncpa %s645, 1

// kernel: causal_self_attention.4
$region0: #{causal_self_attention.4}
  #allocation0 [shape = 'u32[]', space=smem, size = 0x4, offset = 0x4, fixed_abs, tag = 'smem constant byte address 0x4 - core index']
  #allocation1 [shape = 'u32[144,128]{1,0:T(1,128)}', space=vmem, size = 0x12000, scoped, tag = 'internal scratch']
  #allocation2 [shape = 'f32[4,8,1]{2,1,0:T(8,128)}', space=vmem, size = 0x4000, scoped, tag = 'scratch operand']
  #allocation3 [shape = 'f32[4,8,1]{2,1,0:T(8,128)}', space=vmem, size = 0x4000, scoped, tag = 'scratch operand']
  #allocation4 [shape = 'f32[4,8,8]{2,1,0:T(8,128)}', space=vmem, size = 0x4000, scoped, tag = 'scratch operand']
  #allocation5 [shape = 's32[1]{0}', space=sflag, size = 0x4, scoped, tag = 'scoped memory for causal_self_attention.4']
  #allocation6 [shape = 's32[1]{0:T(128)S(6)}', space=smem, size = 0x200, scoped, tag = 'prefetched SMEM operand 0']
  #allocation7 [shape = 's32[1]{0:T(128)S(6)}', space=smem, size = 0x200, scoped, tag = 'prefetched SMEM operand 1']
  %s0 = inlined_call_operand.<no memory space> [shape: s32[1], index: 0, kind: input, shape index: {}, may-alias: {0,1}]
  %s1 = inlined_call_operand.<no memory space> [shape: s32[1], index: 1, kind: input, shape index: {}, may-alias: {0,1}]
  %s2 = inlined_call_operand.vmem [shape: bf16[2,8,32], index: 2, kind: input, shape index: {}]
  %s3 = inlined_call_operand.vmem [shape: bf16[2,8,32], index: 3, kind: input, shape index: {}]
  %s4 = inlined_call_operand.vmem [shape: bf16[2,8,32], index: 4, kind: input, shape index: {}]
  %s5 = inlined_call_operand.vmem [shape: bf16[2,8,32], index: 5, kind: output, shape index: {}]
  %s6 = sld [smem:[#allocation0]]
  $region57: #{causal_self_attention.4} parent=0
    _
  %s8 = ssub.s32 1, %s6
  %s9 = scalar_select 0, %s8, %s6
  %10 = sst [smem:[#allocation6]] %s0
  %11 = sst [smem:[#allocation7]] %s1
  loop: start=0, step=1, limit=4
  $region2: #{causal_self_attention.4} parent=0 // loop_pre_header
    _
  $region3: #{causal_self_attention.4} parent=0 // loop_header
    %s13 = sphi 0, %s17
    %p14 = scmp.ge.s32.totalorder %s13, 4
    %s20 = sphi 0, %s32
    %s21 = sphi 0, %s28
    %s22 = sphi 0, %s20
    %s23 = sphi 0, %s21
    %s24 = sphi 0, %s22
    %s25 = sphi 0, %s23
    %s39 = sphi 0, %s41
    %s42 = sphi 0, %s39
    %s43 = sphi 0, %s42
    %s59 = sphi 0, %s43
    %s69 = sphi 0, %s71
    %s72 = sphi 0, %s69
    %s73 = sphi 0, %s72
    %s89 = sphi 0, %s73
    %s99 = sphi 0, %s101
    %s102 = sphi 0, %s99
    %s103 = sphi 0, %s102
    %s119 = sphi 0, %s103
    %s129 = sphi 0, %s131
    %s132 = sphi 0, %s129
    %s133 = sphi 0, %s132
    %s149 = sphi 0, %s133
  $region4: #{causal_self_attention.4} parent=0 // loop_header_branch
    %16 = sbr.rel (%p14) target = $region8
  $region5: #{causal_self_attention.4} parent=0 // loop_body
    %s18 = ssub.s32 %s13, 1
    %s19 = ssub.s32 %s13, 2
    %s26 = sadd.s32 1, %s21
    %p27 = scmp.ge.s32.totalorder %s26, 1
    %s28 = scalar_select %p27, 0, %s26
    %s29 = sadd.s32 1, %s20
    %s30 = scalar_select %p27, %s29, %s20
    %p31 = scmp.ge.s32.totalorder %s30, 2
    %s32 = scalar_select %p31, 0, %s30
    %s33 = sld [smem:[#allocation6 + %s21]]
    %s34 = sld [smem:[#allocation6 + %s28]]
    %s35 = ssub.s32 %s20, %s32
    %s36 = ssub.s32 %s33, %s34
    %s37 = sor.u32 %s35, %s36
    %p38 = scmp.eq.s32.totalorder %s37, 0
    %s40 = sadd.s32 %s39, 1
    %s41 = scalar_select %p38, %s39, %s40
    %p44 = pneg %p38
    %p45 = scmp.eq.s32.totalorder %s13, 1
    %p46 = por %p44, %p45
    %p47 = scmp.ne.s32.totalorder %s39, %s42
    %p48 = scmp.eq.s32.totalorder %s13, 0
    %p49 = por %p47, %p48
    %p50 = scmp.ne.s32.totalorder %s39, %s42
    %p51 = scmp.eq.s32.totalorder %s18, 1
    %p52 = por %p50, %p51
    %p53 = scmp.ne.s32.totalorder %s42, %s43
    %p54 = scmp.eq.s32.totalorder %s18, 0
    %p55 = por %p53, %p54
    %p56 = scmp.ne.s32.totalorder %s42, %s43
    %p57 = scmp.eq.s32.totalorder %s19, 1
    %p58 = por %p56, %p57
    %p60 = scmp.ne.s32.totalorder %s43, %s59
    %p61 = scmp.eq.s32.totalorder %s19, 0
    %p62 = por %p60, %p61
    %s63 = sld [smem:[#allocation7 + %s21]]
    %s64 = sld [smem:[#allocation7 + %s28]]
    %s65 = ssub.s32 %s20, %s32
    %s66 = ssub.s32 %s63, %s64
    %s67 = sor.u32 %s65, %s66
    %p68 = scmp.eq.s32.totalorder %s67, 0
    %s70 = sadd.s32 %s69, 1
    %s71 = scalar_select %p68, %s69, %s70
    %p74 = pneg %p68
    %p75 = scmp.eq.s32.totalorder %s13, 1
    %p76 = por %p74, %p75
    %p77 = scmp.ne.s32.totalorder %s69, %s72
    %p78 = scmp.eq.s32.totalorder %s13, 0
    %p79 = por %p77, %p78
    %p80 = scmp.ne.s32.totalorder %s69, %s72
    %p81 = scmp.eq.s32.totalorder %s18, 1
    %p82 = por %p80, %p81
    %p83 = scmp.ne.s32.totalorder %s72, %s73
    %p84 = scmp.eq.s32.totalorder %s18, 0
    %p85 = por %p83, %p84
    %p86 = scmp.ne.s32.totalorder %s72, %s73
    %p87 = scmp.eq.s32.totalorder %s19, 1
    %p88 = por %p86, %p87
    %p90 = scmp.ne.s32.totalorder %s73, %s89
    %p91 = scmp.eq.s32.totalorder %s19, 0
    %p92 = por %p90, %p91
    %s93 = sld [smem:[#allocation7 + %s21]]
    %s94 = sld [smem:[#allocation7 + %s28]]
    %s95 = ssub.s32 %s20, %s32
    %s96 = ssub.s32 %s93, %s94
    %s97 = sor.u32 %s95, %s96
    %p98 = scmp.eq.s32.totalorder %s97, 0
    %s100 = sadd.s32 %s99, 1
    %s101 = scalar_select %p98, %s99, %s100
    %p104 = pneg %p98
    %p105 = scmp.eq.s32.totalorder %s13, 1
    %p106 = por %p104, %p105
    %p107 = scmp.ne.s32.totalorder %s99, %s102
    %p108 = scmp.eq.s32.totalorder %s13, 0
    %p109 = por %p107, %p108
    %p110 = scmp.ne.s32.totalorder %s99, %s102
    %p111 = scmp.eq.s32.totalorder %s18, 1
    %p112 = por %p110, %p111
    %p113 = scmp.ne.s32.totalorder %s102, %s103
    %p114 = scmp.eq.s32.totalorder %s18, 0
    %p115 = por %p113, %p114
    %p116 = scmp.ne.s32.totalorder %s102, %s103
    %p117 = scmp.eq.s32.totalorder %s19, 1
    %p118 = por %p116, %p117
    %p120 = scmp.ne.s32.totalorder %s103, %s119
    %p121 = scmp.eq.s32.totalorder %s19, 0
    %p122 = por %p120, %p121
    %s123 = sld [smem:[#allocation6 + %s21]]
    %s124 = sld [smem:[#allocation6 + %s28]]
    %s125 = ssub.s32 %s20, %s32
    %s126 = ssub.s32 %s123, %s124
    %s127 = sor.u32 %s125, %s126
    %p128 = scmp.eq.s32.totalorder %s127, 0
    %s130 = sadd.s32 %s129, 1
    %s131 = scalar_select %p128, %s129, %s130
    %p134 = pneg %p128
    %p135 = scmp.eq.s32.totalorder %s13, 1
    %p136 = por %p134, %p135
    %p137 = scmp.ne.s32.totalorder %s129, %s132
    %p138 = scmp.eq.s32.totalorder %s13, 0
    %p139 = por %p137, %p138
    %p140 = scmp.ne.s32.totalorder %s129, %s132
    %p141 = scmp.eq.s32.totalorder %s18, 1
    %p142 = por %p140, %p141
    %p143 = scmp.ne.s32.totalorder %s132, %s133
    %p144 = scmp.eq.s32.totalorder %s18, 0
    %p145 = por %p143, %p144
    %p146 = scmp.ne.s32.totalorder %s132, %s133
    %p147 = scmp.eq.s32.totalorder %s19, 1
    %p148 = por %p146, %p147
    %p150 = scmp.ne.s32.totalorder %s133, %s149
    %p151 = scmp.eq.s32.totalorder %s19, 0
    %p152 = por %p150, %p151
    %p153 = scmp.le.s32.totalorder 1, %s13
    %p154 = scmp.lt.s32.totalorder %s13, 3
    %p155 = pnand %p153, %p154
    %p156 = pneg %p155
    // Predicated region
    $region9: #{causal_self_attention.4} parent=5 // pred_check
      _
    $region10: #{causal_self_attention.4} parent=5 // pred_check_branch
      %158 = sbr.rel (%p155) target = $region12
    $region11: #{causal_self_attention.4} parent=5 // pred_region
      %s159 = ssub.s32 %s13, 1
    $region12: #{causal_self_attention.4} parent=5 // pred_fallthru
      _
    %p160 = scmp.lt.s32.totalorder %s13, 2
    // Predicated region
    $region13: #{causal_self_attention.4} parent=5 // pred_check
      %p161 = pneg %p160
    $region14: #{causal_self_attention.4} parent=5 // pred_check_branch
      %163 = sbr.rel (%p161) target = $region16
    $region15: #{causal_self_attention.4} parent=5 // pred_region
      // Predicated region
      $region17: #{causal_self_attention.4} parent=15 // pred_check
        %p164 = pneg %p49
      $region18: #{causal_self_attention.4} parent=15 // pred_check_branch
        %166 = sbr.rel (%p164) target = $region20
      $region19: #{causal_self_attention.4} parent=15 // pred_region
        %s167 = sld [smem:[#allocation6 + %s21]]
        %p168 = scmp.lt.s32.totalorder %s20, 1
        %s169 = scalar_select %p168, %s20, 1
        %p170 = scmp.lt.s32.totalorder %s167, 0
        %s171 = scalar_select %p170, %s167, 0
        %s172 = sadd.s32 %s171, %s169
        %s173 = smul.addr %s172, 4
        %s174 = scalar_lea.vmem %s2, %s173
        %s175 = sld [smem:[#allocation6 + %s21]]
      $region20: #{causal_self_attention.4} parent=15 // pred_fallthru
        _
      // Predicated region
      $region21: #{causal_self_attention.4} parent=15 // pred_check
        %p176 = pneg %p79
      $region22: #{causal_self_attention.4} parent=15 // pred_check_branch
        %178 = sbr.rel (%p176) target = $region24
      $region23: #{causal_self_attention.4} parent=15 // pred_region
        %s179 = sld [smem:[#allocation7 + %s21]]
        %p180 = scmp.lt.s32.totalorder %s20, 1
        %s181 = scalar_select %p180, %s20, 1
        %p182 = scmp.lt.s32.totalorder %s179, 0
        %s183 = scalar_select %p182, %s179, 0
        %s184 = sadd.s32 %s183, %s181
        %s185 = smul.addr %s184, 4
        %s186 = scalar_lea.vmem %s3, %s185
        %s187 = sld [smem:[#allocation7 + %s21]]
      $region24: #{causal_self_attention.4} parent=15 // pred_fallthru
        _
      // Predicated region
      $region25: #{causal_self_attention.4} parent=15 // pred_check
        %p188 = pneg %p109
      $region26: #{causal_self_attention.4} parent=15 // pred_check_branch
        %190 = sbr.rel (%p188) target = $region28
      $region27: #{causal_self_attention.4} parent=15 // pred_region
        %s191 = sld [smem:[#allocation7 + %s21]]
        %p192 = scmp.lt.s32.totalorder %s20, 1
        %s193 = scalar_select %p192, %s20, 1
        %p194 = scmp.lt.s32.totalorder %s191, 0
        %s195 = scalar_select %p194, %s191, 0
        %s196 = sadd.s32 %s195, %s193
        %s197 = smul.addr %s196, 4
        %s198 = scalar_lea.vmem %s4, %s197
        %s199 = sld [smem:[#allocation7 + %s21]]
      $region28: #{causal_self_attention.4} parent=15 // pred_fallthru
        _
    $region16: #{causal_self_attention.4} parent=5 // pred_fallthru
      _
    %p200 = scmp.le.s32.totalorder 1, %s13
    %p201 = scmp.lt.s32.totalorder %s13, 3
    %p202 = pnand %p200, %p201
    %p203 = pneg %p202
    // Predicated region
    $region29: #{causal_self_attention.4} parent=5 // pred_check
      _
    $region30: #{causal_self_attention.4} parent=5 // pred_check_branch
      %205 = sbr.rel (%p202) target = $region32
    $region31: #{causal_self_attention.4} parent=5 // pred_region
      %s206 = ssub.s32 %s13, 1
      %s207 = sld [smem:[#allocation6 + %s23]]
      %p208 = scmp.lt.s32.totalorder %s22, 1
      %s209 = scalar_select %p208, %s22, 1
      %p210 = scmp.lt.s32.totalorder %s207, 0
      %s211 = scalar_select %p210, %s207, 0
      %s212 = sadd.s32 %s211, %s209
      %s213 = smul.addr %s212, 4
      %s214 = scalar_lea.vmem %s2, %s213
      %p215 = pneg %p55
      %p216 = pneg %p52
      %s217 = sld [smem:[#allocation7 + %s23]]
      %p218 = scmp.lt.s32.totalorder %s22, 1
      %s219 = scalar_select %p218, %s22, 1
      %p220 = scmp.lt.s32.totalorder %s217, 0
      %s221 = scalar_select %p220, %s217, 0
      %s222 = sadd.s32 %s221, %s219
      %s223 = smul.addr %s222, 4
      %s224 = scalar_lea.vmem %s3, %s223
      %p225 = pneg %p85
      %p226 = pneg %p82
      %s227 = sld [smem:[#allocation7 + %s23]]
      %p228 = scmp.lt.s32.totalorder %s22, 1
      %s229 = scalar_select %p228, %s22, 1
      %p230 = scmp.lt.s32.totalorder %s227, 0
      %s231 = scalar_select %p230, %s227, 0
      %s232 = sadd.s32 %s231, %s229
      %s233 = smul.addr %s232, 4
      %s234 = scalar_lea.vmem %s4, %s233
      %p235 = pneg %p115
      %p236 = pneg %p112
      %p237 = pneg %p145
      %p238 = pneg %p142
      %s239 = sld [smem:[#allocation6 + %s23]]
      %p240 = scmp.lt.s32.totalorder %s22, 1
      %s241 = scalar_select %p240, %s22, 1
      %p242 = scmp.lt.s32.totalorder %s239, 0
      %s243 = scalar_select %p242, %s239, 0
      %s244 = sadd.s32 %s243, %s241
      %s245 = smul.addr %s244, 4
      %s246 = scalar_lea.vmem %s5, %s245
      %s247 = sld [smem:[#allocation6 + %s23]]
      %p248 = scmp.lt.s32.totalorder %s22, 1
      %s249 = scalar_select %p248, %s22, 1
      %p250 = scmp.lt.s32.totalorder %s247, 0
      %s251 = scalar_select %p250, %s247, 0
      %s252 = sadd.s32 %s251, %s249
      %s253 = smul.addr %s252, 4
      %s254 = scalar_lea.vmem %s2, %s253
      %s255 = sld [smem:[#allocation6 + %s23]]
      %s256 = sld [smem:[#allocation7 + %s23]]
      %p257 = scmp.lt.s32.totalorder %s22, 1
      %s258 = scalar_select %p257, %s22, 1
      %p259 = scmp.lt.s32.totalorder %s256, 0
      %s260 = scalar_select %p259, %s256, 0
      %s261 = sadd.s32 %s260, %s258
      %s262 = smul.addr %s261, 4
      %s263 = scalar_lea.vmem %s3, %s262
      %s264 = sld [smem:[#allocation7 + %s23]]
      %s265 = sld [smem:[#allocation7 + %s23]]
      %p266 = scmp.lt.s32.totalorder %s22, 1
      %s267 = scalar_select %p266, %s22, 1
      %p268 = scmp.lt.s32.totalorder %s265, 0
      %s269 = scalar_select %p268, %s265, 0
      %s270 = sadd.s32 %s269, %s267
      %s271 = smul.addr %s270, 4
      %s272 = scalar_lea.vmem %s4, %s271
      %s273 = sld [smem:[#allocation7 + %s23]]
      %s274 = sld [smem:[#allocation6 + %s23]]
      %p275 = scmp.lt.s32.totalorder %s22, 1
      %s276 = scalar_select %p275, %s22, 1
      %p277 = scmp.lt.s32.totalorder %s274, 0
      %s278 = scalar_select %p277, %s274, 0
      %s279 = sadd.s32 %s278, %s276
      %s280 = smul.addr %s279, 4
      %s281 = scalar_lea.vmem %s5, %s280
      %s282 = sld [smem:[#allocation6 + %s23]]
      %s284 = sld [smem:[#allocation6 + %s23]]
      %s285 = sld [smem:[#allocation7 + %s23]]
      %p286 = scmp.eq.s32.totalorder %s285, 0
      // Predicated region
      $region33: #{causal_self_attention.4} parent=31 // pred_check
        %p287 = pneg %p286
      $region34: #{causal_self_attention.4} parent=31 // pred_check_branch
        %289 = sbr.rel (%p287) target = $region36
      $region35: #{causal_self_attention.4} parent=31 // pred_region
        %vm290 = vcmask 7168
        %291 = vst.msk [vmem:[#allocation2] sm:$0xff] %vm290, -1e+30
        %292 = vst.msk [vmem:[#allocation2 + $0x8] sm:$0xff] %vm290, -1e+30
        %293 = vst.msk [vmem:[#allocation2 + $0x10] sm:$0xff] %vm290, -1e+30
        %294 = vst.msk [vmem:[#allocation2 + $0x18] sm:$0xff] %vm290, -1e+30
        %295 = vst.msk [vmem:[#allocation3] sm:$0xff] %vm290, 0.0
        %296 = vst.msk [vmem:[#allocation3 + $0x8] sm:$0xff] %vm290, 0.0
        %297 = vst.msk [vmem:[#allocation3 + $0x10] sm:$0xff] %vm290, 0.0
        %298 = vst.msk [vmem:[#allocation3 + $0x18] sm:$0xff] %vm290, 0.0
        %vm299 = vcmask 64512
        %300 = vst.msk [vmem:[#allocation4] sm:$0xff] %vm299, 0.0
        %301 = vst.msk [vmem:[#allocation4 + $0x8] sm:$0xff] %vm299, 0.0
        %302 = vst.msk [vmem:[#allocation4 + $0x10] sm:$0xff] %vm299, 0.0
        %303 = vst.msk [vmem:[#allocation4 + $0x18] sm:$0xff] %vm299, 0.0
      $region36: #{causal_self_attention.4} parent=31 // pred_fallthru
        _
      %p304 = scmp.lt.s32.totalorder %s285, %s284
      // Predicated region
      $region37: #{causal_self_attention.4} parent=31 // pred_check
        %p305 = pneg %p304
      $region38: #{causal_self_attention.4} parent=31 // pred_check_branch
        %307 = sbr.rel (%p305) target = $region40
      $region39: #{causal_self_attention.4} parent=31 // pred_region
        %v308 = vld [vmem:[%s254] sm:$0xf]
        %v309 = vld [vmem:[%s263] sm:$0xf]
        %v310 = vld [vmem:[%s272] sm:$0xf]
        %vm311 = vcmask 64512
        %v313 = vsel %vm311, %v308, 0
        %v316 = vsel %vm311, %v309, 0
        %318 = vmatprep.subr.bf16.mxu0 0
        %319 = vmatpush1.bf16.xpose.msra.mxu0 %v316
        %320 = vmatprep.subr.bf16.mxu0 0
        %321 = vmatpush1.bf16.xpose.msra.mxu0 0
        %322 = vmatprep.subr.bf16.mxu0 0
        %323 = vmatpush1.bf16.xpose.msra.mxu0 0
        %324 = vmatprep.subr.bf16.mxu0 0
        %325 = vmatpush1.bf16.xpose.msra.mxu0 0
        %326 = vmatprep.subr.bf16.mxu0 0
        %327 = vmatpush1.bf16.xpose.msra.mxu0 0
        %328 = vmatprep.subr.bf16.mxu0 0
        %329 = vmatpush1.bf16.xpose.msra.mxu0 0
        %330 = vmatprep.subr.bf16.mxu0 0
        %331 = vmatpush1.bf16.xpose.msra.mxu0 0
        %332 = vmatprep.subr.bf16.mxu0 0
        %333 = vmatpush1.bf16.xpose.msra.mxu0 0
        %334 = vmatprep.subr.bf16.mxu0 0
        %335 = vmatpush1.bf16.xpose.msra.mxu0 0
        %336 = vmatprep.subr.bf16.mxu0 0
        %337 = vmatpush1.bf16.xpose.msra.mxu0 0
        %338 = vmatprep.subr.bf16.mxu0 0
        %339 = vmatpush1.bf16.xpose.msra.mxu0 0
        %340 = vmatprep.subr.bf16.mxu0 0
        %341 = vmatpush1.bf16.xpose.msra.mxu0 0
        %342 = vmatprep.subr.bf16.mxu0 0
        %343 = vmatpush1.bf16.xpose.msra.mxu0 0
        %344 = vmatprep.subr.bf16.mxu0 0
        %345 = vmatpush1.bf16.xpose.msra.mxu0 0
        %346 = vmatprep.subr.bf16.mxu0 0
        %347 = vmatpush1.bf16.xpose.msra.mxu0 0
        %348 = vmatprep.subr.bf16.mxu0 0
        %349 = vmatpush1.bf16.xpose.msra.mxu0 0
        %350 = vmatprep.mubr.bf16.mxu0 0
        %351 = vmatmul.mubr.bf16.gmra.mrb[0].mxu0 %v313
        %v352 = vpop.f32.mrb[0].mxu0
        %v353 = vadd.f32 0.0, %v352
        %v354 = vpop.f32.mrb[0].mxu0
        %v355 = vpop.f32.mrb[0].mxu0
        %v356 = vpop.f32.mrb[0].mxu0
        %357 = vdwg.mxu0
        %v358 = vld [vmem:[#allocation2] sm:$0xff]
        %v359 = vsel %vm311, %v353, -inf
        %360 = vmax.xlane.f32.xlu0 %v359
        %v361 = vpop.xlane.xlu0 %360
        %v362 = vmax.f32 %v358, %v361
        %v363 = vsub.f32 %v358, %v362
        %v364 = vmul.f32 %v363, 1.442695
        %v365 = vpow.pop %v364
        %367 = vset.pattern.permute.xlu0 0
        %368 = vperm.xlu0 %367, %v362
        %v369 = vpop.permute.xlu0 %368
        %v371 = vsub.f32 %v353, %v369
        %v372 = vmul.f32 %v371, 1.442695
        %v373 = vpow.pop %v372
        %v374 = vld [vmem:[#allocation3] sm:$0xff]
        %v375 = vmul.f32 %v365, %v374
        %v376 = vsel %vm311, %v373, 0.0
        %377 = vadd.xlane.f32.xlu0 %v376
        %v378 = vpop.xlane.xlu0 %377
        %v379 = vadd.f32 %v375, %v378
        %vm380 = vcmask 7168
        %381 = vst.msk [vmem:[#allocation3] sm:$0xff] %vm380, %v379
        %v382 = vld [vmem:[#allocation4] sm:$0xff]
        %384 = vset.pattern.permute.xlu0 0
        %385 = vperm.xlu0 %384, %v365
        %v386 = vpop.permute.xlu0 %385
        %v388 = vmul.f32 %v386, %v382
        %v389 = vpack.c.bf16 %v373, %v373
        %v391 = vsel %vm311, %v389, 0
        %vm393 = vcmask 1043456
        %v395 = vsel %vm393, %v310, 0
        %397 = vmatprep.subr.bf16.mxu0 0
        %398 = vmatpush1.bf16.msra.mxu0 %v395
        %399 = vmatprep.subr.bf16.mxu0 0
        %400 = vmatpush1.bf16.msra.mxu0 0
        %401 = vmatprep.subr.bf16.mxu0 0
        %402 = vmatpush1.bf16.msra.mxu0 0
        %403 = vmatprep.subr.bf16.mxu0 0
        %404 = vmatpush1.bf16.msra.mxu0 0
        %405 = vmatprep.subr.bf16.mxu0 0
        %406 = vmatpush1.bf16.msra.mxu0 0
        %407 = vmatprep.subr.bf16.mxu0 0
        %408 = vmatpush1.bf16.msra.mxu0 0
        %409 = vmatprep.subr.bf16.mxu0 0
        %410 = vmatpush1.bf16.msra.mxu0 0
        %411 = vmatprep.subr.bf16.mxu0 0
        %412 = vmatpush1.bf16.msra.mxu0 0
        %413 = vmatprep.subr.bf16.mxu0 0
        %414 = vmatpush1.bf16.msra.mxu0 0
        %415 = vmatprep.subr.bf16.mxu0 0
        %416 = vmatpush1.bf16.msra.mxu0 0
        %417 = vmatprep.subr.bf16.mxu0 0
        %418 = vmatpush1.bf16.msra.mxu0 0
        %419 = vmatprep.subr.bf16.mxu0 0
        %420 = vmatpush1.bf16.msra.mxu0 0
        %421 = vmatprep.subr.bf16.mxu0 0
        %422 = vmatpush1.bf16.msra.mxu0 0
        %423 = vmatprep.subr.bf16.mxu0 0
        %424 = vmatpush1.bf16.msra.mxu0 0
        %425 = vmatprep.subr.bf16.mxu0 0
        %426 = vmatpush1.bf16.msra.mxu0 0
        %427 = vmatprep.subr.bf16.mxu0 0
        %428 = vmatpush1.bf16.msra.mxu0 0
        %429 = vmatprep.mubr.bf16.mxu0 0
        %430 = vmatmul.mubr.bf16.gmra.mrb[0].mxu0 %v391
        %v431 = vpop.f32.mrb[0].mxu0
        %v432 = vadd.f32 0.0, %v431
        %v433 = vpop.f32.mrb[0].mxu0
        %v434 = vpop.f32.mrb[0].mxu0
        %v435 = vpop.f32.mrb[0].mxu0
        %436 = vdwg.mxu0
        %v437 = vadd.f32 %v388, %v432
        %438 = vst.msk [vmem:[#allocation4] sm:$0xff] %vm311, %v437
        %439 = vst.msk [vmem:[#allocation2] sm:$0xff] %vm380, %v362
        %v441 = vunpack.c.l.b16 %v308
        %v442 = vpack.c.b16 %v441, %v441
        %443 = vrot.lane.b32.xlu0 %v442, 120
        %v444 = vpop.permute.xlu0 %443
        %v446 = vunpack.c.l.b16 %v309
        %v447 = vpack.c.b16 %v446, %v446
        %448 = vrot.lane.b32.xlu0 %v447, 120
        %v449 = vpop.permute.xlu0 %448
        %v451 = vsel %vm311, %v444, 0
        %v454 = vsel %vm311, %v449, 0
        %456 = vmatprep.subr.bf16.mxu0 0
        %457 = vmatpush1.bf16.xpose.msra.mxu0 %v454
        %458 = vmatprep.subr.bf16.mxu0 0
        %459 = vmatpush1.bf16.xpose.msra.mxu0 0
        %460 = vmatprep.subr.bf16.mxu0 0
        %461 = vmatpush1.bf16.xpose.msra.mxu0 0
        %462 = vmatprep.subr.bf16.mxu0 0
        %463 = vmatpush1.bf16.xpose.msra.mxu0 0
        %464 = vmatprep.subr.bf16.mxu0 0
        %465 = vmatpush1.bf16.xpose.msra.mxu0 0
        %466 = vmatprep.subr.bf16.mxu0 0
        %467 = vmatpush1.bf16.xpose.msra.mxu0 0
        %468 = vmatprep.subr.bf16.mxu0 0
        %469 = vmatpush1.bf16.xpose.msra.mxu0 0
        %470 = vmatprep.subr.bf16.mxu0 0
        %471 = vmatpush1.bf16.xpose.msra.mxu0 0
        %472 = vmatprep.subr.bf16.mxu0 0
        %473 = vmatpush1.bf16.xpose.msra.mxu0 0
        %474 = vmatprep.subr.bf16.mxu0 0
        %475 = vmatpush1.bf16.xpose.msra.mxu0 0
        %476 = vmatprep.subr.bf16.mxu0 0
        %477 = vmatpush1.bf16.xpose.msra.mxu0 0
        %478 = vmatprep.subr.bf16.mxu0 0
        %479 = vmatpush1.bf16.xpose.msra.mxu0 0
        %480 = vmatprep.subr.bf16.mxu0 0
        %481 = vmatpush1.bf16.xpose.msra.mxu0 0
        %482 = vmatprep.subr.bf16.mxu0 0
        %483 = vmatpush1.bf16.xpose.msra.mxu0 0
        %484 = vmatprep.subr.bf16.mxu0 0
        %485 = vmatpush1.bf16.xpose.msra.mxu0 0
        %486 = vmatprep.subr.bf16.mxu0 0
        %487 = vmatpush1.bf16.xpose.msra.mxu0 0
        %488 = vmatprep.mubr.bf16.mxu0 0
        %489 = vmatmul.mubr.bf16.gmra.mrb[0].mxu0 %v451
        %v490 = vpop.f32.mrb[0].mxu0
        %v491 = vadd.f32 0.0, %v490
        %v492 = vpop.f32.mrb[0].mxu0
        %v493 = vpop.f32.mrb[0].mxu0
        %v494 = vpop.f32.mrb[0].mxu0
        %495 = vdwg.mxu0
        %s496 = scalar_lea.vmem [#allocation2], 8
        %v497 = vld [vmem:[%s496] sm:$0xff]
        %v498 = vsel %vm311, %v491, -inf
        %499 = vmax.xlane.f32.xlu0 %v498
        %v500 = vpop.xlane.xlu0 %499
        %v501 = vmax.f32 %v497, %v500
        %v502 = vsub.f32 %v497, %v501
        %v503 = vmul.f32 %v502, 1.442695
        %v504 = vpow.pop %v503
        %506 = vset.pattern.permute.xlu0 0
        %507 = vperm.xlu0 %506, %v501
        %v508 = vpop.permute.xlu0 %507
        %v510 = vsub.f32 %v491, %v508
        %v511 = vmul.f32 %v510, 1.442695
        %v512 = vpow.pop %v511
        %s513 = scalar_lea.vmem [#allocation3], 8
        %v514 = vld [vmem:[%s513] sm:$0xff]
        %v515 = vmul.f32 %v504, %v514
        %v516 = vsel %vm311, %v512, 0.0
        %517 = vadd.xlane.f32.xlu0 %v516
        %v518 = vpop.xlane.xlu0 %517
        %v519 = vadd.f32 %v515, %v518
        %520 = vst.msk [vmem:[%s513] sm:$0xff] %vm380, %v519
        %s521 = scalar_lea.vmem [#allocation4], 8
        %v522 = vld [vmem:[%s521] sm:$0xff]
        %524 = vset.pattern.permute.xlu0 0
        %525 = vperm.xlu0 %524, %v504
        %v526 = vpop.permute.xlu0 %525
        %v528 = vmul.f32 %v526, %v522
        %v529 = vpack.c.bf16 %v512, %v512
        %v531 = vunpack.c.l.b16 %v310
        %v532 = vpack.c.b16 %v531, %v531
        %533 = vrot.lane.b32.xlu0 %v532, 120
        %v534 = vpop.permute.xlu0 %533
        %v536 = vsel %vm311, %v529, 0
        %v539 = vsel %vm393, %v534, 0
        %541 = vmatprep.subr.bf16.mxu0 0
        %542 = vmatpush1.bf16.msra.mxu0 %v539
        %543 = vmatprep.subr.bf16.mxu0 0
        %544 = vmatpush1.bf16.msra.mxu0 0
        %545 = vmatprep.subr.bf16.mxu0 0
        %546 = vmatpush1.bf16.msra.mxu0 0
        %547 = vmatprep.subr.bf16.mxu0 0
        %548 = vmatpush1.bf16.msra.mxu0 0
        %549 = vmatprep.subr.bf16.mxu0 0
        %550 = vmatpush1.bf16.msra.mxu0 0
        %551 = vmatprep.subr.bf16.mxu0 0
        %552 = vmatpush1.bf16.msra.mxu0 0
        %553 = vmatprep.subr.bf16.mxu0 0
        %554 = vmatpush1.bf16.msra.mxu0 0
        %555 = vmatprep.subr.bf16.mxu0 0
        %556 = vmatpush1.bf16.msra.mxu0 0
        %557 = vmatprep.subr.bf16.mxu0 0
        %558 = vmatpush1.bf16.msra.mxu0 0
        %559 = vmatprep.subr.bf16.mxu0 0
        %560 = vmatpush1.bf16.msra.mxu0 0
        %561 = vmatprep.subr.bf16.mxu0 0
        %562 = vmatpush1.bf16.msra.mxu0 0
        %563 = vmatprep.subr.bf16.mxu0 0
        %564 = vmatpush1.bf16.msra.mxu0 0
        %565 = vmatprep.subr.bf16.mxu0 0
        %566 = vmatpush1.bf16.msra.mxu0 0
        %567 = vmatprep.subr.bf16.mxu0 0
        %568 = vmatpush1.bf16.msra.mxu0 0
        %569 = vmatprep.subr.bf16.mxu0 0
        %570 = vmatpush1.bf16.msra.mxu0 0
        %571 = vmatprep.subr.bf16.mxu0 0
        %572 = vmatpush1.bf16.msra.mxu0 0
        %573 = vmatprep.mubr.bf16.mxu0 0
        %574 = vmatmul.mubr.bf16.gmra.mrb[0].mxu0 %v536
        %v575 = vpop.f32.mrb[0].mxu0
        %v576 = vadd.f32 0.0, %v575
        %v577 = vpop.f32.mrb[0].mxu0
        %v578 = vpop.f32.mrb[0].mxu0
        %v579 = vpop.f32.mrb[0].mxu0
        %580 = vdwg.mxu0
        %v581 = vadd.f32 %v528, %v576
        %582 = vst.msk [vmem:[%s521] sm:$0xff] %vm311, %v581
        %583 = vst.msk [vmem:[%s496] sm:$0xff] %vm380, %v501
        %584 = vrot.lane.b32.xlu0 %v442, 112
        %v585 = vpop.permute.xlu0 %584
        %586 = vrot.lane.b32.xlu0 %v447, 112
        %v587 = vpop.permute.xlu0 %586
        %v589 = vsel %vm311, %v585, 0
        %v592 = vsel %vm311, %v587, 0
        %594 = vmatprep.subr.bf16.mxu0 0
        %595 = vmatpush1.bf16.xpose.msra.mxu0 %v592
        %596 = vmatprep.subr.bf16.mxu0 0
        %597 = vmatpush1.bf16.xpose.msra.mxu0 0
        %598 = vmatprep.subr.bf16.mxu0 0
        %599 = vmatpush1.bf16.xpose.msra.mxu0 0
        %600 = vmatprep.subr.bf16.mxu0 0
        %601 = vmatpush1.bf16.xpose.msra.mxu0 0
        %602 = vmatprep.subr.bf16.mxu0 0
        %603 = vmatpush1.bf16.xpose.msra.mxu0 0
        %604 = vmatprep.subr.bf16.mxu0 0
        %605 = vmatpush1.bf16.xpose.msra.mxu0 0
        %606 = vmatprep.subr.bf16.mxu0 0
        %607 = vmatpush1.bf16.xpose.msra.mxu0 0
        %608 = vmatprep.subr.bf16.mxu0 0
        %609 = vmatpush1.bf16.xpose.msra.mxu0 0
        %610 = vmatprep.subr.bf16.mxu0 0
        %611 = vmatpush1.bf16.xpose.msra.mxu0 0
        %612 = vmatprep.subr.bf16.mxu0 0
        %613 = vmatpush1.bf16.xpose.msra.mxu0 0
        %614 = vmatprep.subr.bf16.mxu0 0
        %615 = vmatpush1.bf16.xpose.msra.mxu0 0
        %616 = vmatprep.subr.bf16.mxu0 0
        %617 = vmatpush1.bf16.xpose.msra.mxu0 0
        %618 = vmatprep.subr.bf16.mxu0 0
        %619 = vmatpush1.bf16.xpose.msra.mxu0 0
        %620 = vmatprep.subr.bf16.mxu0 0
        %621 = vmatpush1.bf16.xpose.msra.mxu0 0
        %622 = vmatprep.subr.bf16.mxu0 0
        %623 = vmatpush1.bf16.xpose.msra.mxu0 0
        %624 = vmatprep.subr.bf16.mxu0 0
        %625 = vmatpush1.bf16.xpose.msra.mxu0 0
        %626 = vmatprep.mubr.bf16.mxu0 0
        %627 = vmatmul.mubr.bf16.gmra.mrb[0].mxu0 %v589
        %v628 = vpop.f32.mrb[0].mxu0
        %v629 = vadd.f32 0.0, %v628
        %v630 = vpop.f32.mrb[0].mxu0
        %v631 = vpop.f32.mrb[0].mxu0
        %v632 = vpop.f32.mrb[0].mxu0
        %633 = vdwg.mxu0
        %s634 = scalar_lea.vmem [#allocation2], 16
        %v635 = vld [vmem:[%s634] sm:$0xff]
        %v636 = vsel %vm311, %v629, -inf
        %637 = vmax.xlane.f32.xlu0 %v636
        %v638 = vpop.xlane.xlu0 %637
        %v639 = vmax.f32 %v635, %v638
        %v640 = vsub.f32 %v635, %v639
        %v641 = vmul.f32 %v640, 1.442695
        %v642 = vpow.pop %v641
        %644 = vset.pattern.permute.xlu0 0
        %645 = vperm.xlu0 %644, %v639
        %v646 = vpop.permute.xlu0 %645
        %v648 = vsub.f32 %v629, %v646
        %v649 = vmul.f32 %v648, 1.442695
        %v650 = vpow.pop %v649
        %s651 = scalar_lea.vmem [#allocation3], 16
        %v652 = vld [vmem:[%s651] sm:$0xff]
        %v653 = vmul.f32 %v642, %v652
        %v654 = vsel %vm311, %v650, 0.0
        %655 = vadd.xlane.f32.xlu0 %v654
        %v656 = vpop.xlane.xlu0 %655
        %v657 = vadd.f32 %v653, %v656
        %658 = vst.msk [vmem:[%s651] sm:$0xff] %vm380, %v657
        %s659 = scalar_lea.vmem [#allocation4], 16
        %v660 = vld [vmem:[%s659] sm:$0xff]
        %662 = vset.pattern.permute.xlu0 0
        %663 = vperm.xlu0 %662, %v642
        %v664 = vpop.permute.xlu0 %663
        %v666 = vmul.f32 %v664, %v660
        %v667 = vpack.c.bf16 %v650, %v650
        %668 = vrot.lane.b32.xlu0 %v532, 112
        %v669 = vpop.permute.xlu0 %668
        %v671 = vsel %vm311, %v667, 0
        %v674 = vsel %vm393, %v669, 0
        %676 = vmatprep.subr.bf16.mxu0 0
        %677 = vmatpush1.bf16.msra.mxu0 %v674
        %678 = vmatprep.subr.bf16.mxu0 0
        %679 = vmatpush1.bf16.msra.mxu0 0
        %680 = vmatprep.subr.bf16.mxu0 0
        %681 = vmatpush1.bf16.msra.mxu0 0
        %682 = vmatprep.subr.bf16.mxu0 0
        %683 = vmatpush1.bf16.msra.mxu0 0
        %684 = vmatprep.subr.bf16.mxu0 0
        %685 = vmatpush1.bf16.msra.mxu0 0
        %686 = vmatprep.subr.bf16.mxu0 0
        %687 = vmatpush1.bf16.msra.mxu0 0
        %688 = vmatprep.subr.bf16.mxu0 0
        %689 = vmatpush1.bf16.msra.mxu0 0
        %690 = vmatprep.subr.bf16.mxu0 0
        %691 = vmatpush1.bf16.msra.mxu0 0
        %692 = vmatprep.subr.bf16.mxu0 0
        %693 = vmatpush1.bf16.msra.mxu0 0
        %694 = vmatprep.subr.bf16.mxu0 0
        %695 = vmatpush1.bf16.msra.mxu0 0
        %696 = vmatprep.subr.bf16.mxu0 0
        %697 = vmatpush1.bf16.msra.mxu0 0
        %698 = vmatprep.subr.bf16.mxu0 0
        %699 = vmatpush1.bf16.msra.mxu0 0
        %700 = vmatprep.subr.bf16.mxu0 0
        %701 = vmatpush1.bf16.msra.mxu0 0
        %702 = vmatprep.subr.bf16.mxu0 0
        %703 = vmatpush1.bf16.msra.mxu0 0
        %704 = vmatprep.subr.bf16.mxu0 0
        %705 = vmatpush1.bf16.msra.mxu0 0
        %706 = vmatprep.subr.bf16.mxu0 0
        %707 = vmatpush1.bf16.msra.mxu0 0
        %708 = vmatprep.mubr.bf16.mxu0 0
        %709 = vmatmul.mubr.bf16.gmra.mrb[0].mxu0 %v671
        %v710 = vpop.f32.mrb[0].mxu0
        %v711 = vadd.f32 0.0, %v710
        %v712 = vpop.f32.mrb[0].mxu0
        %v713 = vpop.f32.mrb[0].mxu0
        %v714 = vpop.f32.mrb[0].mxu0
        %715 = vdwg.mxu0
        %v716 = vadd.f32 %v666, %v711
        %717 = vst.msk [vmem:[%s659] sm:$0xff] %vm311, %v716
        %718 = vst.msk [vmem:[%s634] sm:$0xff] %vm380, %v639
        %719 = vrot.lane.b32.xlu0 %v442, 104
        %v720 = vpop.permute.xlu0 %719
        %721 = vrot.lane.b32.xlu0 %v447, 104
        %v722 = vpop.permute.xlu0 %721
        %v724 = vsel %vm311, %v720, 0
        %v727 = vsel %vm311, %v722, 0
        %729 = vmatprep.subr.bf16.mxu0 0
        %730 = vmatpush1.bf16.xpose.msra.mxu0 %v727
        %731 = vmatprep.subr.bf16.mxu0 0
        %732 = vmatpush1.bf16.xpose.msra.mxu0 0
        %733 = vmatprep.subr.bf16.mxu0 0
        %734 = vmatpush1.bf16.xpose.msra.mxu0 0
        %735 = vmatprep.subr.bf16.mxu0 0
        %736 = vmatpush1.bf16.xpose.msra.mxu0 0
        %737 = vmatprep.subr.bf16.mxu0 0
        %738 = vmatpush1.bf16.xpose.msra.mxu0 0
        %739 = vmatprep.subr.bf16.mxu0 0
        %740 = vmatpush1.bf16.xpose.msra.mxu0 0
        %741 = vmatprep.subr.bf16.mxu0 0
        %742 = vmatpush1.bf16.xpose.msra.mxu0 0
        %743 = vmatprep.subr.bf16.mxu0 0
        %744 = vmatpush1.bf16.xpose.msra.mxu0 0
        %745 = vmatprep.subr.bf16.mxu0 0
        %746 = vmatpush1.bf16.xpose.msra.mxu0 0
        %747 = vmatprep.subr.bf16.mxu0 0
        %748 = vmatpush1.bf16.xpose.msra.mxu0 0
        %749 = vmatprep.subr.bf16.mxu0 0
        %750 = vmatpush1.bf16.xpose.msra.mxu0 0
        %751 = vmatprep.subr.bf16.mxu0 0
        %752 = vmatpush1.bf16.xpose.msra.mxu0 0
        %753 = vmatprep.subr.bf16.mxu0 0
        %754 = vmatpush1.bf16.xpose.msra.mxu0 0
        %755 = vmatprep.subr.bf16.mxu0 0
        %756 = vmatpush1.bf16.xpose.msra.mxu0 0
        %757 = vmatprep.subr.bf16.mxu0 0
        %758 = vmatpush1.bf16.xpose.msra.mxu0 0
        %759 = vmatprep.subr.bf16.mxu0 0
        %760 = vmatpush1.bf16.xpose.msra.mxu0 0
        %761 = vmatprep.mubr.bf16.mxu0 0
        %762 = vmatmul.mubr.bf16.gmra.mrb[0].mxu0 %v724
        %v763 = vpop.f32.mrb[0].mxu0
        %v764 = vadd.f32 0.0, %v763
        %v765 = vpop.f32.mrb[0].mxu0
        %v766 = vpop.f32.mrb[0].mxu0
        %v767 = vpop.f32.mrb[0].mxu0
        %768 = vdwg.mxu0
        %s769 = scalar_lea.vmem [#allocation2], 24
        %v770 = vld [vmem:[%s769] sm:$0xff]
        %v771 = vsel %vm311, %v764, -inf
        %772 = vmax.xlane.f32.xlu0 %v771
        %v773 = vpop.xlane.xlu0 %772
        %v774 = vmax.f32 %v770, %v773
        %v775 = vsub.f32 %v770, %v774
        %v776 = vmul.f32 %v775, 1.442695
        %v777 = vpow.pop %v776
        %779 = vset.pattern.permute.xlu0 0
        %780 = vperm.xlu0 %779, %v774
        %v781 = vpop.permute.xlu0 %780
        %v783 = vsub.f32 %v764, %v781
        %v784 = vmul.f32 %v783, 1.442695
        %v785 = vpow.pop %v784
        %s786 = scalar_lea.vmem [#allocation3], 24
        %v787 = vld [vmem:[%s786] sm:$0xff]
        %v788 = vmul.f32 %v777, %v787
        %v789 = vsel %vm311, %v785, 0.0
        %790 = vadd.xlane.f32.xlu0 %v789
        %v791 = vpop.xlane.xlu0 %790
        %v792 = vadd.f32 %v788, %v791
        %793 = vst.msk [vmem:[%s786] sm:$0xff] %vm380, %v792
        %s794 = scalar_lea.vmem [#allocation4], 24
        %v795 = vld [vmem:[%s794] sm:$0xff]
        %797 = vset.pattern.permute.xlu0 0
        %798 = vperm.xlu0 %797, %v777
        %v799 = vpop.permute.xlu0 %798
        %v801 = vmul.f32 %v799, %v795
        %v802 = vpack.c.bf16 %v785, %v785
        %803 = vrot.lane.b32.xlu0 %v532, 104
        %v804 = vpop.permute.xlu0 %803
        %v806 = vsel %vm311, %v802, 0
        %v809 = vsel %vm393, %v804, 0
        %811 = vmatprep.subr.bf16.mxu0 0
        %812 = vmatpush1.bf16.msra.mxu0 %v809
        %813 = vmatprep.subr.bf16.mxu0 0
        %814 = vmatpush1.bf16.msra.mxu0 0
        %815 = vmatprep.subr.bf16.mxu0 0
        %816 = vmatpush1.bf16.msra.mxu0 0
        %817 = vmatprep.subr.bf16.mxu0 0
        %818 = vmatpush1.bf16.msra.mxu0 0
        %819 = vmatprep.subr.bf16.mxu0 0
        %820 = vmatpush1.bf16.msra.mxu0 0
        %821 = vmatprep.subr.bf16.mxu0 0
        %822 = vmatpush1.bf16.msra.mxu0 0
        %823 = vmatprep.subr.bf16.mxu0 0
        %824 = vmatpush1.bf16.msra.mxu0 0
        %825 = vmatprep.subr.bf16.mxu0 0
        %826 = vmatpush1.bf16.msra.mxu0 0
        %827 = vmatprep.subr.bf16.mxu0 0
        %828 = vmatpush1.bf16.msra.mxu0 0
        %829 = vmatprep.subr.bf16.mxu0 0
        %830 = vmatpush1.bf16.msra.mxu0 0
        %831 = vmatprep.subr.bf16.mxu0 0
        %832 = vmatpush1.bf16.msra.mxu0 0
        %833 = vmatprep.subr.bf16.mxu0 0
        %834 = vmatpush1.bf16.msra.mxu0 0
        %835 = vmatprep.subr.bf16.mxu0 0
        %836 = vmatpush1.bf16.msra.mxu0 0
        %837 = vmatprep.subr.bf16.mxu0 0
        %838 = vmatpush1.bf16.msra.mxu0 0
        %839 = vmatprep.subr.bf16.mxu0 0
        %840 = vmatpush1.bf16.msra.mxu0 0
        %841 = vmatprep.subr.bf16.mxu0 0
        %842 = vmatpush1.bf16.msra.mxu0 0
        %843 = vmatprep.mubr.bf16.mxu0 0
        %844 = vmatmul.mubr.bf16.gmra.mrb[0].mxu0 %v806
        %v845 = vpop.f32.mrb[0].mxu0
        %v846 = vadd.f32 0.0, %v845
        %v847 = vpop.f32.mrb[0].mxu0
        %v848 = vpop.f32.mrb[0].mxu0
        %v849 = vpop.f32.mrb[0].mxu0
        %850 = vdwg.mxu0
        %v851 = vadd.f32 %v801, %v846
        %852 = vst.msk [vmem:[%s794] sm:$0xff] %vm311, %v851
        %853 = vst.msk [vmem:[%s769] sm:$0xff] %vm380, %v774
      $region40: #{causal_self_attention.4} parent=31 // pred_fallthru
        _
      %p854 = scmp.eq.s32.totalorder %s285, %s284
      // Predicated region
      $region41: #{causal_self_attention.4} parent=31 // pred_check
        %p855 = pneg %p854
      $region42: #{causal_self_attention.4} parent=31 // pred_check_branch
        %857 = sbr.rel (%p855) target = $region44
      $region43: #{causal_self_attention.4} parent=31 // pred_region
        %v858 = vld [vmem:[%s254] sm:$0xf]
        %v859 = vld [vmem:[%s263] sm:$0xf]
        %v860 = vld [vmem:[%s272] sm:$0xf]
        %v861 = vlaneseq
        %v862 = vshrl.u32 %v861, 7
        %v863 = vlaneseq
        %v864 = vand.u32 %v863, 127
        %vm865 = vcmp.le.s32.totalorder %v864, %v862
        %vm866 = vcmask 64512
        %v868 = vsel %vm866, %v858, 0
        %v871 = vsel %vm866, %v859, 0
        %873 = vmatprep.subr.bf16.mxu0 0
        %874 = vmatpush1.bf16.xpose.msra.mxu0 %v871
        %875 = vmatprep.subr.bf16.mxu0 0
        %876 = vmatpush1.bf16.xpose.msra.mxu0 0
        %877 = vmatprep.subr.bf16.mxu0 0
        %878 = vmatpush1.bf16.xpose.msra.mxu0 0
        %879 = vmatprep.subr.bf16.mxu0 0
        %880 = vmatpush1.bf16.xpose.msra.mxu0 0
        %881 = vmatprep.subr.bf16.mxu0 0
        %882 = vmatpush1.bf16.xpose.msra.mxu0 0
        %883 = vmatprep.subr.bf16.mxu0 0
        %884 = vmatpush1.bf16.xpose.msra.mxu0 0
        %885 = vmatprep.subr.bf16.mxu0 0
        %886 = vmatpush1.bf16.xpose.msra.mxu0 0
        %887 = vmatprep.subr.bf16.mxu0 0
        %888 = vmatpush1.bf16.xpose.msra.mxu0 0
        %889 = vmatprep.subr.bf16.mxu0 0
        %890 = vmatpush1.bf16.xpose.msra.mxu0 0
        %891 = vmatprep.subr.bf16.mxu0 0
        %892 = vmatpush1.bf16.xpose.msra.mxu0 0
        %893 = vmatprep.subr.bf16.mxu0 0
        %894 = vmatpush1.bf16.xpose.msra.mxu0 0
        %895 = vmatprep.subr.bf16.mxu0 0
        %896 = vmatpush1.bf16.xpose.msra.mxu0 0
        %897 = vmatprep.subr.bf16.mxu0 0
        %898 = vmatpush1.bf16.xpose.msra.mxu0 0
        %899 = vmatprep.subr.bf16.mxu0 0
        %900 = vmatpush1.bf16.xpose.msra.mxu0 0
        %901 = vmatprep.subr.bf16.mxu0 0
        %902 = vmatpush1.bf16.xpose.msra.mxu0 0
        %903 = vmatprep.subr.bf16.mxu0 0
        %904 = vmatpush1.bf16.xpose.msra.mxu0 0
        %905 = vmatprep.mubr.bf16.mxu0 0
        %906 = vmatmul.mubr.bf16.gmra.mrb[0].mxu0 %v868
        %v907 = vpop.f32.mrb[0].mxu0
        %v908 = vadd.f32 0.0, %v907
        %v909 = vpop.f32.mrb[0].mxu0
        %v910 = vpop.f32.mrb[0].mxu0
        %v911 = vpop.f32.mrb[0].mxu0
        %912 = vdwg.mxu0
        %v913 = vsel %vm865, %v908, -1e+30
        %v914 = vld [vmem:[#allocation2] sm:$0xff]
        %v915 = vsel %vm866, %v913, -inf
        %916 = vmax.xlane.f32.xlu0 %v915
        %v917 = vpop.xlane.xlu0 %916
        %v918 = vmax.f32 %v914, %v917
        %v919 = vsub.f32 %v914, %v918
        %v920 = vmul.f32 %v919, 1.442695
        %v921 = vpow.pop %v920
        %923 = vset.pattern.permute.xlu0 0
        %924 = vperm.xlu0 %923, %v918
        %v925 = vpop.permute.xlu0 %924
        %v927 = vsub.f32 %v913, %v925
        %v928 = vmul.f32 %v927, 1.442695
        %v929 = vpow.pop %v928
        %v930 = vld [vmem:[#allocation3] sm:$0xff]
        %v931 = vmul.f32 %v921, %v930
        %v932 = vsel %vm866, %v929, 0.0
        %933 = vadd.xlane.f32.xlu0 %v932
        %v934 = vpop.xlane.xlu0 %933
        %v935 = vadd.f32 %v931, %v934
        %vm936 = vcmask 7168
        %937 = vst.msk [vmem:[#allocation3] sm:$0xff] %vm936, %v935
        %v938 = vld [vmem:[#allocation4] sm:$0xff]
        %940 = vset.pattern.permute.xlu0 0
        %941 = vperm.xlu0 %940, %v921
        %v942 = vpop.permute.xlu0 %941
        %v944 = vmul.f32 %v942, %v938
        %v945 = vpack.c.bf16 %v929, %v929
        %v947 = vsel %vm866, %v945, 0
        %vm949 = vcmask 1043456
        %v951 = vsel %vm949, %v860, 0
        %953 = vmatprep.subr.bf16.mxu0 0
        %954 = vmatpush1.bf16.msra.mxu0 %v951
        %955 = vmatprep.subr.bf16.mxu0 0
        %956 = vmatpush1.bf16.msra.mxu0 0
        %957 = vmatprep.subr.bf16.mxu0 0
        %958 = vmatpush1.bf16.msra.mxu0 0
        %959 = vmatprep.subr.bf16.mxu0 0
        %960 = vmatpush1.bf16.msra.mxu0 0
        %961 = vmatprep.subr.bf16.mxu0 0
        %962 = vmatpush1.bf16.msra.mxu0 0
        %963 = vmatprep.subr.bf16.mxu0 0
        %964 = vmatpush1.bf16.msra.mxu0 0
        %965 = vmatprep.subr.bf16.mxu0 0
        %966 = vmatpush1.bf16.msra.mxu0 0
        %967 = vmatprep.subr.bf16.mxu0 0
        %968 = vmatpush1.bf16.msra.mxu0 0
        %969 = vmatprep.subr.bf16.mxu0 0
        %970 = vmatpush1.bf16.msra.mxu0 0
        %971 = vmatprep.subr.bf16.mxu0 0
        %972 = vmatpush1.bf16.msra.mxu0 0
        %973 = vmatprep.subr.bf16.mxu0 0
        %974 = vmatpush1.bf16.msra.mxu0 0
        %975 = vmatprep.subr.bf16.mxu0 0
        %976 = vmatpush1.bf16.msra.mxu0 0
        %977 = vmatprep.subr.bf16.mxu0 0
        %978 = vmatpush1.bf16.msra.mxu0 0
        %979 = vmatprep.subr.bf16.mxu0 0
        %980 = vmatpush1.bf16.msra.mxu0 0
        %981 = vmatprep.subr.bf16.mxu0 0
        %982 = vmatpush1.bf16.msra.mxu0 0
        %983 = vmatprep.subr.bf16.mxu0 0
        %984 = vmatpush1.bf16.msra.mxu0 0
        %985 = vmatprep.mubr.bf16.mxu0 0
        %986 = vmatmul.mubr.bf16.gmra.mrb[0].mxu0 %v947
        %v987 = vpop.f32.mrb[0].mxu0
        %v988 = vadd.f32 0.0, %v987
        %v989 = vpop.f32.mrb[0].mxu0
        %v990 = vpop.f32.mrb[0].mxu0
        %v991 = vpop.f32.mrb[0].mxu0
        %992 = vdwg.mxu0
        %v993 = vadd.f32 %v944, %v988
        %994 = vst.msk [vmem:[#allocation4] sm:$0xff] %vm866, %v993
        %995 = vst.msk [vmem:[#allocation2] sm:$0xff] %vm936, %v918
        %v997 = vunpack.c.l.b16 %v858
        %v998 = vpack.c.b16 %v997, %v997
        %999 = vrot.lane.b32.xlu0 %v998, 120
        %v1000 = vpop.permute.xlu0 %999
        %v1002 = vunpack.c.l.b16 %v859
        %v1003 = vpack.c.b16 %v1002, %v1002
        %1004 = vrot.lane.b32.xlu0 %v1003, 120
        %v1005 = vpop.permute.xlu0 %1004
        %v1007 = vsel %vm866, %v1000, 0
        %v1010 = vsel %vm866, %v1005, 0
        %1012 = vmatprep.subr.bf16.mxu0 0
        %1013 = vmatpush1.bf16.xpose.msra.mxu0 %v1010
        %1014 = vmatprep.subr.bf16.mxu0 0
        %1015 = vmatpush1.bf16.xpose.msra.mxu0 0
        %1016 = vmatprep.subr.bf16.mxu0 0
        %1017 = vmatpush1.bf16.xpose.msra.mxu0 0
        %1018 = vmatprep.subr.bf16.mxu0 0
        %1019 = vmatpush1.bf16.xpose.msra.mxu0 0
        %1020 = vmatprep.subr.bf16.mxu0 0
        %1021 = vmatpush1.bf16.xpose.msra.mxu0 0
        %1022 = vmatprep.subr.bf16.mxu0 0
        %1023 = vmatpush1.bf16.xpose.msra.mxu0 0
        %1024 = vmatprep.subr.bf16.mxu0 0
        %1025 = vmatpush1.bf16.xpose.msra.mxu0 0
        %1026 = vmatprep.subr.bf16.mxu0 0
        %1027 = vmatpush1.bf16.xpose.msra.mxu0 0
        %1028 = vmatprep.subr.bf16.mxu0 0
        %1029 = vmatpush1.bf16.xpose.msra.mxu0 0
        %1030 = vmatprep.subr.bf16.mxu0 0
        %1031 = vmatpush1.bf16.xpose.msra.mxu0 0
        %1032 = vmatprep.subr.bf16.mxu0 0
        %1033 = vmatpush1.bf16.xpose.msra.mxu0 0
        %1034 = vmatprep.subr.bf16.mxu0 0
        %1035 = vmatpush1.bf16.xpose.msra.mxu0 0
        %1036 = vmatprep.subr.bf16.mxu0 0
        %1037 = vmatpush1.bf16.xpose.msra.mxu0 0
        %1038 = vmatprep.subr.bf16.mxu0 0
        %1039 = vmatpush1.bf16.xpose.msra.mxu0 0
        %1040 = vmatprep.subr.bf16.mxu0 0
        %1041 = vmatpush1.bf16.xpose.msra.mxu0 0
        %1042 = vmatprep.subr.bf16.mxu0 0
        %1043 = vmatpush1.bf16.xpose.msra.mxu0 0
        %1044 = vmatprep.mubr.bf16.mxu0 0
        %1045 = vmatmul.mubr.bf16.gmra.mrb[0].mxu0 %v1007
        %v1046 = vpop.f32.mrb[0].mxu0
        %v1047 = vadd.f32 0.0, %v1046
        %v1048 = vpop.f32.mrb[0].mxu0
        %v1049 = vpop.f32.mrb[0].mxu0
        %v1050 = vpop.f32.mrb[0].mxu0
        %1051 = vdwg.mxu0
        %v1052 = vsel %vm865, %v1047, -1e+30
        %s1053 = scalar_lea.vmem [#allocation2], 8
        %v1054 = vld [vmem:[%s1053] sm:$0xff]
        %v1055 = vsel %vm866, %v1052, -inf
        %1056 = vmax.xlane.f32.xlu0 %v1055
        %v1057 = vpop.xlane.xlu0 %1056
        %v1058 = vmax.f32 %v1054, %v1057
        %v1059 = vsub.f32 %v1054, %v1058
        %v1060 = vmul.f32 %v1059, 1.442695
        %v1061 = vpow.pop %v1060
        %1063 = vset.pattern.permute.xlu0 0
        %1064 = vperm.xlu0 %1063, %v1058
        %v1065 = vpop.permute.xlu0 %1064
        %v1067 = vsub.f32 %v1052, %v1065
        %v1068 = vmul.f32 %v1067, 1.442695
        %v1069 = vpow.pop %v1068
        %s1070 = scalar_lea.vmem [#allocation3], 8
        %v1071 = vld [vmem:[%s1070] sm:$0xff]
        %v1072 = vmul.f32 %v1061, %v1071
        %v1073 = vsel %vm866, %v1069, 0.0
        %1074 = vadd.xlane.f32.xlu0 %v1073
        %v1075 = vpop.xlane.xlu0 %1074
        %v1076 = vadd.f32 %v1072, %v1075
        %1077 = vst.msk [vmem:[%s1070] sm:$0xff] %vm936, %v1076
        %s1078 = scalar_lea.vmem [#allocation4], 8
        %v1079 = vld [vmem:[%s1078] sm:$0xff]
        %1081 = vset.pattern.permute.xlu0 0
        %1082 = vperm.xlu0 %1081, %v1061
        %v1083 = vpop.permute.xlu0 %1082
        %v1085 = vmul.f32 %v1083, %v1079
        %v1086 = vpack.c.bf16 %v1069, %v1069
        %v1088 = vunpack.c.l.b16 %v860
        %v1089 = vpack.c.b16 %v1088, %v1088
        %1090 = vrot.lane.b32.xlu0 %v1089, 120
        %v1091 = vpop.permute.xlu0 %1090
        %v1093 = vsel %vm866, %v1086, 0
        %v1096 = vsel %vm949, %v1091, 0
        %1098 = vmatprep.subr.bf16.mxu0 0
        %1099 = vmatpush1.bf16.msra.mxu0 %v1096
        %1100 = vmatprep.subr.bf16.mxu0 0
        %1101 = vmatpush1.bf16.msra.mxu0 0
        %1102 = vmatprep.subr.bf16.mxu0 0
        %1103 = vmatpush1.bf16.msra.mxu0 0
        %1104 = vmatprep.subr.bf16.mxu0 0
        %1105 = vmatpush1.bf16.msra.mxu0 0
        %1106 = vmatprep.subr.bf16.mxu0 0
        %1107 = vmatpush1.bf16.msra.mxu0 0
        %1108 = vmatprep.subr.bf16.mxu0 0
        %1109 = vmatpush1.bf16.msra.mxu0 0
        %1110 = vmatprep.subr.bf16.mxu0 0
        %1111 = vmatpush1.bf16.msra.mxu0 0
        %1112 = vmatprep.subr.bf16.mxu0 0
        %1113 = vmatpush1.bf16.msra.mxu0 0
        %1114 = vmatprep.subr.bf16.mxu0 0
        %1115 = vmatpush1.bf16.msra.mxu0 0
        %1116 = vmatprep.subr.bf16.mxu0 0
        %1117 = vmatpush1.bf16.msra.mxu0 0
        %1118 = vmatprep.subr.bf16.mxu0 0
        %1119 = vmatpush1.bf16.msra.mxu0 0
        %1120 = vmatprep.subr.bf16.mxu0 0
        %1121 = vmatpush1.bf16.msra.mxu0 0
        %1122 = vmatprep.subr.bf16.mxu0 0
        %1123 = vmatpush1.bf16.msra.mxu0 0
        %1124 = vmatprep.subr.bf16.mxu0 0
        %1125 = vmatpush1.bf16.msra.mxu0 0
        %1126 = vmatprep.subr.bf16.mxu0 0
        %1127 = vmatpush1.bf16.msra.mxu0 0
        %1128 = vmatprep.subr.bf16.mxu0 0
        %1129 = vmatpush1.bf16.msra.mxu0 0
        %1130 = vmatprep.mubr.bf16.mxu0 0
        %1131 = vmatmul.mubr.bf16.gmra.mrb[0].mxu0 %v1093
        %v1132 = vpop.f32.mrb[0].mxu0
        %v1133 = vadd.f32 0.0, %v1132
        %v1134 = vpop.f32.mrb[0].mxu0
        %v1135 = vpop.f32.mrb[0].mxu0
        %v1136 = vpop.f32.mrb[0].mxu0
        %1137 = vdwg.mxu0
        %v1138 = vadd.f32 %v1085, %v1133
        %1139 = vst.msk [vmem:[%s1078] sm:$0xff] %vm866, %v1138
        %1140 = vst.msk [vmem:[%s1053] sm:$0xff] %vm936, %v1058
        %1141 = vrot.lane.b32.xlu0 %v998, 112
        %v1142 = vpop.permute.xlu0 %1141
        %1143 = vrot.lane.b32.xlu0 %v1003, 112
        %v1144 = vpop.permute.xlu0 %1143
        %v1146 = vsel %vm866, %v1142, 0
        %v1149 = vsel %vm866, %v1144, 0
        %1151 = vmatprep.subr.bf16.mxu0 0
        %1152 = vmatpush1.bf16.xpose.msra.mxu0 %v1149
        %1153 = vmatprep.subr.bf16.mxu0 0
        %1154 = vmatpush1.bf16.xpose.msra.mxu0 0
        %1155 = vmatprep.subr.bf16.mxu0 0
        %1156 = vmatpush1.bf16.xpose.msra.mxu0 0
        %1157 = vmatprep.subr.bf16.mxu0 0
        %1158 = vmatpush1.bf16.xpose.msra.mxu0 0
        %1159 = vmatprep.subr.bf16.mxu0 0
        %1160 = vmatpush1.bf16.xpose.msra.mxu0 0
        %1161 = vmatprep.subr.bf16.mxu0 0
        %1162 = vmatpush1.bf16.xpose.msra.mxu0 0
        %1163 = vmatprep.subr.bf16.mxu0 0
        %1164 = vmatpush1.bf16.xpose.msra.mxu0 0
        %1165 = vmatprep.subr.bf16.mxu0 0
        %1166 = vmatpush1.bf16.xpose.msra.mxu0 0
        %1167 = vmatprep.subr.bf16.mxu0 0
        %1168 = vmatpush1.bf16.xpose.msra.mxu0 0
        %1169 = vmatprep.subr.bf16.mxu0 0
        %1170 = vmatpush1.bf16.xpose.msra.mxu0 0
        %1171 = vmatprep.subr.bf16.mxu0 0
        %1172 = vmatpush1.bf16.xpose.msra.mxu0 0
        %1173 = vmatprep.subr.bf16.mxu0 0
        %1174 = vmatpush1.bf16.xpose.msra.mxu0 0
        %1175 = vmatprep.subr.bf16.mxu0 0
        %1176 = vmatpush1.bf16.xpose.msra.mxu0 0
        %1177 = vmatprep.subr.bf16.mxu0 0
        %1178 = vmatpush1.bf16.xpose.msra.mxu0 0
        %1179 = vmatprep.subr.bf16.mxu0 0
        %1180 = vmatpush1.bf16.xpose.msra.mxu0 0
        %1181 = vmatprep.subr.bf16.mxu0 0
        %1182 = vmatpush1.bf16.xpose.msra.mxu0 0
        %1183 = vmatprep.mubr.bf16.mxu0 0
        %1184 = vmatmul.mubr.bf16.gmra.mrb[0].mxu0 %v1146
        %v1185 = vpop.f32.mrb[0].mxu0
        %v1186 = vadd.f32 0.0, %v1185
        %v1187 = vpop.f32.mrb[0].mxu0
        %v1188 = vpop.f32.mrb[0].mxu0
        %v1189 = vpop.f32.mrb[0].mxu0
        %1190 = vdwg.mxu0
        %v1191 = vsel %vm865, %v1186, -1e+30
        %s1192 = scalar_lea.vmem [#allocation2], 16
        %v1193 = vld [vmem:[%s1192] sm:$0xff]
        %v1194 = vsel %vm866, %v1191, -inf
        %1195 = vmax.xlane.f32.xlu0 %v1194
        %v1196 = vpop.xlane.xlu0 %1195
        %v1197 = vmax.f32 %v1193, %v1196
        %v1198 = vsub.f32 %v1193, %v1197
        %v1199 = vmul.f32 %v1198, 1.442695
        %v1200 = vpow.pop %v1199
        %1202 = vset.pattern.permute.xlu0 0
        %1203 = vperm.xlu0 %1202, %v1197
        %v1204 = vpop.permute.xlu0 %1203
        %v1206 = vsub.f32 %v1191, %v1204
        %v1207 = vmul.f32 %v1206, 1.442695
        %v1208 = vpow.pop %v1207
        %s1209 = scalar_lea.vmem [#allocation3], 16
        %v1210 = vld [vmem:[%s1209] sm:$0xff]
        %v1211 = vmul.f32 %v1200, %v1210
        %v1212 = vsel %vm866, %v1208, 0.0
        %1213 = vadd.xlane.f32.xlu0 %v1212
        %v1214 = vpop.xlane.xlu0 %1213
        %v1215 = vadd.f32 %v1211, %v1214
        %1216 = vst.msk [vmem:[%s1209] sm:$0xff] %vm936, %v1215
        %s1217 = scalar_lea.vmem [#allocation4], 16
        %v1218 = vld [vmem:[%s1217] sm:$0xff]
        %1220 = vset.pattern.permute.xlu0 0
        %1221 = vperm.xlu0 %1220, %v1200
        %v1222 = vpop.permute.xlu0 %1221
        %v1224 = vmul.f32 %v1222, %v1218
        %v1225 = vpack.c.bf16 %v1208, %v1208
        %1226 = vrot.lane.b32.xlu0 %v1089, 112
        %v1227 = vpop.permute.xlu0 %1226
        %v1229 = vsel %vm866, %v1225, 0
        %v1232 = vsel %vm949, %v1227, 0
        %1234 = vmatprep.subr.bf16.mxu0 0
        %1235 = vmatpush1.bf16.msra.mxu0 %v1232
        %1236 = vmatprep.subr.bf16.mxu0 0
        %1237 = vmatpush1.bf16.msra.mxu0 0
        %1238 = vmatprep.subr.bf16.mxu0 0
        %1239 = vmatpush1.bf16.msra.mxu0 0
        %1240 = vmatprep.subr.bf16.mxu0 0
        %1241 = vmatpush1.bf16.msra.mxu0 0
        %1242 = vmatprep.subr.bf16.mxu0 0
        %1243 = vmatpush1.bf16.msra.mxu0 0
        %1244 = vmatprep.subr.bf16.mxu0 0
        %1245 = vmatpush1.bf16.msra.mxu0 0
        %1246 = vmatprep.subr.bf16.mxu0 0
        %1247 = vmatpush1.bf16.msra.mxu0 0
        %1248 = vmatprep.subr.bf16.mxu0 0
        %1249 = vmatpush1.bf16.msra.mxu0 0
        %1250 = vmatprep.subr.bf16.mxu0 0
        %1251 = vmatpush1.bf16.msra.mxu0 0
        %1252 = vmatprep.subr.bf16.mxu0 0
        %1253 = vmatpush1.bf16.msra.mxu0 0
        %1254 = vmatprep.subr.bf16.mxu0 0
        %1255 = vmatpush1.bf16.msra.mxu0 0
        %1256 = vmatprep.subr.bf16.mxu0 0
        %1257 = vmatpush1.bf16.msra.mxu0 0
        %1258 = vmatprep.subr.bf16.mxu0 0
        %1259 = vmatpush1.bf16.msra.mxu0 0
        %1260 = vmatprep.subr.bf16.mxu0 0
        %1261 = vmatpush1.bf16.msra.mxu0 0
        %1262 = vmatprep.subr.bf16.mxu0 0
        %1263 = vmatpush1.bf16.msra.mxu0 0
        %1264 = vmatprep.subr.bf16.mxu0 0
        %1265 = vmatpush1.bf16.msra.mxu0 0
        %1266 = vmatprep.mubr.bf16.mxu0 0
        %1267 = vmatmul.mubr.bf16.gmra.mrb[0].mxu0 %v1229
        %v1268 = vpop.f32.mrb[0].mxu0
        %v1269 = vadd.f32 0.0, %v1268
        %v1270 = vpop.f32.mrb[0].mxu0
        %v1271 = vpop.f32.mrb[0].mxu0
        %v1272 = vpop.f32.mrb[0].mxu0
        %1273 = vdwg.mxu0
        %v1274 = vadd.f32 %v1224, %v1269
        %1275 = vst.msk [vmem:[%s1217] sm:$0xff] %vm866, %v1274
        %1276 = vst.msk [vmem:[%s1192] sm:$0xff] %vm936, %v1197
        %1277 = vrot.lane.b32.xlu0 %v998, 104
        %v1278 = vpop.permute.xlu0 %1277
        %1279 = vrot.lane.b32.xlu0 %v1003, 104
        %v1280 = vpop.permute.xlu0 %1279
        %v1282 = vsel %vm866, %v1278, 0
        %v1285 = vsel %vm866, %v1280, 0
        %1287 = vmatprep.subr.bf16.mxu0 0
        %1288 = vmatpush1.bf16.xpose.msra.mxu0 %v1285
        %1289 = vmatprep.subr.bf16.mxu0 0
        %1290 = vmatpush1.bf16.xpose.msra.mxu0 0
        %1291 = vmatprep.subr.bf16.mxu0 0
        %1292 = vmatpush1.bf16.xpose.msra.mxu0 0
        %1293 = vmatprep.subr.bf16.mxu0 0
        %1294 = vmatpush1.bf16.xpose.msra.mxu0 0
        %1295 = vmatprep.subr.bf16.mxu0 0
        %1296 = vmatpush1.bf16.xpose.msra.mxu0 0
        %1297 = vmatprep.subr.bf16.mxu0 0
        %1298 = vmatpush1.bf16.xpose.msra.mxu0 0
        %1299 = vmatprep.subr.bf16.mxu0 0
        %1300 = vmatpush1.bf16.xpose.msra.mxu0 0
        %1301 = vmatprep.subr.bf16.mxu0 0
        %1302 = vmatpush1.bf16.xpose.msra.mxu0 0
        %1303 = vmatprep.subr.bf16.mxu0 0
        %1304 = vmatpush1.bf16.xpose.msra.mxu0 0
        %1305 = vmatprep.subr.bf16.mxu0 0
        %1306 = vmatpush1.bf16.xpose.msra.mxu0 0
        %1307 = vmatprep.subr.bf16.mxu0 0
        %1308 = vmatpush1.bf16.xpose.msra.mxu0 0
        %1309 = vmatprep.subr.bf16.mxu0 0
        %1310 = vmatpush1.bf16.xpose.msra.mxu0 0
        %1311 = vmatprep.subr.bf16.mxu0 0
        %1312 = vmatpush1.bf16.xpose.msra.mxu0 0
        %1313 = vmatprep.subr.bf16.mxu0 0
        %1314 = vmatpush1.bf16.xpose.msra.mxu0 0
        %1315 = vmatprep.subr.bf16.mxu0 0
        %1316 = vmatpush1.bf16.xpose.msra.mxu0 0
        %1317 = vmatprep.subr.bf16.mxu0 0
        %1318 = vmatpush1.bf16.xpose.msra.mxu0 0
        %1319 = vmatprep.mubr.bf16.mxu0 0
        %1320 = vmatmul.mubr.bf16.gmra.mrb[0].mxu0 %v1282
        %v1321 = vpop.f32.mrb[0].mxu0
        %v1322 = vadd.f32 0.0, %v1321
        %v1323 = vpop.f32.mrb[0].mxu0
        %v1324 = vpop.f32.mrb[0].mxu0
        %v1325 = vpop.f32.mrb[0].mxu0
        %1326 = vdwg.mxu0
        %v1327 = vsel %vm865, %v1322, -1e+30
        %s1328 = scalar_lea.vmem [#allocation2], 24
        %v1329 = vld [vmem:[%s1328] sm:$0xff]
        %v1330 = vsel %vm866, %v1327, -inf
        %1331 = vmax.xlane.f32.xlu0 %v1330
        %v1332 = vpop.xlane.xlu0 %1331
        %v1333 = vmax.f32 %v1329, %v1332
        %v1334 = vsub.f32 %v1329, %v1333
        %v1335 = vmul.f32 %v1334, 1.442695
        %v1336 = vpow.pop %v1335
        %1338 = vset.pattern.permute.xlu0 0
        %1339 = vperm.xlu0 %1338, %v1333
        %v1340 = vpop.permute.xlu0 %1339
        %v1342 = vsub.f32 %v1327, %v1340
        %v1343 = vmul.f32 %v1342, 1.442695
        %v1344 = vpow.pop %v1343
        %s1345 = scalar_lea.vmem [#allocation3], 24
        %v1346 = vld [vmem:[%s1345] sm:$0xff]
        %v1347 = vmul.f32 %v1336, %v1346
        %v1348 = vsel %vm866, %v1344, 0.0
        %1349 = vadd.xlane.f32.xlu0 %v1348
        %v1350 = vpop.xlane.xlu0 %1349
        %v1351 = vadd.f32 %v1347, %v1350
        %1352 = vst.msk [vmem:[%s1345] sm:$0xff] %vm936, %v1351
        %s1353 = scalar_lea.vmem [#allocation4], 24
        %v1354 = vld [vmem:[%s1353] sm:$0xff]
        %1356 = vset.pattern.permute.xlu0 0
        %1357 = vperm.xlu0 %1356, %v1336
        %v1358 = vpop.permute.xlu0 %1357
        %v1360 = vmul.f32 %v1358, %v1354
        %v1361 = vpack.c.bf16 %v1344, %v1344
        %1362 = vrot.lane.b32.xlu0 %v1089, 104
        %v1363 = vpop.permute.xlu0 %1362
        %v1365 = vsel %vm866, %v1361, 0
        %v1368 = vsel %vm949, %v1363, 0
        %1370 = vmatprep.subr.bf16.mxu0 0
        %1371 = vmatpush1.bf16.msra.mxu0 %v1368
        %1372 = vmatprep.subr.bf16.mxu0 0
        %1373 = vmatpush1.bf16.msra.mxu0 0
        %1374 = vmatprep.subr.bf16.mxu0 0
        %1375 = vmatpush1.bf16.msra.mxu0 0
        %1376 = vmatprep.subr.bf16.mxu0 0
        %1377 = vmatpush1.bf16.msra.mxu0 0
        %1378 = vmatprep.subr.bf16.mxu0 0
        %1379 = vmatpush1.bf16.msra.mxu0 0
        %1380 = vmatprep.subr.bf16.mxu0 0
        %1381 = vmatpush1.bf16.msra.mxu0 0
        %1382 = vmatprep.subr.bf16.mxu0 0
        %1383 = vmatpush1.bf16.msra.mxu0 0
        %1384 = vmatprep.subr.bf16.mxu0 0
        %1385 = vmatpush1.bf16.msra.mxu0 0
        %1386 = vmatprep.subr.bf16.mxu0 0
        %1387 = vmatpush1.bf16.msra.mxu0 0
        %1388 = vmatprep.subr.bf16.mxu0 0
        %1389 = vmatpush1.bf16.msra.mxu0 0
        %1390 = vmatprep.subr.bf16.mxu0 0
        %1391 = vmatpush1.bf16.msra.mxu0 0
        %1392 = vmatprep.subr.bf16.mxu0 0
        %1393 = vmatpush1.bf16.msra.mxu0 0
        %1394 = vmatprep.subr.bf16.mxu0 0
        %1395 = vmatpush1.bf16.msra.mxu0 0
        %1396 = vmatprep.subr.bf16.mxu0 0
        %1397 = vmatpush1.bf16.msra.mxu0 0
        %1398 = vmatprep.subr.bf16.mxu0 0
        %1399 = vmatpush1.bf16.msra.mxu0 0
        %1400 = vmatprep.subr.bf16.mxu0 0
        %1401 = vmatpush1.bf16.msra.mxu0 0
        %1402 = vmatprep.mubr.bf16.mxu0 0
        %1403 = vmatmul.mubr.bf16.gmra.mrb[0].mxu0 %v1365
        %v1404 = vpop.f32.mrb[0].mxu0
        %v1405 = vadd.f32 0.0, %v1404
        %v1406 = vpop.f32.mrb[0].mxu0
        %v1407 = vpop.f32.mrb[0].mxu0
        %v1408 = vpop.f32.mrb[0].mxu0
        %1409 = vdwg.mxu0
        %v1410 = vadd.f32 %v1360, %v1405
        %1411 = vst.msk [vmem:[%s1353] sm:$0xff] %vm866, %v1410
        %1412 = vst.msk [vmem:[%s1328] sm:$0xff] %vm936, %v1333
        %v1413 = vld [vmem:[#allocation3] sm:$0xff]
        %v1414 = vrcp.pop %v1413
        %v1415 = vld [vmem:[#allocation4] sm:$0xff]
        %1417 = vset.pattern.permute.xlu0 0
        %1418 = vperm.xlu0 %1417, %v1414
        %v1419 = vpop.permute.xlu0 %1418
        %v1421 = vmul.f32 %v1415, %v1419
        %v1422 = vld [vmem:[%s1070] sm:$0xff]
        %v1423 = vrcp.pop %v1422
        %v1424 = vld [vmem:[%s1078] sm:$0xff]
        %1426 = vset.pattern.permute.xlu0 0
        %1427 = vperm.xlu0 %1426, %v1423
        %v1428 = vpop.permute.xlu0 %1427
        %v1430 = vmul.f32 %v1424, %v1428
        %v1431 = vld [vmem:[%s1209] sm:$0xff]
        %v1432 = vrcp.pop %v1431
        %v1433 = vld [vmem:[%s1217] sm:$0xff]
        %1435 = vset.pattern.permute.xlu0 0
        %1436 = vperm.xlu0 %1435, %v1432
        %v1437 = vpop.permute.xlu0 %1436
        %v1439 = vmul.f32 %v1433, %v1437
        %v1440 = vld [vmem:[%s1345] sm:$0xff]
        %v1441 = vrcp.pop %v1440
        %v1442 = vld [vmem:[%s1353] sm:$0xff]
        %1444 = vset.pattern.permute.xlu0 0
        %1445 = vperm.xlu0 %1444, %v1441
        %v1446 = vpop.permute.xlu0 %1445
        %v1448 = vmul.f32 %v1442, %v1446
        %1450 = vrot.lane.b32.xlu0 %v1430, 8
        %v1451 = vpop.permute.xlu0 %1450
        %1454 = vrot.lane.b32.xlu0 %v1439, 16
        %v1455 = vpop.permute.xlu0 %1454
        %1458 = vrot.lane.b32.xlu0 %v1448, 24
        %v1459 = vpop.permute.xlu0 %1458
        %v1461 = vsel %vm866, %v1421, %v1451
        %vm1462 = vcmask 130048
        %v1463 = vsel %vm1462, %v1461, %v1455
        %vm1464 = vcmask 195584
        %v1465 = vsel %vm1464, %v1463, %v1459
        %v1466 = vpack.c.bf16 %v1465, %v1465
        %vm1467 = vcmask 257024
        %1468 = vst.msk [vmem:[%s281] sm:$0xf] %vm1467, %v1466
      $region44: #{causal_self_attention.4} parent=31 // pred_fallthru
        _
      %s1469 = sld [smem:[#allocation6 + %s23]]
      %p1470 = scmp.lt.s32.totalorder %s22, 1
      %s1471 = scalar_select %p1470, %s22, 1
      %p1472 = scmp.lt.s32.totalorder %s1469, 0
      %s1473 = scalar_select %p1472, %s1469, 0
      %s1474 = sadd.s32 %s1473, %s1471
      %s1475 = smul.addr %s1474, 4
      %s1476 = scalar_lea.vmem %s5, %s1475
      // Predicated region
      $region45: #{causal_self_attention.4} parent=31 // pred_check
        %p1477 = pneg %p142
      $region46: #{causal_self_attention.4} parent=31 // pred_check_branch
        %1479 = sbr.rel (%p1477) target = $region48
      $region47: #{causal_self_attention.4} parent=31 // pred_region
        %s1480 = sld [smem:[#allocation6 + %s23]]
      $region48: #{causal_self_attention.4} parent=31 // pred_fallthru
        _
    $region32: #{causal_self_attention.4} parent=5 // pred_fallthru
      _
    %p1481 = scmp.le.s32.totalorder 2, %s13
    // Predicated region
    $region49: #{causal_self_attention.4} parent=5 // pred_check
      %p1482 = pneg %p1481
    $region50: #{causal_self_attention.4} parent=5 // pred_check_branch
      %1484 = sbr.rel (%p1482) target = $region52
    $region51: #{causal_self_attention.4} parent=5 // pred_region
      %s1485 = ssub.s32 %s13, 2
      // Predicated region
      $region53: #{causal_self_attention.4} parent=51 // pred_check
        %p1486 = pneg %p148
      $region54: #{causal_self_attention.4} parent=51 // pred_check_branch
        %1488 = sbr.rel (%p1486) target = $region56
      $region55: #{causal_self_attention.4} parent=51 // pred_region
        %s1489 = sld [smem:[#allocation6 + %s25]]
        %p1490 = scmp.lt.s32.totalorder %s24, 1
        %s1491 = scalar_select %p1490, %s24, 1
        %p1492 = scmp.lt.s32.totalorder %s1489, 0
        %s1493 = scalar_select %p1492, %s1489, 0
        %s1494 = sadd.s32 %s1493, %s1491
        %s1495 = smul.addr %s1494, 4
        %s1496 = scalar_lea.vmem %s5, %s1495
      $region56: #{causal_self_attention.4} parent=51 // pred_fallthru
        _
    $region52: #{causal_self_attention.4} parent=5 // pred_fallthru
      _
  $region6: #{causal_self_attention.4} parent=0 // loop_footer
    %s17 = sadd.s32 1, %s13
  $region7: #{causal_self_attention.4} parent=0 // loop_footer_branch
    %12 = sbr.rel target = $region3
  $region8: #{causal_self_attention.4} parent=0 // loop_exit
    _

</llo_original>
